<compile_context>
chip_gen: v7x
topology: tpu7x:2x2x1
jax: 0.10.0
libtpu: 0.0.40
codegen_flags: <defaults>
</compile_context>

<pallas_src>
import functools

import jax
import jax.numpy as jnp
from jax.experimental import pallas as pl
from jax.experimental.pallas import tpu as pltpu


# ---------------------------------------------------------------------------
# Small helpers
# ---------------------------------------------------------------------------
def _round_up(v, m):
    return (v + m - 1) // m * m


def _pad2d(a, rows, cols):
    pr, pc = rows - a.shape[0], cols - a.shape[1]
    if pr or pc:
        a = jnp.pad(a, ((0, pr), (0, pc)))
    return a


def _full_spec(shape):
    n = len(shape)
    return pl.BlockSpec(shape, lambda i, _n=n: (0,) * _n)


_MM_PARAMS = pltpu.CompilerParams(
    dimension_semantics=("parallel",),
    vmem_limit_bytes=32 * 1024 * 1024,   # tiny here; explicit so v7x (64 MiB) is safe
)


# ---------------------------------------------------------------------------
# Pallas kernels
# ---------------------------------------------------------------------------
def _matmul_kernel(x_ref, w_ref, b_ref, o_ref, *, relu):
    # x, w are bf16; accumulate in f32 on the MXU; bias/relu in f32.
    acc = jnp.dot(x_ref[...], w_ref[...], preferred_element_type=jnp.float32)
    acc = acc + b_ref[...]
    if relu:
        acc = jnp.maximum(acc, 0.0)
    o_ref[...] = acc.astype(o_ref.dtype)


def _matmul_res_kernel(x_ref, w_ref, b_ref, r_ref, o_ref, *, relu):
    acc = jnp.dot(x_ref[...], w_ref[...], preferred_element_type=jnp.float32)
    acc = acc + b_ref[...] + r_ref[...]
    if relu:
        acc = jnp.maximum(acc, 0.0)
    o_ref[...] = acc.astype(o_ref.dtype)


def _enc_res_pair_kernel(p_ref, h_ref, w3_ref, b3_ref, w4_ref, b4_ref, o_ref):
    # h2 = relu(conv3x3(h) + h) ; z = conv1x1(h2) + h2  (encoder tail, fused)
    a = jnp.dot(p_ref[...], w3_ref[...], preferred_element_type=jnp.float32)
    h2 = jnp.maximum(a + b3_ref[...] + h_ref[...], 0.0)
    a2 = jnp.dot(h2.astype(jnp.bfloat16), w4_ref[...],
                 preferred_element_type=jnp.float32)
    o_ref[...] = (a2 + b4_ref[...] + h2).astype(o_ref.dtype)


def _vq_kernel(z_ref, e_ref, zq_ref, loss_ref, *, commitment_cost):
    z = z_ref[...]                                   # (N, C) f32
    e = e_ref[...]                                   # (K, C) f32
    n_codes = e.shape[0]

    # Cross term on the MXU with bf16 operands / f32 accumulate.
    cross = jax.lax.dot_general(
        z.astype(jnp.bfloat16), e.astype(jnp.bfloat16),
        dimension_numbers=(((1,), (1,)), ((), ())),
        preferred_element_type=jnp.float32)          # (N, K) = z . e_k
    # ||e_k||^2 as a (1, K) row, computed with the same transposed contraction.
    e_sq = jax.lax.dot_general(
        jnp.ones((1, z.shape[1]), jnp.float32), e * e,
        dimension_numbers=(((1,), (1,)), ((), ())),
        preferred_element_type=jnp.float32)          # (1, K)
    # ||z||^2 is constant per row -> dropped; argmin over codes is unchanged.
    d = e_sq - 2.0 * cross                           # (N, K)

    lane = jax.lax.broadcasted_iota(jnp.int32, d.shape, 1)
    dmin = jnp.min(d, axis=1, keepdims=True)
    # first index attaining the minimum (matches torch.argmin tie-breaking)
    idx = jnp.min(jnp.where(d <= dmin, lane, n_codes), axis=1, keepdims=True)
    onehot = (lane == idx).astype(jnp.float32)       # (N, K)

    zq = jnp.dot(onehot, e, preferred_element_type=jnp.float32)  # exact code rows
    zq_ref[...] = zq

    diff = zq - z
    mse = jnp.mean(diff * diff)
    loss_ref[0] = commitment_cost * mse              # commitment loss
    loss_ref[1] = mse                                # codebook loss
    avg = jnp.sum(onehot, axis=0) / onehot.shape[0]
    loss_ref[2] = jnp.exp(-jnp.sum(avg * jnp.log(avg + 1e-10)))  # perplexity


# ---------------------------------------------------------------------------
# Pallas wrappers
# ---------------------------------------------------------------------------
def fused_matmul(x, w, b, residual=None, relu=False, tile_m=256):
    """relu?(x @ w + b (+ residual)); bf16 MXU operands, f32 accumulate.

    Row-tiled grid (parallel), contraction and output dims lane-padded to 128.
    """
    n, k = x.shape
    cout = w.shape[1]
    kp = _round_up(k, 128)
    coutp = _round_up(cout, 128)
    tm = min(tile_m, _round_up(n, 8))
    npad = _round_up(n, tm)

    args = [_pad2d(x.astype(jnp.bfloat16), npad, kp),
            _pad2d(w.astype(jnp.bfloat16), kp, coutp),
            _pad2d(b.reshape(1, cout).astype(jnp.float32), 1, coutp)]
    in_specs = [pl.BlockSpec((tm, kp), lambda i: (i, 0)),
                pl.BlockSpec((kp, coutp), lambda i: (0, 0)),
                pl.BlockSpec((1, coutp), lambda i: (0, 0))]
    if residual is not None:
        args.append(_pad2d(residual.astype(jnp.float32), npad, coutp))
        in_specs.append(pl.BlockSpec((tm, coutp), lambda i: (i, 0)))
        kern = functools.partial(_matmul_res_kernel, relu=relu)
    else:
        kern = functools.partial(_matmul_kernel, relu=relu)

    out = pl.pallas_call(
        kern,
        grid=(npad // tm,),
        in_specs=in_specs,
        out_specs=pl.BlockSpec((tm, coutp), lambda i: (i, 0)),
        out_shape=jax.ShapeDtypeStruct((npad, coutp), jnp.float32),
        compiler_params=_MM_PARAMS,
    )(*args)
    return out[:n, :cout]


def encoder_residual_pair(p, h, w3, b3, w4, b4, tile_m=256):
    """Fused encoder tail: relu(p@w3 + b3 + h) -> @w4 + b4 + skip, one pallas_call."""
    n, k3 = p.shape
    c = h.shape[1]
    k3p = _round_up(k3, 128)
    cp = _round_up(c, 128)
    tm = min(tile_m, _round_up(n, 8))
    npad = _round_up(n, tm)

    args = [_pad2d(p.astype(jnp.bfloat16), npad, k3p),
            _pad2d(h.astype(jnp.float32), npad, cp),
            _pad2d(w3.astype(jnp.bfloat16), k3p, cp),
            _pad2d(b3.reshape(1, c).astype(jnp.float32), 1, cp),
            _pad2d(w4.astype(jnp.bfloat16), cp, cp),
            _pad2d(b4.reshape(1, c).astype(jnp.float32), 1, cp)]
    in_specs = [pl.BlockSpec((tm, k3p), lambda i: (i, 0)),
                pl.BlockSpec((tm, cp), lambda i: (i, 0)),
                pl.BlockSpec((k3p, cp), lambda i: (0, 0)),
                pl.BlockSpec((1, cp), lambda i: (0, 0)),
                pl.BlockSpec((cp, cp), lambda i: (0, 0)),
                pl.BlockSpec((1, cp), lambda i: (0, 0))]
    out = pl.pallas_call(
        _enc_res_pair_kernel,
        grid=(npad // tm,),
        in_specs=in_specs,
        out_specs=pl.BlockSpec((tm, cp), lambda i: (i, 0)),
        out_shape=jax.ShapeDtypeStruct((npad, cp), jnp.float32),
        compiler_params=_MM_PARAMS,
    )(*args)
    return out[:n, :c]


def vector_quantize_flat(zf, embeddings, commitment_cost=0.25):
    """zf: (N, C) flattened NHWC latents; embeddings: (K, C)."""
    # TODO(synk): for large N this single-block VQ should be tiled over N with an
    # accumulate-then-finalize pattern for the losses / code counts (v7x VMEM).
    N, C = zf.shape
    K = embeddings.shape[0]
    zq, losses = pl.pallas_call(
        functools.partial(_vq_kernel, commitment_cost=commitment_cost),
        grid=(1,),
        in_specs=[_full_spec((N, C)), _full_spec((K, C))],
        out_specs=[_full_spec((N, C)),
                   pl.BlockSpec(memory_space=pltpu.MemorySpace.SMEM)],
        out_shape=[jax.ShapeDtypeStruct((N, C), jnp.float32),
                   jax.ShapeDtypeStruct((3,), jnp.float32)],
    )(zf.astype(jnp.float32), embeddings.astype(jnp.float32))
    return zq, losses[0], losses[1], losses[2]


# ---------------------------------------------------------------------------
# Convolution wrappers (NHWC layout)
# ---------------------------------------------------------------------------
def _im2col_nhwc(x, kh, kw, stride, padding):
    """Channel-contiguous patches; for 1x1/stride-1 it is a pure reshape."""
    B, H, W, C = x.shape
    Hout = (H + 2 * padding - kh) // stride + 1
    Wout = (W + 2 * padding - kw) // stride + 1
    if kh == 1 and kw == 1 and stride == 1 and padding == 0:
        return x.reshape(B * Hout * Wout, C)
    if padding:
        x = jnp.pad(x, ((0, 0), (padding, padding), (padding, padding), (0, 0)))
    cols = []
    for di in range(kh):
        for dj in range(kw):
            cols.append(x[:, di:di + (Hout - 1) * stride + 1:stride,
                          dj:dj + (Wout - 1) * stride + 1:stride, :])
    patches = jnp.concatenate(cols, axis=-1)        # channels stay in the lane dim
    return patches.reshape(B * Hout * Wout, kh * kw * C)


def conv2d_nhwc(x, w, b, stride=1, padding=0, residual=None, relu=False):
    """x: (B,H,W,Cin); w: torch layout (Cout,Cin,kh,kw); residual: (B,Hout,Wout,Cout)."""
    B, H, W, Cin = x.shape
    Cout, _, kh, kw = w.shape
    Hout = (H + 2 * padding - kh) // stride + 1
    Wout = (W + 2 * padding - kw) // stride + 1
    patches = _im2col_nhwc(x, kh, kw, stride, padding)
    wmat = jnp.transpose(w, (2, 3, 1, 0)).reshape(kh * kw * Cin, Cout)
    res = None if residual is None else residual.reshape(B * Hout * Wout, Cout)
    y = fused_matmul(patches, wmat, b, residual=res, relu=relu)
    return y.reshape(B, Hout, Wout, Cout)


def conv_transpose2d_nhwc(x, w, b, stride=2):
    """ConvTranspose2d with kernel == stride, padding 0 via exact sub-pixel
    decomposition (single matmul + depth-to-space). w: torch (Cin,Cout,kh,kw)."""
    B, H, W, Cin = x.shape
    _, Cout, kh, kw = w.shape
    assert kh == stride and kw == stride, "sub-pixel path assumes kernel == stride"
    wmat = jnp.transpose(w, (0, 2, 3, 1)).reshape(Cin, kh * kw * Cout)
    bfull = jnp.tile(b, kh * kw)
    y = fused_matmul(x.reshape(B * H * W, Cin), wmat, bfull)   # (B*H*W, kh*kw*Cout)
    y = y.reshape(B, H, W, kh, kw, Cout)
    y = jnp.transpose(y, (0, 1, 3, 2, 4, 5)).reshape(B, H * kh, W * kw, Cout)
    return y


# ---------------------------------------------------------------------------
# Model (Encoder -> Codebook -> Decoder) forward
# ---------------------------------------------------------------------------
def model_forward(params, x_nchw):
    enc, emb, dec = params["enc"], params["codebook"], params["dec"]
    x = jnp.transpose(x_nchw, (0, 2, 3, 1))          # NCHW -> NHWC, once

    # Encoder: conv1 -> conv2 -> relu -> fused (res3x3 + skip -> relu -> res1x1 + skip)
    h = conv2d_nhwc(x, enc["w1"], enc["b1"], stride=2, padding=1)
    h = conv2d_nhwc(h, enc["w2"], enc["b2"], stride=2, padding=1, relu=True)
    B, Hh, Wh, C = h.shape
    p = _im2col_nhwc(h, 3, 3, 1, 1)
    w3 = jnp.transpose(enc["w3"], (2, 3, 1, 0)).reshape(9 * C, C)
    w4 = enc["w4"][:, :, 0, 0].T                     # (Cin, Cout) for the 1x1 conv
    zf = encoder_residual_pair(p, h.reshape(B * Hh * Wh, C),
                               w3, enc["b3"], w4, enc["b4"])

    # Codebook (latents already flat & channel-last: no layout change needed)
    zqf, commitment_loss, codebook_loss, perplexity = vector_quantize_flat(zf, emb)
    zq = zqf.reshape(B, Hh, Wh, C)

    # Decoder: (res1x1 + skip -> relu) -> (res3x3 + skip -> relu) -> tconv1 -> tconv2
    d = conv2d_nhwc(zq, dec["w1"], dec["b1"], stride=1, padding=0, residual=zq, relu=True)
    # TODO(synk): fusing this 3x3 with the 1x1 above needs in-kernel patch extraction.
    d = conv2d_nhwc(d, dec["w2"], dec["b2"], stride=1, padding=1, residual=d, relu=True)
    d = conv_transpose2d_nhwc(d, dec["wt1"], dec["bt1"], stride=2)
    y = conv_transpose2d_nhwc(d, dec["wt2"], dec["bt2"], stride=2)

    x_hat = jnp.transpose(y, (0, 3, 1, 2))           # back to NCHW for the caller
    return x_hat, commitment_loss, codebook_loss, perplexity


# ---------------------------------------------------------------------------
# Deterministic parameter init (PyTorch-like uniform bounds, torch layouts)
# ---------------------------------------------------------------------------
def _conv_init(key, cout, cin, kh, kw):
    kwgt, kb = jax.random.split(key)
    bound = 1.0 / (cin * kh * kw) ** 0.5
    w = jax.random.uniform(kwgt, (cout, cin, kh, kw), jnp.float32, -bound, bound)
    b = jax.random.uniform(kb, (cout,), jnp.float32, -bound, bound)
    return w, b


def _tconv_init(key, cin, cout, kh, kw):
    kwgt, kb = jax.random.split(key)
    bound = 1.0 / (cout * kh * kw) ** 0.5
    w = jax.random.uniform(kwgt, (cin, cout, kh, kw), jnp.float32, -bound, bound)
    b = jax.random.uniform(kb, (cout,), jnp.float32, -bound, bound)
    return w, b


def init_params(key, in_ch, hidden, latent, out_ch, n_embeddings):
    ks = jax.random.split(key, 10)
    enc = {}
    enc["w1"], enc["b1"] = _conv_init(ks[0], hidden, in_ch, 4, 4)
    enc["w2"], enc["b2"] = _conv_init(ks[1], hidden, hidden, 4, 4)
    enc["w3"], enc["b3"] = _conv_init(ks[2], hidden, hidden, 3, 3)
    enc["w4"], enc["b4"] = _conv_init(ks[3], latent, hidden, 1, 1)
    dec = {}
    dec["w1"], dec["b1"] = _conv_init(ks[4], hidden, latent, 1, 1)
    dec["w2"], dec["b2"] = _conv_init(ks[5], hidden, hidden, 3, 3)
    dec["wt1"], dec["bt1"] = _tconv_init(ks[6], hidden, hidden, 2, 2)
    dec["wt2"], dec["bt2"] = _tconv_init(ks[7], hidden, out_ch, 2, 2)
    codebook = jax.random.uniform(
        ks[8], (n_embeddings, latent), jnp.float32,
        -1.0 / n_embeddings, 1.0 / n_embeddings)
    return {"enc": enc, "dec": dec, "codebook": codebook}


# ---------------------------------------------------------------------------
if __name__ == "__main__":
    key = jax.random.PRNGKey(0)
    kp, kx = jax.random.split(key)

    B, Cin, H, W = 2, 1, 16, 16
    hidden = 128          # hidden_dim in the reference module; lane-dense channels
    latent = hidden       # residual adds (enc w4 / dec w1) require latent == hidden
    out_ch = 1
    n_embeddings = 128    # lane-dense codebook

    params = init_params(kp, Cin, hidden, latent, out_ch, n_embeddings)
    x = jax.random.normal(kx, (B, Cin, H, W), jnp.float32)

    fwd = jax.jit(model_forward)
    x_hat, commitment_loss, codebook_loss, perplexity = fwd(params, x)
    jax.block_until_ready((x_hat, commitment_loss, codebook_loss, perplexity))

    assert x_hat.shape == (B, out_ch, H, W), x_hat.shape
    assert commitment_loss.shape == () and codebook_loss.shape == () and perplexity.shape == ()
    print("KERNEL_OK")
</pallas_src>

<mosaic_0001>
module attributes {stable_mosaic.version = 11 : i64} {
  func.func @_matmul_kernel(%arg0: i32, %arg1: memref<128x128xbf16, #tpu.memory_space<vmem>>, %arg2: memref<128x128xbf16, #tpu.memory_space<vmem>>, %arg3: memref<1x128xf32, #tpu.memory_space<vmem>>, %arg4: memref<128x128xf32, #tpu.memory_space<vmem>>) attributes {dimension_semantics = [#tpu.dimension_semantics<parallel>], iteration_bounds = array<i64: 1>, scalar_prefetch = 0 : i64, scratch_operands = 0 : i64, tpu.core_type = #tpu.core_type<tc>, window_params = [{transform_indices = @transform_0, window_bounds = array<i64: 128, 128>}, {pipeline_mode = #tpu.pipeline_mode<synchronous>, transform_indices = @transform_1, window_bounds = array<i64: 128, 128>}, {pipeline_mode = #tpu.pipeline_mode<synchronous>, transform_indices = @transform_2, window_bounds = array<i64: 1, 128>}, {transform_indices = @transform_3, window_bounds = array<i64: 128, 128>}]} {
    %c0 = arith.constant 0 : index
    %c0_0 = arith.constant 0 : index
    %0 = vector.load %arg1[%c0, %c0_0] : memref<128x128xbf16, #tpu.memory_space<vmem>>, vector<128x128xbf16>
    %c0_1 = arith.constant 0 : index
    %c0_2 = arith.constant 0 : index
    %1 = vector.load %arg2[%c0_1, %c0_2] : memref<128x128xbf16, #tpu.memory_space<vmem>>, vector<128x128xbf16>
    %cst = arith.constant dense<0.000000e+00> : vector<128x128xf32>
    %2 = tpu.matmul %0, %1, %cst {dimension_numbers = #tpu.dot_dimension_numbers<[1], [0], [0], [1], [0, 0, 1, 1], [], []>} : vector<128x128xbf16>, vector<128x128xbf16>, vector<128x128xf32> -> vector<128x128xf32>
    %c0_3 = arith.constant 0 : index
    %c0_4 = arith.constant 0 : index
    %3 = vector.load %arg3[%c0_3, %c0_4] : memref<1x128xf32, #tpu.memory_space<vmem>>, vector<1x128xf32>
    %4 = vector.broadcast %3 : vector<1x128xf32> to vector<128x128xf32>
    %5 = arith.addf %2, %4 : vector<128x128xf32>
    %c0_5 = arith.constant 0 : index
    %c0_6 = arith.constant 0 : index
    %6 = vector.load %arg4[%c0_5, %c0_6] : memref<128x128xf32, #tpu.memory_space<vmem>>, vector<128x128xf32>
    tpu.vector_store %arg4[%c0_5, %c0_6], %5 {strides = array<i32>} : memref<128x128xf32, #tpu.memory_space<vmem>>, vector<128x128xf32>,
    return
  }
  func.func @transform_0(%arg0: i32) -> (i32, i32) {
    %c0_i32 = arith.constant 0 : i32
    %c0_i32_0 = arith.constant 0 : i32
    return %arg0, %c0_i32 : i32, i32
  }
  func.func @transform_1(%arg0: i32) -> (i32, i32) {
    %c0_i32 = arith.constant 0 : i32
    %c0_i32_0 = arith.constant 0 : i32
    %c0_i32_1 = arith.constant 0 : i32
    return %c0_i32, %c0_i32_0 : i32, i32
  }
  func.func @transform_2(%arg0: i32) -> (i32, i32) {
    %c0_i32 = arith.constant 0 : i32
    %c0_i32_0 = arith.constant 0 : i32
    %c0_i32_1 = arith.constant 0 : i32
    return %c0_i32, %c0_i32_0 : i32, i32
  }
  func.func @transform_3(%arg0: i32) -> (i32, i32) {
    %c0_i32 = arith.constant 0 : i32
    %c0_i32_0 = arith.constant 0 : i32
    return %arg0, %c0_i32 : i32, i32
  }
}

module attributes {stable_mosaic.version = 11 : i64} {
  func.func @_matmul_kernel(%arg0: i32, %arg1: memref<32x2048xbf16, #tpu.memory_space<vmem>>, %arg2: memref<2048x128xbf16, #tpu.memory_space<vmem>>, %arg3: memref<1x128xf32, #tpu.memory_space<vmem>>, %arg4: memref<32x128xf32, #tpu.memory_space<vmem>>) attributes {dimension_semantics = [#tpu.dimension_semantics<parallel>], iteration_bounds = array<i64: 1>, scalar_prefetch = 0 : i64, scratch_operands = 0 : i64, tpu.core_type = #tpu.core_type<tc>, window_params = [{transform_indices = @transform_0, window_bounds = array<i64: 32, 2048>}, {pipeline_mode = #tpu.pipeline_mode<synchronous>, transform_indices = @transform_1, window_bounds = array<i64: 2048, 128>}, {pipeline_mode = #tpu.pipeline_mode<synchronous>, transform_indices = @transform_2, window_bounds = array<i64: 1, 128>}, {transform_indices = @transform_3, window_bounds = array<i64: 32, 128>}]} {
    %c0 = arith.constant 0 : index
    %c0_0 = arith.constant 0 : index
    %0 = vector.load %arg1[%c0, %c0_0] : memref<32x2048xbf16, #tpu.memory_space<vmem>>, vector<32x2048xbf16>
    %c0_1 = arith.constant 0 : index
    %c0_2 = arith.constant 0 : index
    %1 = vector.load %arg2[%c0_1, %c0_2] : memref<2048x128xbf16, #tpu.memory_space<vmem>>, vector<2048x128xbf16>
    %cst = arith.constant dense<0.000000e+00> : vector<32x128xf32>
    %2 = tpu.matmul %0, %1, %cst {dimension_numbers = #tpu.dot_dimension_numbers<[1], [0], [0], [1], [0, 0, 1, 1], [], []>} : vector<32x2048xbf16>, vector<2048x128xbf16>, vector<32x128xf32> -> vector<32x128xf32>
    %c0_3 = arith.constant 0 : index
    %c0_4 = arith.constant 0 : index
    %3 = vector.load %arg3[%c0_3, %c0_4] : memref<1x128xf32, #tpu.memory_space<vmem>>, vector<1x128xf32>
    %4 = vector.broadcast %3 : vector<1x128xf32> to vector<32x128xf32>
    %5 = arith.addf %2, %4 : vector<32x128xf32>
    %cst_5 = arith.constant 0.000000e+00 : f32
    %6 = vector.broadcast %cst_5 : f32 to vector<32x128xf32>
    %7 = arith.maximumf %5, %6 : vector<32x128xf32>
    %c0_6 = arith.constant 0 : index
    %c0_7 = arith.constant 0 : index
    %8 = vector.load %arg4[%c0_6, %c0_7] : memref<32x128xf32, #tpu.memory_space<vmem>>, vector<32x128xf32>
    tpu.vector_store %arg4[%c0_6, %c0_7], %7 {strides = array<i32>} : memref<32x128xf32, #tpu.memory_space<vmem>>, vector<32x128xf32>,
    return
  }
  func.func @transform_0(%arg0: i32) -> (i32, i32) {
    %c0_i32 = arith.constant 0 : i32
    %c0_i32_0 = arith.constant 0 : i32
    return %arg0, %c0_i32 : i32, i32
  }
  func.func @transform_1(%arg0: i32) -> (i32, i32) {
    %c0_i32 = arith.constant 0 : i32
    %c0_i32_0 = arith.constant 0 : i32
    %c0_i32_1 = arith.constant 0 : i32
    return %c0_i32, %c0_i32_0 : i32, i32
  }
  func.func @transform_2(%arg0: i32) -> (i32, i32) {
    %c0_i32 = arith.constant 0 : i32
    %c0_i32_0 = arith.constant 0 : i32
    %c0_i32_1 = arith.constant 0 : i32
    return %c0_i32, %c0_i32_0 : i32, i32
  }
  func.func @transform_3(%arg0: i32) -> (i32, i32) {
    %c0_i32 = arith.constant 0 : i32
    %c0_i32_0 = arith.constant 0 : i32
    return %arg0, %c0_i32 : i32, i32
  }
}

module attributes {stable_mosaic.version = 11 : i64} {
  func.func @_enc_res_pair_kernel(%arg0: i32, %arg1: memref<32x1152xbf16, #tpu.memory_space<vmem>>, %arg2: memref<32x128xf32, #tpu.memory_space<vmem>>, %arg3: memref<1152x128xbf16, #tpu.memory_space<vmem>>, %arg4: memref<1x128xf32, #tpu.memory_space<vmem>>, %arg5: memref<128x128xbf16, #tpu.memory_space<vmem>>, %arg6: memref<1x128xf32, #tpu.memory_space<vmem>>, %arg7: memref<32x128xf32, #tpu.memory_space<vmem>>) attributes {dimension_semantics = [#tpu.dimension_semantics<parallel>], iteration_bounds = array<i64: 1>, scalar_prefetch = 0 : i64, scratch_operands = 0 : i64, tpu.core_type = #tpu.core_type<tc>, window_params = [{transform_indices = @transform_0, window_bounds = array<i64: 32, 1152>}, {transform_indices = @transform_1, window_bounds = array<i64: 32, 128>}, {pipeline_mode = #tpu.pipeline_mode<synchronous>, transform_indices = @transform_2, window_bounds = array<i64: 1152, 128>}, {pipeline_mode = #tpu.pipeline_mode<synchronous>, transform_indices = @transform_3, window_bounds = array<i64: 1, 128>}, {pipeline_mode = #tpu.pipeline_mode<synchronous>, transform_indices = @transform_4, window_bounds = array<i64: 128, 128>}, {pipeline_mode = #tpu.pipeline_mode<synchronous>, transform_indices = @transform_5, window_bounds = array<i64: 1, 128>}, {transform_indices = @transform_6, window_bounds = array<i64: 32, 128>}]} {
    %c0 = arith.constant 0 : index
    %c0_0 = arith.constant 0 : index
    %0 = vector.load %arg1[%c0, %c0_0] : memref<32x1152xbf16, #tpu.memory_space<vmem>>, vector<32x1152xbf16>
    %c0_1 = arith.constant 0 : index
    %c0_2 = arith.constant 0 : index
    %1 = vector.load %arg3[%c0_1, %c0_2] : memref<1152x128xbf16, #tpu.memory_space<vmem>>, vector<1152x128xbf16>
    %cst = arith.constant dense<0.000000e+00> : vector<32x128xf32>
    %2 = tpu.matmul %0, %1, %cst {dimension_numbers = #tpu.dot_dimension_numbers<[1], [0], [0], [1], [0, 0, 1, 1], [], []>} : vector<32x1152xbf16>, vector<1152x128xbf16>, vector<32x128xf32> -> vector<32x128xf32>
    %c0_3 = arith.constant 0 : index
    %c0_4 = arith.constant 0 : index
    %3 = vector.load %arg4[%c0_3, %c0_4] : memref<1x128xf32, #tpu.memory_space<vmem>>, vector<1x128xf32>
    %4 = vector.broadcast %3 : vector<1x128xf32> to vector<32x128xf32>
    %5 = arith.addf %2, %4 : vector<32x128xf32>
    %c0_5 = arith.constant 0 : index
    %c0_6 = arith.constant 0 : index
    %6 = vector.load %arg2[%c0_5, %c0_6] : memref<32x128xf32, #tpu.memory_space<vmem>>, vector<32x128xf32>
    %7 = arith.addf %5, %6 : vector<32x128xf32>
    %cst_7 = arith.constant 0.000000e+00 : f32
    %8 = vector.broadcast %cst_7 : f32 to vector<32x128xf32>
    %9 = arith.maximumf %7, %8 : vector<32x128xf32>
    %10 = arith.truncf %9 : vector<32x128xf32> to vector<32x128xbf16>
    %c0_8 = arith.constant 0 : index
    %c0_9 = arith.constant 0 : index
    %11 = vector.load %arg5[%c0_8, %c0_9] : memref<128x128xbf16, #tpu.memory_space<vmem>>, vector<128x128xbf16>
    %cst_10 = arith.constant dense<0.000000e+00> : vector<32x128xf32>
    %12 = tpu.matmul %10, %11, %cst_10 {dimension_numbers = #tpu.dot_dimension_numbers<[1], [0], [0], [1], [0, 0, 1, 1], [], []>} : vector<32x128xbf16>, vector<128x128xbf16>, vector<32x128xf32> -> vector<32x128xf32>
    %c0_11 = arith.constant 0 : index
    %c0_12 = arith.constant 0 : index
    %13 = vector.load %arg6[%c0_11, %c0_12] : memref<1x128xf32, #tpu.memory_space<vmem>>, vector<1x128xf32>
    %14 = vector.broadcast %13 : vector<1x128xf32> to vector<32x128xf32>
    %15 = arith.addf %12, %14 : vector<32x128xf32>
    %16 = arith.addf %15, %9 : vector<32x128xf32>
    %c0_13 = arith.constant 0 : index
    %c0_14 = arith.constant 0 : index
    %17 = vector.load %arg7[%c0_13, %c0_14] : memref<32x128xf32, #tpu.memory_space<vmem>>, vector<32x128xf32>
    tpu.vector_store %arg7[%c0_13, %c0_14], %16 {strides = array<i32>} : memref<32x128xf32, #tpu.memory_space<vmem>>, vector<32x128xf32>,
    return
  }
  func.func @transform_0(%arg0: i32) -> (i32, i32) {
    %c0_i32 = arith.constant 0 : i32
    %c0_i32_0 = arith.constant 0 : i32
    return %arg0, %c0_i32 : i32, i32
  }
  func.func @transform_1(%arg0: i32) -> (i32, i32) {
    %c0_i32 = arith.constant 0 : i32
    %c0_i32_0 = arith.constant 0 : i32
    return %arg0, %c0_i32 : i32, i32
  }
  func.func @transform_2(%arg0: i32) -> (i32, i32) {
    %c0_i32 = arith.constant 0 : i32
    %c0_i32_0 = arith.constant 0 : i32
    %c0_i32_1 = arith.constant 0 : i32
    return %c0_i32, %c0_i32_0 : i32, i32
  }
  func.func @transform_3(%arg0: i32) -> (i32, i32) {
    %c0_i32 = arith.constant 0 : i32
    %c0_i32_0 = arith.constant 0 : i32
    %c0_i32_1 = arith.constant 0 : i32
    return %c0_i32, %c0_i32_0 : i32, i32
  }
  func.func @transform_4(%arg0: i32) -> (i32, i32) {
    %c0_i32 = arith.constant 0 : i32
    %c0_i32_0 = arith.constant 0 : i32
    %c0_i32_1 = arith.constant 0 : i32
    return %c0_i32, %c0_i32_0 : i32, i32
  }
  func.func @transform_5(%arg0: i32) -> (i32, i32) {
    %c0_i32 = arith.constant 0 : i32
    %c0_i32_0 = arith.constant 0 : i32
    %c0_i32_1 = arith.constant 0 : i32
    return %c0_i32, %c0_i32_0 : i32, i32
  }
  func.func @transform_6(%arg0: i32) -> (i32, i32) {
    %c0_i32 = arith.constant 0 : i32
    %c0_i32_0 = arith.constant 0 : i32
    return %arg0, %c0_i32 : i32, i32
  }
}

module attributes {stable_mosaic.version = 11 : i64} {
  func.func @_vq_kernel(%arg0: i32, %arg1: memref<32x128xf32, #tpu.memory_space<vmem>>, %arg2: memref<128x128xf32, #tpu.memory_space<vmem>>, %arg3: memref<32x128xf32, #tpu.memory_space<vmem>>, %arg4: memref<3xf32, #tpu.memory_space<smem>>) attributes {dimension_semantics = [#tpu.dimension_semantics<arbitrary>], iteration_bounds = array<i64: 1>, scalar_prefetch = 0 : i64, scratch_operands = 0 : i64, tpu.core_type = #tpu.core_type<tc>, window_params = [{pipeline_mode = #tpu.pipeline_mode<synchronous>, transform_indices = @transform_0, window_bounds = array<i64: 32, 128>}, {pipeline_mode = #tpu.pipeline_mode<synchronous>, transform_indices = @transform_1, window_bounds = array<i64: 128, 128>}, {pipeline_mode = #tpu.pipeline_mode<synchronous>, transform_indices = @transform_2, window_bounds = array<i64: 32, 128>}, {transform_indices = @transform_3, window_bounds = array<i64: 3>}]} {
    %c0 = arith.constant 0 : index
    %c0_0 = arith.constant 0 : index
    %0 = vector.load %arg1[%c0, %c0_0] : memref<32x128xf32, #tpu.memory_space<vmem>>, vector<32x128xf32>
    %c0_1 = arith.constant 0 : index
    %c0_2 = arith.constant 0 : index
    %1 = vector.load %arg2[%c0_1, %c0_2] : memref<128x128xf32, #tpu.memory_space<vmem>>, vector<128x128xf32>
    %2 = arith.truncf %0 : vector<32x128xf32> to vector<32x128xbf16>
    %3 = arith.truncf %1 : vector<128x128xf32> to vector<128x128xbf16>
    %cst = arith.constant dense<0.000000e+00> : vector<32x128xf32>
    %4 = tpu.matmul %2, %3, %cst {dimension_numbers = #tpu.dot_dimension_numbers<[1], [1], [0], [0], [0, 0, 1, 0], [], []>} : vector<32x128xbf16>, vector<128x128xbf16>, vector<32x128xf32> -> vector<32x128xf32>
    %cst_3 = arith.constant 1.000000e+00 : f32
    %5 = vector.broadcast %cst_3 : f32 to vector<1x128xf32>
    %6 = arith.mulf %1, %1 : vector<128x128xf32>
    %cst_4 = arith.constant dense<0.000000e+00> : vector<1x128xf32>
    %7 = tpu.matmul %5, %6, %cst_4 {dimension_numbers = #tpu.dot_dimension_numbers<[1], [1], [0], [0], [0, 0, 1, 0], [], []>} : vector<1x128xf32>, vector<128x128xf32>, vector<1x128xf32> -> vector<1x128xf32>
    %cst_5 = arith.constant 2.000000e+00 : f32
    %8 = vector.broadcast %cst_5 : f32 to vector<32x128xf32>
    %9 = arith.mulf %8, %4 : vector<32x128xf32>
    %10 = vector.broadcast %7 : vector<1x128xf32> to vector<32x128xf32>
    %11 = arith.subf %10, %9 : vector<32x128xf32>
    %12 = tpu.iota {dimensions = array<i32: 1>} : vector<32x128xi32>
    %cst_6 = arith.constant dense<0x7F800000> : vector<32xf32>
    %13 = vector.multi_reduction <minimumf>, %11, %cst_6 [1] : vector<32x128xf32> to vector<32xf32>
    %14 = vector.shape_cast %13 : vector<32xf32> to vector<32x1xf32>
    %15 = vector.broadcast %14 : vector<32x1xf32> to vector<32x128xf32>
    %16 = arith.cmpf ole, %11, %15 : vector<32x128xf32>
    %c128_i32 = arith.constant 128 : i32
    %17 = vector.broadcast %c128_i32 : i32 to vector<32x128xi32>
    %18 = arith.select %16, %12, %17 : vector<32x128xi1>, vector<32x128xi32>
    %cst_7 = arith.constant dense<2147483647> : vector<32xi32>
    %19 = vector.multi_reduction <minsi>, %18, %cst_7 [1] : vector<32x128xi32> to vector<32xi32>
    %20 = vector.shape_cast %19 : vector<32xi32> to vector<32x1xi32>
    %21 = vector.broadcast %20 : vector<32x1xi32> to vector<32x128xi32>
    %22 = arith.cmpi eq, %12, %21 : vector<32x128xi32>
    %23 = arith.extui %22 : vector<32x128xi1> to vector<32x128xi32>
    %24 = arith.sitofp %23 : vector<32x128xi32> to vector<32x128xf32>
    %cst_8 = arith.constant dense<0.000000e+00> : vector<32x128xf32>
    %25 = tpu.matmul %24, %1, %cst_8 {dimension_numbers = #tpu.dot_dimension_numbers<[1], [0], [0], [1], [0, 0, 1, 1], [], []>} : vector<32x128xf32>, vector<128x128xf32>, vector<32x128xf32> -> vector<32x128xf32>
    %c0_9 = arith.constant 0 : index
    %c0_10 = arith.constant 0 : index
    %26 = vector.load %arg3[%c0_9, %c0_10] : memref<32x128xf32, #tpu.memory_space<vmem>>, vector<32x128xf32>
    tpu.vector_store %arg3[%c0_9, %c0_10], %25 {strides = array<i32>} : memref<32x128xf32, #tpu.memory_space<vmem>>, vector<32x128xf32>,
    %27 = arith.subf %25, %0 : vector<32x128xf32>
    %28 = arith.mulf %27, %27 : vector<32x128xf32>
    %29 = vector.shape_cast %28 : vector<32x128xf32> to vector<1x32x128xf32>
    %cst_11 = arith.constant dense<0.000000e+00> : vector<1xf32>
    %30 = vector.multi_reduction <add>, %29, %cst_11 [1, 2] : vector<1x32x128xf32> to vector<1xf32>
    %31 = vector.shape_cast %30 : vector<1xf32> to vector<1x1x1xf32>
    %32 = vector.extract %31[0, 0, 0] : f32 from vector<1x1x1xf32>
    %cst_12 = arith.constant 4.096000e+03 : f32
    %33 = arith.divf %32, %cst_12 : f32
    %cst_13 = arith.constant 2.500000e-01 : f32
    %34 = arith.mulf %cst_13, %33 : f32
    %c0_14 = arith.constant 0 : index
    %35 = memref.load %arg4[%c0_14] : memref<3xf32, #tpu.memory_space<smem>>
    memref.store %34, %arg4[%c0_14] : memref<3xf32, #tpu.memory_space<smem>>
    %c1 = arith.constant 1 : index
    %36 = memref.load %arg4[%c1] : memref<3xf32, #tpu.memory_space<smem>>
    memref.store %33, %arg4[%c1] : memref<3xf32, #tpu.memory_space<smem>>
    %cst_15 = arith.constant dense<0.000000e+00> : vector<128xf32>
    %37 = vector.multi_reduction <add>, %24, %cst_15 [0] : vector<32x128xf32> to vector<128xf32>
    %cst_16 = arith.constant 3.200000e+01 : f32
    %38 = vector.broadcast %cst_16 : f32 to vector<128xf32>
    %39 = arith.divf %37, %38 : vector<128xf32>
    %cst_17 = arith.constant 1.000000e-10 : f32
    %40 = vector.broadcast %cst_17 : f32 to vector<128xf32>
    %41 = arith.addf %39, %40 : vector<128xf32>
    %42 = math.log %41 : vector<128xf32>
    %43 = arith.mulf %39, %42 : vector<128xf32>
    %44 = vector.shape_cast %43 : vector<128xf32> to vector<1x128xf32>
    %cst_18 = arith.constant dense<0.000000e+00> : vector<1xf32>
    %45 = vector.multi_reduction <add>, %44, %cst_18 [1] : vector<1x128xf32> to vector<1xf32>
    %46 = vector.shape_cast %45 : vector<1xf32> to vector<1x1xf32>
    %47 = vector.extract %46[0, 0] : f32 from vector<1x1xf32>
    %cst_19 = arith.constant 0.000000e+00 : f32
    %48 = arith.subf %cst_19, %47 : f32
    %49 = math.exp %48 : f32
    %c2 = arith.constant 2 : index
    %50 = memref.load %arg4[%c2] : memref<3xf32, #tpu.memory_space<smem>>
    memref.store %49, %arg4[%c2] : memref<3xf32, #tpu.memory_space<smem>>
    return
  }
  func.func @transform_0(%arg0: i32) -> (i32, i32) {
    %c0_i32 = arith.constant 0 : i32
    %c0_i32_0 = arith.constant 0 : i32
    %c0_i32_1 = arith.constant 0 : i32
    return %c0_i32, %c0_i32_0 : i32, i32
  }
  func.func @transform_1(%arg0: i32) -> (i32, i32) {
    %c0_i32 = arith.constant 0 : i32
    %c0_i32_0 = arith.constant 0 : i32
    %c0_i32_1 = arith.constant 0 : i32
    return %c0_i32, %c0_i32_0 : i32, i32
  }
  func.func @transform_2(%arg0: i32) -> (i32, i32) {
    %c0_i32 = arith.constant 0 : i32
    %c0_i32_0 = arith.constant 0 : i32
    %c0_i32_1 = arith.constant 0 : i32
    return %c0_i32, %c0_i32_0 : i32, i32
  }
  func.func @transform_3(%arg0: i32) -> i32 {
    %c0_i32 = arith.constant 0 : i32
    %c0_i32_0 = arith.constant 0 : i32
    return %c0_i32 : i32
  }
}

module attributes {stable_mosaic.version = 11 : i64} {
  func.func @_matmul_res_kernel(%arg0: i32, %arg1: memref<32x128xbf16, #tpu.memory_space<vmem>>, %arg2: memref<128x128xbf16, #tpu.memory_space<vmem>>, %arg3: memref<1x128xf32, #tpu.memory_space<vmem>>, %arg4: memref<32x128xf32, #tpu.memory_space<vmem>>, %arg5: memref<32x128xf32, #tpu.memory_space<vmem>>) attributes {dimension_semantics = [#tpu.dimension_semantics<parallel>], iteration_bounds = array<i64: 1>, scalar_prefetch = 0 : i64, scratch_operands = 0 : i64, tpu.core_type = #tpu.core_type<tc>, window_params = [{transform_indices = @transform_0, window_bounds = array<i64: 32, 128>}, {pipeline_mode = #tpu.pipeline_mode<synchronous>, transform_indices = @transform_1, window_bounds = array<i64: 128, 128>}, {pipeline_mode = #tpu.pipeline_mode<synchronous>, transform_indices = @transform_2, window_bounds = array<i64: 1, 128>}, {transform_indices = @transform_3, window_bounds = array<i64: 32, 128>}, {transform_indices = @transform_4, window_bounds = array<i64: 32, 128>}]} {
    %c0 = arith.constant 0 : index
    %c0_0 = arith.constant 0 : index
    %0 = vector.load %arg1[%c0, %c0_0] : memref<32x128xbf16, #tpu.memory_space<vmem>>, vector<32x128xbf16>
    %c0_1 = arith.constant 0 : index
    %c0_2 = arith.constant 0 : index
    %1 = vector.load %arg2[%c0_1, %c0_2] : memref<128x128xbf16, #tpu.memory_space<vmem>>, vector<128x128xbf16>
    %cst = arith.constant dense<0.000000e+00> : vector<32x128xf32>
    %2 = tpu.matmul %0, %1, %cst {dimension_numbers = #tpu.dot_dimension_numbers<[1], [0], [0], [1], [0, 0, 1, 1], [], []>} : vector<32x128xbf16>, vector<128x128xbf16>, vector<32x128xf32> -> vector<32x128xf32>
    %c0_3 = arith.constant 0 : index
    %c0_4 = arith.constant 0 : index
    %3 = vector.load %arg3[%c0_3, %c0_4] : memref<1x128xf32, #tpu.memory_space<vmem>>, vector<1x128xf32>
    %4 = vector.broadcast %3 : vector<1x128xf32> to vector<32x128xf32>
    %5 = arith.addf %2, %4 : vector<32x128xf32>
    %c0_5 = arith.constant 0 : index
    %c0_6 = arith.constant 0 : index
    %6 = vector.load %arg4[%c0_5, %c0_6] : memref<32x128xf32, #tpu.memory_space<vmem>>, vector<32x128xf32>
    %7 = arith.addf %5, %6 : vector<32x128xf32>
    %cst_7 = arith.constant 0.000000e+00 : f32
    %8 = vector.broadcast %cst_7 : f32 to vector<32x128xf32>
    %9 = arith.maximumf %7, %8 : vector<32x128xf32>
    %c0_8 = arith.constant 0 : index
    %c0_9 = arith.constant 0 : index
    %10 = vector.load %arg5[%c0_8, %c0_9] : memref<32x128xf32, #tpu.memory_space<vmem>>, vector<32x128xf32>
    tpu.vector_store %arg5[%c0_8, %c0_9], %9 {strides = array<i32>} : memref<32x128xf32, #tpu.memory_space<vmem>>, vector<32x128xf32>,
    return
  }
  func.func @transform_0(%arg0: i32) -> (i32, i32) {
    %c0_i32 = arith.constant 0 : i32
    %c0_i32_0 = arith.constant 0 : i32
    return %arg0, %c0_i32 : i32, i32
  }
  func.func @transform_1(%arg0: i32) -> (i32, i32) {
    %c0_i32 = arith.constant 0 : i32
    %c0_i32_0 = arith.constant 0 : i32
    %c0_i32_1 = arith.constant 0 : i32
    return %c0_i32, %c0_i32_0 : i32, i32
  }
  func.func @transform_2(%arg0: i32) -> (i32, i32) {
    %c0_i32 = arith.constant 0 : i32
    %c0_i32_0 = arith.constant 0 : i32
    %c0_i32_1 = arith.constant 0 : i32
    return %c0_i32, %c0_i32_0 : i32, i32
  }
  func.func @transform_3(%arg0: i32) -> (i32, i32) {
    %c0_i32 = arith.constant 0 : i32
    %c0_i32_0 = arith.constant 0 : i32
    return %arg0, %c0_i32 : i32, i32
  }
  func.func @transform_4(%arg0: i32) -> (i32, i32) {
    %c0_i32 = arith.constant 0 : i32
    %c0_i32_0 = arith.constant 0 : i32
    return %arg0, %c0_i32 : i32, i32
  }
}

module attributes {stable_mosaic.version = 11 : i64} {
  func.func @_matmul_res_kernel(%arg0: i32, %arg1: memref<32x1152xbf16, #tpu.memory_space<vmem>>, %arg2: memref<1152x128xbf16, #tpu.memory_space<vmem>>, %arg3: memref<1x128xf32, #tpu.memory_space<vmem>>, %arg4: memref<32x128xf32, #tpu.memory_space<vmem>>, %arg5: memref<32x128xf32, #tpu.memory_space<vmem>>) attributes {dimension_semantics = [#tpu.dimension_semantics<parallel>], iteration_bounds = array<i64: 1>, scalar_prefetch = 0 : i64, scratch_operands = 0 : i64, tpu.core_type = #tpu.core_type<tc>, window_params = [{transform_indices = @transform_0, window_bounds = array<i64: 32, 1152>}, {pipeline_mode = #tpu.pipeline_mode<synchronous>, transform_indices = @transform_1, window_bounds = array<i64: 1152, 128>}, {pipeline_mode = #tpu.pipeline_mode<synchronous>, transform_indices = @transform_2, window_bounds = array<i64: 1, 128>}, {transform_indices = @transform_3, window_bounds = array<i64: 32, 128>}, {transform_indices = @transform_4, window_bounds = array<i64: 32, 128>}]} {
    %c0 = arith.constant 0 : index
    %c0_0 = arith.constant 0 : index
    %0 = vector.load %arg1[%c0, %c0_0] : memref<32x1152xbf16, #tpu.memory_space<vmem>>, vector<32x1152xbf16>
    %c0_1 = arith.constant 0 : index
    %c0_2 = arith.constant 0 : index
    %1 = vector.load %arg2[%c0_1, %c0_2] : memref<1152x128xbf16, #tpu.memory_space<vmem>>, vector<1152x128xbf16>
    %cst = arith.constant dense<0.000000e+00> : vector<32x128xf32>
    %2 = tpu.matmul %0, %1, %cst {dimension_numbers = #tpu.dot_dimension_numbers<[1], [0], [0], [1], [0, 0, 1, 1], [], []>} : vector<32x1152xbf16>, vector<1152x128xbf16>, vector<32x128xf32> -> vector<32x128xf32>
    %c0_3 = arith.constant 0 : index
    %c0_4 = arith.constant 0 : index
    %3 = vector.load %arg3[%c0_3, %c0_4] : memref<1x128xf32, #tpu.memory_space<vmem>>, vector<1x128xf32>
    %4 = vector.broadcast %3 : vector<1x128xf32> to vector<32x128xf32>
    %5 = arith.addf %2, %4 : vector<32x128xf32>
    %c0_5 = arith.constant 0 : index
    %c0_6 = arith.constant 0 : index
    %6 = vector.load %arg4[%c0_5, %c0_6] : memref<32x128xf32, #tpu.memory_space<vmem>>, vector<32x128xf32>
    %7 = arith.addf %5, %6 : vector<32x128xf32>
    %cst_7 = arith.constant 0.000000e+00 : f32
    %8 = vector.broadcast %cst_7 : f32 to vector<32x128xf32>
    %9 = arith.maximumf %7, %8 : vector<32x128xf32>
    %c0_8 = arith.constant 0 : index
    %c0_9 = arith.constant 0 : index
    %10 = vector.load %arg5[%c0_8, %c0_9] : memref<32x128xf32, #tpu.memory_space<vmem>>, vector<32x128xf32>
    tpu.vector_store %arg5[%c0_8, %c0_9], %9 {strides = array<i32>} : memref<32x128xf32, #tpu.memory_space<vmem>>, vector<32x128xf32>,
    return
  }
  func.func @transform_0(%arg0: i32) -> (i32, i32) {
    %c0_i32 = arith.constant 0 : i32
    %c0_i32_0 = arith.constant 0 : i32
    return %arg0, %c0_i32 : i32, i32
  }
  func.func @transform_1(%arg0: i32) -> (i32, i32) {
    %c0_i32 = arith.constant 0 : i32
    %c0_i32_0 = arith.constant 0 : i32
    %c0_i32_1 = arith.constant 0 : i32
    return %c0_i32, %c0_i32_0 : i32, i32
  }
  func.func @transform_2(%arg0: i32) -> (i32, i32) {
    %c0_i32 = arith.constant 0 : i32
    %c0_i32_0 = arith.constant 0 : i32
    %c0_i32_1 = arith.constant 0 : i32
    return %c0_i32, %c0_i32_0 : i32, i32
  }
  func.func @transform_3(%arg0: i32) -> (i32, i32) {
    %c0_i32 = arith.constant 0 : i32
    %c0_i32_0 = arith.constant 0 : i32
    return %arg0, %c0_i32 : i32, i32
  }
  func.func @transform_4(%arg0: i32) -> (i32, i32) {
    %c0_i32 = arith.constant 0 : i32
    %c0_i32_0 = arith.constant 0 : i32
    return %arg0, %c0_i32 : i32, i32
  }
}

module attributes {stable_mosaic.version = 11 : i64} {
  func.func @_matmul_kernel(%arg0: i32, %arg1: memref<32x128xbf16, #tpu.memory_space<vmem>>, %arg2: memref<128x512xbf16, #tpu.memory_space<vmem>>, %arg3: memref<1x512xf32, #tpu.memory_space<vmem>>, %arg4: memref<32x512xf32, #tpu.memory_space<vmem>>) attributes {dimension_semantics = [#tpu.dimension_semantics<parallel>], iteration_bounds = array<i64: 1>, scalar_prefetch = 0 : i64, scratch_operands = 0 : i64, tpu.core_type = #tpu.core_type<tc>, window_params = [{transform_indices = @transform_0, window_bounds = array<i64: 32, 128>}, {pipeline_mode = #tpu.pipeline_mode<synchronous>, transform_indices = @transform_1, window_bounds = array<i64: 128, 512>}, {pipeline_mode = #tpu.pipeline_mode<synchronous>, transform_indices = @transform_2, window_bounds = array<i64: 1, 512>}, {transform_indices = @transform_3, window_bounds = array<i64: 32, 512>}]} {
    %c0 = arith.constant 0 : index
    %c0_0 = arith.constant 0 : index
    %0 = vector.load %arg1[%c0, %c0_0] : memref<32x128xbf16, #tpu.memory_space<vmem>>, vector<32x128xbf16>
    %c0_1 = arith.constant 0 : index
    %c0_2 = arith.constant 0 : index
    %1 = vector.load %arg2[%c0_1, %c0_2] : memref<128x512xbf16, #tpu.memory_space<vmem>>, vector<128x512xbf16>
    %cst = arith.constant dense<0.000000e+00> : vector<32x512xf32>
    %2 = tpu.matmul %0, %1, %cst {dimension_numbers = #tpu.dot_dimension_numbers<[1], [0], [0], [1], [0, 0, 1, 1], [], []>} : vector<32x128xbf16>, vector<128x512xbf16>, vector<32x512xf32> -> vector<32x512xf32>
    %c0_3 = arith.constant 0 : index
    %c0_4 = arith.constant 0 : index
    %3 = vector.load %arg3[%c0_3, %c0_4] : memref<1x512xf32, #tpu.memory_space<vmem>>, vector<1x512xf32>
    %4 = vector.broadcast %3 : vector<1x512xf32> to vector<32x512xf32>
    %5 = arith.addf %2, %4 : vector<32x512xf32>
    %c0_5 = arith.constant 0 : index
    %c0_6 = arith.constant 0 : index
    %6 = vector.load %arg4[%c0_5, %c0_6] : memref<32x512xf32, #tpu.memory_space<vmem>>, vector<32x512xf32>
    tpu.vector_store %arg4[%c0_5, %c0_6], %5 {strides = array<i32>} : memref<32x512xf32, #tpu.memory_space<vmem>>, vector<32x512xf32>,
    return
  }
  func.func @transform_0(%arg0: i32) -> (i32, i32) {
    %c0_i32 = arith.constant 0 : i32
    %c0_i32_0 = arith.constant 0 : i32
    return %arg0, %c0_i32 : i32, i32
  }
  func.func @transform_1(%arg0: i32) -> (i32, i32) {
    %c0_i32 = arith.constant 0 : i32
    %c0_i32_0 = arith.constant 0 : i32
    %c0_i32_1 = arith.constant 0 : i32
    return %c0_i32, %c0_i32_0 : i32, i32
  }
  func.func @transform_2(%arg0: i32) -> (i32, i32) {
    %c0_i32 = arith.constant 0 : i32
    %c0_i32_0 = arith.constant 0 : i32
    %c0_i32_1 = arith.constant 0 : i32
    return %c0_i32, %c0_i32_0 : i32, i32
  }
  func.func @transform_3(%arg0: i32) -> (i32, i32) {
    %c0_i32 = arith.constant 0 : i32
    %c0_i32_0 = arith.constant 0 : i32
    return %arg0, %c0_i32 : i32, i32
  }
}

</mosaic_0001>

<llo_original>
// kernel: model_forward.8
$region0: #{model_forward.8}
  #allocation0 [shape = 'u32[]', space=smem, size = 0x4, offset = 0x4, fixed_abs, tag = 'smem constant byte address 0x4 - core index']
  #allocation1 [shape = 'u32[144,128]{1,0:T(1,128)}', space=vmem, size = 0x12000, scoped, tag = 'internal scratch']
  %s0 = inlined_call_operand.vmem [shape: bf16[128,128], index: 0, kind: input, shape index: {}]
  %s1 = inlined_call_operand.vmem [shape: bf16[128,128], index: 1, kind: input, shape index: {}]
  %s2 = inlined_call_operand.vmem [shape: f32[1,128], index: 2, kind: input, shape index: {}]
  %s3 = inlined_call_operand.vmem [shape: f32[128,128], index: 3, kind: output, shape index: {}]
  %s4 = sld [smem:[#allocation0]]
  $region22: #{model_forward.8} parent=0
    _
  %s6 = ssub.s32 1, %s4
  %s7 = scalar_select 0, %s6, %s4
  // Predicated region
  $region2: #{model_forward.8} parent=0 // pred_check
    _
  $region3: #{model_forward.8} parent=0 // pred_check_branch
    %9 = sbr.rel (0) target = $region5
  $region4: #{model_forward.8} parent=0 // pred_region
    _
  $region5: #{model_forward.8} parent=0 // pred_fallthru
    _
  // Predicated region
  $region6: #{model_forward.8} parent=0 // pred_check
    _
  $region7: #{model_forward.8} parent=0 // pred_check_branch
    %11 = sbr.rel (0) target = $region9
  $region8: #{model_forward.8} parent=0 // pred_region
    _
  $region9: #{model_forward.8} parent=0 // pred_fallthru
    _
  // Predicated region
  $region10: #{model_forward.8} parent=0 // pred_check
    _
  $region11: #{model_forward.8} parent=0 // pred_check_branch
    %13 = sbr.rel (0) target = $region13
  $region12: #{model_forward.8} parent=0 // pred_region
    _
  $region13: #{model_forward.8} parent=0 // pred_fallthru
    _
  %v15 = vld [vmem:[%s0] sm:$0xf]
  %v16 = vld [vmem:[%s0 + $0x4] sm:$0xf]
  %v17 = vld [vmem:[%s0 + $0x8] sm:$0xf]
  %v18 = vld [vmem:[%s0 + $0xc] sm:$0xf]
  %v19 = vld [vmem:[%s0 + $0x10] sm:$0xf]
  %v20 = vld [vmem:[%s0 + $0x14] sm:$0xf]
  %v21 = vld [vmem:[%s0 + $0x18] sm:$0xf]
  %v22 = vld [vmem:[%s0 + $0x1c] sm:$0xf]
  %v23 = vld [vmem:[%s0 + $0x20] sm:$0xf]
  %v24 = vld [vmem:[%s0 + $0x24] sm:$0xf]
  %v25 = vld [vmem:[%s0 + $0x28] sm:$0xf]
  %v26 = vld [vmem:[%s0 + $0x2c] sm:$0xf]
  %v27 = vld [vmem:[%s0 + $0x30] sm:$0xf]
  %v28 = vld [vmem:[%s0 + $0x34] sm:$0xf]
  %v29 = vld [vmem:[%s0 + $0x38] sm:$0xf]
  %v30 = vld [vmem:[%s0 + $0x3c] sm:$0xf]
  %v31 = vld [vmem:[%s1] sm:$0xf]
  %v32 = vld [vmem:[%s1 + $0x4] sm:$0xf]
  %v33 = vld [vmem:[%s1 + $0x8] sm:$0xf]
  %v34 = vld [vmem:[%s1 + $0xc] sm:$0xf]
  %v35 = vld [vmem:[%s1 + $0x10] sm:$0xf]
  %v36 = vld [vmem:[%s1 + $0x14] sm:$0xf]
  %v37 = vld [vmem:[%s1 + $0x18] sm:$0xf]
  %v38 = vld [vmem:[%s1 + $0x1c] sm:$0xf]
  %v39 = vld [vmem:[%s1 + $0x20] sm:$0xf]
  %v40 = vld [vmem:[%s1 + $0x24] sm:$0xf]
  %v41 = vld [vmem:[%s1 + $0x28] sm:$0xf]
  %v42 = vld [vmem:[%s1 + $0x2c] sm:$0xf]
  %v43 = vld [vmem:[%s1 + $0x30] sm:$0xf]
  %v44 = vld [vmem:[%s1 + $0x34] sm:$0xf]
  %v45 = vld [vmem:[%s1 + $0x38] sm:$0xf]
  %v46 = vld [vmem:[%s1 + $0x3c] sm:$0xf]
  %v47 = vld [vmem:[%s2] sm:$0x1]
  %v49 = vlaneseq
  %v50 = vshrl.u32 %v49, 7
  %v51 = vsub.s32 0, %v50
  %v52 = vrot.slane %v47, %v51
  %v70 = vunpack.c.l.b16 %v15
  %v71 = vunpack.c.l.b16 %v16
  %v72 = vunpack.c.l.b16 %v17
  %v73 = vunpack.c.l.b16 %v18
  %v74 = vunpack.c.l.b16 %v19
  %v75 = vunpack.c.l.b16 %v20
  %v76 = vunpack.c.l.b16 %v21
  %v77 = vunpack.c.l.b16 %v22
  %v78 = vunpack.c.l.b16 %v23
  %v79 = vunpack.c.l.b16 %v24
  %v80 = vunpack.c.l.b16 %v25
  %v81 = vunpack.c.l.b16 %v26
  %v82 = vunpack.c.l.b16 %v27
  %v83 = vunpack.c.l.b16 %v28
  %v84 = vunpack.c.l.b16 %v29
  %v85 = vunpack.c.l.b16 %v30
  %v86 = vpack.c.b16 %v71, %v70
  %v87 = vpack.c.b16 %v73, %v72
  %v88 = vpack.c.b16 %v75, %v74
  %v89 = vpack.c.b16 %v77, %v76
  %v90 = vpack.c.b16 %v79, %v78
  %v91 = vpack.c.b16 %v81, %v80
  %v92 = vpack.c.b16 %v83, %v82
  %v93 = vpack.c.b16 %v85, %v84
  %v118 = vunpack.c.l.b16 %v31
  %v119 = vunpack.c.l.b16 %v32
  %v120 = vunpack.c.l.b16 %v33
  %v121 = vunpack.c.l.b16 %v34
  %v122 = vunpack.c.l.b16 %v35
  %v123 = vunpack.c.l.b16 %v36
  %v124 = vunpack.c.l.b16 %v37
  %v125 = vunpack.c.l.b16 %v38
  %v126 = vunpack.c.l.b16 %v39
  %v127 = vunpack.c.l.b16 %v40
  %v128 = vunpack.c.l.b16 %v41
  %v129 = vunpack.c.l.b16 %v42
  %v130 = vunpack.c.l.b16 %v43
  %v131 = vunpack.c.l.b16 %v44
  %v132 = vunpack.c.l.b16 %v45
  %v133 = vunpack.c.l.b16 %v46
  %v134 = vpack.c.b16 %v119, %v118
  %v135 = vpack.c.b16 %v121, %v120
  %v136 = vpack.c.b16 %v123, %v122
  %v137 = vpack.c.b16 %v125, %v124
  %v138 = vpack.c.b16 %v127, %v126
  %v139 = vpack.c.b16 %v129, %v128
  %v140 = vpack.c.b16 %v131, %v130
  %v141 = vpack.c.b16 %v133, %v132
  %150 = vmatprep.subr.bf16.mxu0 0
  %151 = vmatpush1.bf16.msra.mxu0 %v134
  %152 = vmatprep.subr.bf16.mxu0 0
  %153 = vmatpush1.bf16.msra.mxu0 %v135
  %154 = vmatprep.subr.bf16.mxu0 0
  %155 = vmatpush1.bf16.msra.mxu0 %v136
  %156 = vmatprep.subr.bf16.mxu0 0
  %157 = vmatpush1.bf16.msra.mxu0 %v137
  %158 = vmatprep.subr.bf16.mxu0 0
  %159 = vmatpush1.bf16.msra.mxu0 %v138
  %160 = vmatprep.subr.bf16.mxu0 0
  %161 = vmatpush1.bf16.msra.mxu0 %v139
  %162 = vmatprep.subr.bf16.mxu0 0
  %163 = vmatpush1.bf16.msra.mxu0 %v140
  %164 = vmatprep.subr.bf16.mxu0 0
  %165 = vmatpush1.bf16.msra.mxu0 %v141
  %166 = vmatprep.subr.bf16.mxu0 0
  %167 = vmatpush1.bf16.msra.mxu0 0
  %168 = vmatprep.subr.bf16.mxu0 0
  %169 = vmatpush1.bf16.msra.mxu0 0
  %170 = vmatprep.subr.bf16.mxu0 0
  %171 = vmatpush1.bf16.msra.mxu0 0
  %172 = vmatprep.subr.bf16.mxu0 0
  %173 = vmatpush1.bf16.msra.mxu0 0
  %174 = vmatprep.subr.bf16.mxu0 0
  %175 = vmatpush1.bf16.msra.mxu0 0
  %176 = vmatprep.subr.bf16.mxu0 0
  %177 = vmatpush1.bf16.msra.mxu0 0
  %178 = vmatprep.subr.bf16.mxu0 0
  %179 = vmatpush1.bf16.msra.mxu0 0
  %180 = vmatprep.subr.bf16.mxu0 0
  %181 = vmatpush1.bf16.msra.mxu0 0
  %182 = vmatprep.mubr.bf16.mxu0 0
  %183 = vmatmul.mubr.bf16.gmra.mrb[0].mxu0 %v86
  %v184 = vpop.f32.mrb[0].mxu0
  %v185 = vadd.f32 %v52, %v184
  %v186 = vpop.f32.mrb[0].mxu0
  %v187 = vpop.f32.mrb[0].mxu0
  %v188 = vadd.f32 %v52, %v187
  %v189 = vpop.f32.mrb[0].mxu0
  %190 = vmatprep.mubr.bf16.mxu0 0
  %191 = vmatmul.mubr.bf16.gmra.mrb[0].mxu0 %v87
  %v192 = vpop.f32.mrb[0].mxu0
  %v193 = vadd.f32 %v52, %v192
  %v194 = vpop.f32.mrb[0].mxu0
  %v195 = vpop.f32.mrb[0].mxu0
  %v196 = vadd.f32 %v52, %v195
  %v197 = vpop.f32.mrb[0].mxu0
  %198 = vmatprep.mubr.bf16.mxu0 0
  %199 = vmatmul.mubr.bf16.gmra.mrb[0].mxu0 %v88
  %v200 = vpop.f32.mrb[0].mxu0
  %v201 = vadd.f32 %v52, %v200
  %v202 = vpop.f32.mrb[0].mxu0
  %v203 = vpop.f32.mrb[0].mxu0
  %v204 = vadd.f32 %v52, %v203
  %v205 = vpop.f32.mrb[0].mxu0
  %206 = vmatprep.mubr.bf16.mxu0 0
  %207 = vmatmul.mubr.bf16.gmra.mrb[0].mxu0 %v89
  %v208 = vpop.f32.mrb[0].mxu0
  %v209 = vadd.f32 %v52, %v208
  %v210 = vpop.f32.mrb[0].mxu0
  %v211 = vpop.f32.mrb[0].mxu0
  %v212 = vadd.f32 %v52, %v211
  %v213 = vpop.f32.mrb[0].mxu0
  %214 = vmatprep.mubr.bf16.mxu0 0
  %215 = vmatmul.mubr.bf16.gmra.mrb[0].mxu0 %v90
  %v216 = vpop.f32.mrb[0].mxu0
  %v217 = vadd.f32 %v52, %v216
  %v218 = vpop.f32.mrb[0].mxu0
  %v219 = vpop.f32.mrb[0].mxu0
  %v220 = vadd.f32 %v52, %v219
  %v221 = vpop.f32.mrb[0].mxu0
  %222 = vmatprep.mubr.bf16.mxu0 0
  %223 = vmatmul.mubr.bf16.gmra.mrb[0].mxu0 %v91
  %v224 = vpop.f32.mrb[0].mxu0
  %v225 = vadd.f32 %v52, %v224
  %v226 = vpop.f32.mrb[0].mxu0
  %v227 = vpop.f32.mrb[0].mxu0
  %v228 = vadd.f32 %v52, %v227
  %v229 = vpop.f32.mrb[0].mxu0
  %230 = vmatprep.mubr.bf16.mxu0 0
  %231 = vmatmul.mubr.bf16.gmra.mrb[0].mxu0 %v92
  %v232 = vpop.f32.mrb[0].mxu0
  %v233 = vadd.f32 %v52, %v232
  %v234 = vpop.f32.mrb[0].mxu0
  %v235 = vpop.f32.mrb[0].mxu0
  %v236 = vadd.f32 %v52, %v235
  %v237 = vpop.f32.mrb[0].mxu0
  %238 = vmatprep.mubr.bf16.mxu0 0
  %239 = vmatmul.mubr.bf16.gmra.mrb[0].mxu0 %v93
  %v240 = vpop.f32.mrb[0].mxu0
  %v241 = vadd.f32 %v52, %v240
  %v242 = vpop.f32.mrb[0].mxu0
  %v243 = vpop.f32.mrb[0].mxu0
  %v244 = vadd.f32 %v52, %v243
  %v245 = vpop.f32.mrb[0].mxu0
  %246 = vdwg.mxu0
  %247 = vst [vmem:[%s3] sm:$0xff] %v185
  %248 = vst [vmem:[%s3 + $0x8] sm:$0xff] %v188
  %249 = vst [vmem:[%s3 + $0x10] sm:$0xff] %v193
  %250 = vst [vmem:[%s3 + $0x18] sm:$0xff] %v196
  %251 = vst [vmem:[%s3 + $0x20] sm:$0xff] %v201
  %252 = vst [vmem:[%s3 + $0x28] sm:$0xff] %v204
  %253 = vst [vmem:[%s3 + $0x30] sm:$0xff] %v209
  %254 = vst [vmem:[%s3 + $0x38] sm:$0xff] %v212
  %255 = vst [vmem:[%s3 + $0x40] sm:$0xff] %v217
  %256 = vst [vmem:[%s3 + $0x48] sm:$0xff] %v220
  %257 = vst [vmem:[%s3 + $0x50] sm:$0xff] %v225
  %258 = vst [vmem:[%s3 + $0x58] sm:$0xff] %v228
  %259 = vst [vmem:[%s3 + $0x60] sm:$0xff] %v233
  %260 = vst [vmem:[%s3 + $0x68] sm:$0xff] %v236
  %261 = vst [vmem:[%s3 + $0x70] sm:$0xff] %v241
  %262 = vst [vmem:[%s3 + $0x78] sm:$0xff] %v244
  // Predicated region
  $region14: #{model_forward.8} parent=0 // pred_check
    _
  $region15: #{model_forward.8} parent=0 // pred_check_branch
    %264 = sbr.rel (0) target = $region17
  $region16: #{model_forward.8} parent=0 // pred_region
    _
  $region17: #{model_forward.8} parent=0 // pred_fallthru
    _
  // Predicated region
  $region18: #{model_forward.8} parent=0 // pred_check
    _
  $region19: #{model_forward.8} parent=0 // pred_check_branch
    %266 = sbr.rel (0) target = $region21
  $region20: #{model_forward.8} parent=0 // pred_region
    _
  $region21: #{model_forward.8} parent=0 // pred_fallthru
    _

// kernel: model_forward.9
$region0: #{model_forward.9}
  #allocation0 [shape = 'u32[]', space=smem, size = 0x4, offset = 0x4, fixed_abs, tag = 'smem constant byte address 0x4 - core index']
  #allocation1 [shape = 'u32[144,128]{1,0:T(1,128)}', space=vmem, size = 0x12000, scoped, tag = 'internal scratch']
  %s0 = inlined_call_operand.vmem [shape: bf16[32,2048], index: 0, kind: input, shape index: {}]
  %s1 = inlined_call_operand.vmem [shape: bf16[2048,128], index: 1, kind: input, shape index: {}]
  %s2 = inlined_call_operand.vmem [shape: f32[1,128], index: 2, kind: input, shape index: {}]
  %s3 = inlined_call_operand.vmem [shape: f32[32,128], index: 3, kind: output, shape index: {}]
  %s4 = sld [smem:[#allocation0]]
  $region22: #{model_forward.9} parent=0
    _
  %s6 = ssub.s32 1, %s4
  %s7 = scalar_select 0, %s6, %s4
  // Predicated region
  $region2: #{model_forward.9} parent=0 // pred_check
    _
  $region3: #{model_forward.9} parent=0 // pred_check_branch
    %9 = sbr.rel (0) target = $region5
  $region4: #{model_forward.9} parent=0 // pred_region
    _
  $region5: #{model_forward.9} parent=0 // pred_fallthru
    _
  // Predicated region
  $region6: #{model_forward.9} parent=0 // pred_check
    _
  $region7: #{model_forward.9} parent=0 // pred_check_branch
    %11 = sbr.rel (0) target = $region9
  $region8: #{model_forward.9} parent=0 // pred_region
    _
  $region9: #{model_forward.9} parent=0 // pred_fallthru
    _
  // Predicated region
  $region10: #{model_forward.9} parent=0 // pred_check
    _
  $region11: #{model_forward.9} parent=0 // pred_check_branch
    %13 = sbr.rel (0) target = $region13
  $region12: #{model_forward.9} parent=0 // pred_region
    _
  $region13: #{model_forward.9} parent=0 // pred_fallthru
    _
  %v15 = vld [vmem:[%s0] sm:$0xff]
  %v16 = vld [vmem:[%s0 + $0x8] sm:$0xff]
  %v17 = vld [vmem:[%s0 + $0x10] sm:$0xff]
  %v18 = vld [vmem:[%s0 + $0x18] sm:$0xff]
  %v19 = vld [vmem:[%s0 + $0x20] sm:$0xff]
  %v20 = vld [vmem:[%s0 + $0x28] sm:$0xff]
  %v21 = vld [vmem:[%s0 + $0x30] sm:$0xff]
  %v22 = vld [vmem:[%s0 + $0x38] sm:$0xff]
  %v23 = vld [vmem:[%s0 + $0x40] sm:$0xff]
  %v24 = vld [vmem:[%s0 + $0x48] sm:$0xff]
  %v25 = vld [vmem:[%s0 + $0x50] sm:$0xff]
  %v26 = vld [vmem:[%s0 + $0x58] sm:$0xff]
  %v27 = vld [vmem:[%s0 + $0x60] sm:$0xff]
  %v28 = vld [vmem:[%s0 + $0x68] sm:$0xff]
  %v29 = vld [vmem:[%s0 + $0x70] sm:$0xff]
  %v30 = vld [vmem:[%s0 + $0x78] sm:$0xff]
  %v31 = vld [vmem:[%s0 + $0x80] sm:$0xff]
  %v32 = vld [vmem:[%s0 + $0x88] sm:$0xff]
  %v33 = vld [vmem:[%s0 + $0x90] sm:$0xff]
  %v34 = vld [vmem:[%s0 + $0x98] sm:$0xff]
  %v35 = vld [vmem:[%s0 + $0xa0] sm:$0xff]
  %v36 = vld [vmem:[%s0 + $0xa8] sm:$0xff]
  %v37 = vld [vmem:[%s0 + $0xb0] sm:$0xff]
  %v38 = vld [vmem:[%s0 + $0xb8] sm:$0xff]
  %v39 = vld [vmem:[%s0 + $0xc0] sm:$0xff]
  %v40 = vld [vmem:[%s0 + $0xc8] sm:$0xff]
  %v41 = vld [vmem:[%s0 + $0xd0] sm:$0xff]
  %v42 = vld [vmem:[%s0 + $0xd8] sm:$0xff]
  %v43 = vld [vmem:[%s0 + $0xe0] sm:$0xff]
  %v44 = vld [vmem:[%s0 + $0xe8] sm:$0xff]
  %v45 = vld [vmem:[%s0 + $0xf0] sm:$0xff]
  %v46 = vld [vmem:[%s0 + $0xf8] sm:$0xff]
  %v47 = vld [vmem:[%s1] sm:$0xf]
  %v48 = vld [vmem:[%s1 + $0x4] sm:$0xf]
  %v49 = vld [vmem:[%s1 + $0x8] sm:$0xf]
  %v50 = vld [vmem:[%s1 + $0xc] sm:$0xf]
  %v51 = vld [vmem:[%s1 + $0x10] sm:$0xf]
  %v52 = vld [vmem:[%s1 + $0x14] sm:$0xf]
  %v53 = vld [vmem:[%s1 + $0x18] sm:$0xf]
  %v54 = vld [vmem:[%s1 + $0x1c] sm:$0xf]
  %v55 = vld [vmem:[%s1 + $0x20] sm:$0xf]
  %v56 = vld [vmem:[%s1 + $0x24] sm:$0xf]
  %v57 = vld [vmem:[%s1 + $0x28] sm:$0xf]
  %v58 = vld [vmem:[%s1 + $0x2c] sm:$0xf]
  %v59 = vld [vmem:[%s1 + $0x30] sm:$0xf]
  %v60 = vld [vmem:[%s1 + $0x34] sm:$0xf]
  %v61 = vld [vmem:[%s1 + $0x38] sm:$0xf]
  %v62 = vld [vmem:[%s1 + $0x3c] sm:$0xf]
  %v63 = vld [vmem:[%s1 + $0x40] sm:$0xf]
  %v64 = vld [vmem:[%s1 + $0x44] sm:$0xf]
  %v65 = vld [vmem:[%s1 + $0x48] sm:$0xf]
  %v66 = vld [vmem:[%s1 + $0x4c] sm:$0xf]
  %v67 = vld [vmem:[%s1 + $0x50] sm:$0xf]
  %v68 = vld [vmem:[%s1 + $0x54] sm:$0xf]
  %v69 = vld [vmem:[%s1 + $0x58] sm:$0xf]
  %v70 = vld [vmem:[%s1 + $0x5c] sm:$0xf]
  %v71 = vld [vmem:[%s1 + $0x60] sm:$0xf]
  %v72 = vld [vmem:[%s1 + $0x64] sm:$0xf]
  %v73 = vld [vmem:[%s1 + $0x68] sm:$0xf]
  %v74 = vld [vmem:[%s1 + $0x6c] sm:$0xf]
  %v75 = vld [vmem:[%s1 + $0x70] sm:$0xf]
  %v76 = vld [vmem:[%s1 + $0x74] sm:$0xf]
  %v77 = vld [vmem:[%s1 + $0x78] sm:$0xf]
  %v78 = vld [vmem:[%s1 + $0x7c] sm:$0xf]
  %v79 = vld [vmem:[%s1 + $0x80] sm:$0xf]
  %v80 = vld [vmem:[%s1 + $0x84] sm:$0xf]
  %v81 = vld [vmem:[%s1 + $0x88] sm:$0xf]
  %v82 = vld [vmem:[%s1 + $0x8c] sm:$0xf]
  %v83 = vld [vmem:[%s1 + $0x90] sm:$0xf]
  %v84 = vld [vmem:[%s1 + $0x94] sm:$0xf]
  %v85 = vld [vmem:[%s1 + $0x98] sm:$0xf]
  %v86 = vld [vmem:[%s1 + $0x9c] sm:$0xf]
  %v87 = vld [vmem:[%s1 + $0xa0] sm:$0xf]
  %v88 = vld [vmem:[%s1 + $0xa4] sm:$0xf]
  %v89 = vld [vmem:[%s1 + $0xa8] sm:$0xf]
  %v90 = vld [vmem:[%s1 + $0xac] sm:$0xf]
  %v91 = vld [vmem:[%s1 + $0xb0] sm:$0xf]
  %v92 = vld [vmem:[%s1 + $0xb4] sm:$0xf]
  %v93 = vld [vmem:[%s1 + $0xb8] sm:$0xf]
  %v94 = vld [vmem:[%s1 + $0xbc] sm:$0xf]
  %v95 = vld [vmem:[%s1 + $0xc0] sm:$0xf]
  %v96 = vld [vmem:[%s1 + $0xc4] sm:$0xf]
  %v97 = vld [vmem:[%s1 + $0xc8] sm:$0xf]
  %v98 = vld [vmem:[%s1 + $0xcc] sm:$0xf]
  %v99 = vld [vmem:[%s1 + $0xd0] sm:$0xf]
  %v100 = vld [vmem:[%s1 + $0xd4] sm:$0xf]
  %v101 = vld [vmem:[%s1 + $0xd8] sm:$0xf]
  %v102 = vld [vmem:[%s1 + $0xdc] sm:$0xf]
  %v103 = vld [vmem:[%s1 + $0xe0] sm:$0xf]
  %v104 = vld [vmem:[%s1 + $0xe4] sm:$0xf]
  %v105 = vld [vmem:[%s1 + $0xe8] sm:$0xf]
  %v106 = vld [vmem:[%s1 + $0xec] sm:$0xf]
  %v107 = vld [vmem:[%s1 + $0xf0] sm:$0xf]
  %v108 = vld [vmem:[%s1 + $0xf4] sm:$0xf]
  %v109 = vld [vmem:[%s1 + $0xf8] sm:$0xf]
  %v110 = vld [vmem:[%s1 + $0xfc] sm:$0xf]
  %v111 = vld [vmem:[%s1 + $0x100] sm:$0xf]
  %v112 = vld [vmem:[%s1 + $0x104] sm:$0xf]
  %v113 = vld [vmem:[%s1 + $0x108] sm:$0xf]
  %v114 = vld [vmem:[%s1 + $0x10c] sm:$0xf]
  %v115 = vld [vmem:[%s1 + $0x110] sm:$0xf]
  %v116 = vld [vmem:[%s1 + $0x114] sm:$0xf]
  %v117 = vld [vmem:[%s1 + $0x118] sm:$0xf]
  %v118 = vld [vmem:[%s1 + $0x11c] sm:$0xf]
  %v119 = vld [vmem:[%s1 + $0x120] sm:$0xf]
  %v120 = vld [vmem:[%s1 + $0x124] sm:$0xf]
  %v121 = vld [vmem:[%s1 + $0x128] sm:$0xf]
  %v122 = vld [vmem:[%s1 + $0x12c] sm:$0xf]
  %v123 = vld [vmem:[%s1 + $0x130] sm:$0xf]
  %v124 = vld [vmem:[%s1 + $0x134] sm:$0xf]
  %v125 = vld [vmem:[%s1 + $0x138] sm:$0xf]
  %v126 = vld [vmem:[%s1 + $0x13c] sm:$0xf]
  %v127 = vld [vmem:[%s1 + $0x140] sm:$0xf]
  %v128 = vld [vmem:[%s1 + $0x144] sm:$0xf]
  %v129 = vld [vmem:[%s1 + $0x148] sm:$0xf]
  %v130 = vld [vmem:[%s1 + $0x14c] sm:$0xf]
  %v131 = vld [vmem:[%s1 + $0x150] sm:$0xf]
  %v132 = vld [vmem:[%s1 + $0x154] sm:$0xf]
  %v133 = vld [vmem:[%s1 + $0x158] sm:$0xf]
  %v134 = vld [vmem:[%s1 + $0x15c] sm:$0xf]
  %v135 = vld [vmem:[%s1 + $0x160] sm:$0xf]
  %v136 = vld [vmem:[%s1 + $0x164] sm:$0xf]
  %v137 = vld [vmem:[%s1 + $0x168] sm:$0xf]
  %v138 = vld [vmem:[%s1 + $0x16c] sm:$0xf]
  %v139 = vld [vmem:[%s1 + $0x170] sm:$0xf]
  %v140 = vld [vmem:[%s1 + $0x174] sm:$0xf]
  %v141 = vld [vmem:[%s1 + $0x178] sm:$0xf]
  %v142 = vld [vmem:[%s1 + $0x17c] sm:$0xf]
  %v143 = vld [vmem:[%s1 + $0x180] sm:$0xf]
  %v144 = vld [vmem:[%s1 + $0x184] sm:$0xf]
  %v145 = vld [vmem:[%s1 + $0x188] sm:$0xf]
  %v146 = vld [vmem:[%s1 + $0x18c] sm:$0xf]
  %v147 = vld [vmem:[%s1 + $0x190] sm:$0xf]
  %v148 = vld [vmem:[%s1 + $0x194] sm:$0xf]
  %v149 = vld [vmem:[%s1 + $0x198] sm:$0xf]
  %v150 = vld [vmem:[%s1 + $0x19c] sm:$0xf]
  %v151 = vld [vmem:[%s1 + $0x1a0] sm:$0xf]
  %v152 = vld [vmem:[%s1 + $0x1a4] sm:$0xf]
  %v153 = vld [vmem:[%s1 + $0x1a8] sm:$0xf]
  %v154 = vld [vmem:[%s1 + $0x1ac] sm:$0xf]
  %v155 = vld [vmem:[%s1 + $0x1b0] sm:$0xf]
  %v156 = vld [vmem:[%s1 + $0x1b4] sm:$0xf]
  %v157 = vld [vmem:[%s1 + $0x1b8] sm:$0xf]
  %v158 = vld [vmem:[%s1 + $0x1bc] sm:$0xf]
  %v159 = vld [vmem:[%s1 + $0x1c0] sm:$0xf]
  %v160 = vld [vmem:[%s1 + $0x1c4] sm:$0xf]
  %v161 = vld [vmem:[%s1 + $0x1c8] sm:$0xf]
  %v162 = vld [vmem:[%s1 + $0x1cc] sm:$0xf]
  %v163 = vld [vmem:[%s1 + $0x1d0] sm:$0xf]
  %v164 = vld [vmem:[%s1 + $0x1d4] sm:$0xf]
  %v165 = vld [vmem:[%s1 + $0x1d8] sm:$0xf]
  %v166 = vld [vmem:[%s1 + $0x1dc] sm:$0xf]
  %v167 = vld [vmem:[%s1 + $0x1e0] sm:$0xf]
  %v168 = vld [vmem:[%s1 + $0x1e4] sm:$0xf]
  %v169 = vld [vmem:[%s1 + $0x1e8] sm:$0xf]
  %v170 = vld [vmem:[%s1 + $0x1ec] sm:$0xf]
  %v171 = vld [vmem:[%s1 + $0x1f0] sm:$0xf]
  %v172 = vld [vmem:[%s1 + $0x1f4] sm:$0xf]
  %v173 = vld [vmem:[%s1 + $0x1f8] sm:$0xf]
  %v174 = vld [vmem:[%s1 + $0x1fc] sm:$0xf]
  %v175 = vld [vmem:[%s1 + $0x200] sm:$0xf]
  %v176 = vld [vmem:[%s1 + $0x204] sm:$0xf]
  %v177 = vld [vmem:[%s1 + $0x208] sm:$0xf]
  %v178 = vld [vmem:[%s1 + $0x20c] sm:$0xf]
  %v179 = vld [vmem:[%s1 + $0x210] sm:$0xf]
  %v180 = vld [vmem:[%s1 + $0x214] sm:$0xf]
  %v181 = vld [vmem:[%s1 + $0x218] sm:$0xf]
  %v182 = vld [vmem:[%s1 + $0x21c] sm:$0xf]
  %v183 = vld [vmem:[%s1 + $0x220] sm:$0xf]
  %v184 = vld [vmem:[%s1 + $0x224] sm:$0xf]
  %v185 = vld [vmem:[%s1 + $0x228] sm:$0xf]
  %v186 = vld [vmem:[%s1 + $0x22c] sm:$0xf]
  %v187 = vld [vmem:[%s1 + $0x230] sm:$0xf]
  %v188 = vld [vmem:[%s1 + $0x234] sm:$0xf]
  %v189 = vld [vmem:[%s1 + $0x238] sm:$0xf]
  %v190 = vld [vmem:[%s1 + $0x23c] sm:$0xf]
  %v191 = vld [vmem:[%s1 + $0x240] sm:$0xf]
  %v192 = vld [vmem:[%s1 + $0x244] sm:$0xf]
  %v193 = vld [vmem:[%s1 + $0x248] sm:$0xf]
  %v194 = vld [vmem:[%s1 + $0x24c] sm:$0xf]
  %v195 = vld [vmem:[%s1 + $0x250] sm:$0xf]
  %v196 = vld [vmem:[%s1 + $0x254] sm:$0xf]
  %v197 = vld [vmem:[%s1 + $0x258] sm:$0xf]
  %v198 = vld [vmem:[%s1 + $0x25c] sm:$0xf]
  %v199 = vld [vmem:[%s1 + $0x260] sm:$0xf]
  %v200 = vld [vmem:[%s1 + $0x264] sm:$0xf]
  %v201 = vld [vmem:[%s1 + $0x268] sm:$0xf]
  %v202 = vld [vmem:[%s1 + $0x26c] sm:$0xf]
  %v203 = vld [vmem:[%s1 + $0x270] sm:$0xf]
  %v204 = vld [vmem:[%s1 + $0x274] sm:$0xf]
  %v205 = vld [vmem:[%s1 + $0x278] sm:$0xf]
  %v206 = vld [vmem:[%s1 + $0x27c] sm:$0xf]
  %v207 = vld [vmem:[%s1 + $0x280] sm:$0xf]
  %v208 = vld [vmem:[%s1 + $0x284] sm:$0xf]
  %v209 = vld [vmem:[%s1 + $0x288] sm:$0xf]
  %v210 = vld [vmem:[%s1 + $0x28c] sm:$0xf]
  %v211 = vld [vmem:[%s1 + $0x290] sm:$0xf]
  %v212 = vld [vmem:[%s1 + $0x294] sm:$0xf]
  %v213 = vld [vmem:[%s1 + $0x298] sm:$0xf]
  %v214 = vld [vmem:[%s1 + $0x29c] sm:$0xf]
  %v215 = vld [vmem:[%s1 + $0x2a0] sm:$0xf]
  %v216 = vld [vmem:[%s1 + $0x2a4] sm:$0xf]
  %v217 = vld [vmem:[%s1 + $0x2a8] sm:$0xf]
  %v218 = vld [vmem:[%s1 + $0x2ac] sm:$0xf]
  %v219 = vld [vmem:[%s1 + $0x2b0] sm:$0xf]
  %v220 = vld [vmem:[%s1 + $0x2b4] sm:$0xf]
  %v221 = vld [vmem:[%s1 + $0x2b8] sm:$0xf]
  %v222 = vld [vmem:[%s1 + $0x2bc] sm:$0xf]
  %v223 = vld [vmem:[%s1 + $0x2c0] sm:$0xf]
  %v224 = vld [vmem:[%s1 + $0x2c4] sm:$0xf]
  %v225 = vld [vmem:[%s1 + $0x2c8] sm:$0xf]
  %v226 = vld [vmem:[%s1 + $0x2cc] sm:$0xf]
  %v227 = vld [vmem:[%s1 + $0x2d0] sm:$0xf]
  %v228 = vld [vmem:[%s1 + $0x2d4] sm:$0xf]
  %v229 = vld [vmem:[%s1 + $0x2d8] sm:$0xf]
  %v230 = vld [vmem:[%s1 + $0x2dc] sm:$0xf]
  %v231 = vld [vmem:[%s1 + $0x2e0] sm:$0xf]
  %v232 = vld [vmem:[%s1 + $0x2e4] sm:$0xf]
  %v233 = vld [vmem:[%s1 + $0x2e8] sm:$0xf]
  %v234 = vld [vmem:[%s1 + $0x2ec] sm:$0xf]
  %v235 = vld [vmem:[%s1 + $0x2f0] sm:$0xf]
  %v236 = vld [vmem:[%s1 + $0x2f4] sm:$0xf]
  %v237 = vld [vmem:[%s1 + $0x2f8] sm:$0xf]
  %v238 = vld [vmem:[%s1 + $0x2fc] sm:$0xf]
  %v239 = vld [vmem:[%s1 + $0x300] sm:$0xf]
  %v240 = vld [vmem:[%s1 + $0x304] sm:$0xf]
  %v241 = vld [vmem:[%s1 + $0x308] sm:$0xf]
  %v242 = vld [vmem:[%s1 + $0x30c] sm:$0xf]
  %v243 = vld [vmem:[%s1 + $0x310] sm:$0xf]
  %v244 = vld [vmem:[%s1 + $0x314] sm:$0xf]
  %v245 = vld [vmem:[%s1 + $0x318] sm:$0xf]
  %v246 = vld [vmem:[%s1 + $0x31c] sm:$0xf]
  %v247 = vld [vmem:[%s1 + $0x320] sm:$0xf]
  %v248 = vld [vmem:[%s1 + $0x324] sm:$0xf]
  %v249 = vld [vmem:[%s1 + $0x328] sm:$0xf]
  %v250 = vld [vmem:[%s1 + $0x32c] sm:$0xf]
  %v251 = vld [vmem:[%s1 + $0x330] sm:$0xf]
  %v252 = vld [vmem:[%s1 + $0x334] sm:$0xf]
  %v253 = vld [vmem:[%s1 + $0x338] sm:$0xf]
  %v254 = vld [vmem:[%s1 + $0x33c] sm:$0xf]
  %v255 = vld [vmem:[%s1 + $0x340] sm:$0xf]
  %v256 = vld [vmem:[%s1 + $0x344] sm:$0xf]
  %v257 = vld [vmem:[%s1 + $0x348] sm:$0xf]
  %v258 = vld [vmem:[%s1 + $0x34c] sm:$0xf]
  %v259 = vld [vmem:[%s1 + $0x350] sm:$0xf]
  %v260 = vld [vmem:[%s1 + $0x354] sm:$0xf]
  %v261 = vld [vmem:[%s1 + $0x358] sm:$0xf]
  %v262 = vld [vmem:[%s1 + $0x35c] sm:$0xf]
  %v263 = vld [vmem:[%s1 + $0x360] sm:$0xf]
  %v264 = vld [vmem:[%s1 + $0x364] sm:$0xf]
  %v265 = vld [vmem:[%s1 + $0x368] sm:$0xf]
  %v266 = vld [vmem:[%s1 + $0x36c] sm:$0xf]
  %v267 = vld [vmem:[%s1 + $0x370] sm:$0xf]
  %v268 = vld [vmem:[%s1 + $0x374] sm:$0xf]
  %v269 = vld [vmem:[%s1 + $0x378] sm:$0xf]
  %v270 = vld [vmem:[%s1 + $0x37c] sm:$0xf]
  %v271 = vld [vmem:[%s1 + $0x380] sm:$0xf]
  %v272 = vld [vmem:[%s1 + $0x384] sm:$0xf]
  %v273 = vld [vmem:[%s1 + $0x388] sm:$0xf]
  %v274 = vld [vmem:[%s1 + $0x38c] sm:$0xf]
  %v275 = vld [vmem:[%s1 + $0x390] sm:$0xf]
  %v276 = vld [vmem:[%s1 + $0x394] sm:$0xf]
  %v277 = vld [vmem:[%s1 + $0x398] sm:$0xf]
  %v278 = vld [vmem:[%s1 + $0x39c] sm:$0xf]
  %v279 = vld [vmem:[%s1 + $0x3a0] sm:$0xf]
  %v280 = vld [vmem:[%s1 + $0x3a4] sm:$0xf]
  %v281 = vld [vmem:[%s1 + $0x3a8] sm:$0xf]
  %v282 = vld [vmem:[%s1 + $0x3ac] sm:$0xf]
  %v283 = vld [vmem:[%s1 + $0x3b0] sm:$0xf]
  %v284 = vld [vmem:[%s1 + $0x3b4] sm:$0xf]
  %v285 = vld [vmem:[%s1 + $0x3b8] sm:$0xf]
  %v286 = vld [vmem:[%s1 + $0x3bc] sm:$0xf]
  %v287 = vld [vmem:[%s1 + $0x3c0] sm:$0xf]
  %v288 = vld [vmem:[%s1 + $0x3c4] sm:$0xf]
  %v289 = vld [vmem:[%s1 + $0x3c8] sm:$0xf]
  %v290 = vld [vmem:[%s1 + $0x3cc] sm:$0xf]
  %v291 = vld [vmem:[%s1 + $0x3d0] sm:$0xf]
  %v292 = vld [vmem:[%s1 + $0x3d4] sm:$0xf]
  %v293 = vld [vmem:[%s1 + $0x3d8] sm:$0xf]
  %v294 = vld [vmem:[%s1 + $0x3dc] sm:$0xf]
  %v295 = vld [vmem:[%s1 + $0x3e0] sm:$0xf]
  %v296 = vld [vmem:[%s1 + $0x3e4] sm:$0xf]
  %v297 = vld [vmem:[%s1 + $0x3e8] sm:$0xf]
  %v298 = vld [vmem:[%s1 + $0x3ec] sm:$0xf]
  %v299 = vld [vmem:[%s1 + $0x3f0] sm:$0xf]
  %v300 = vld [vmem:[%s1 + $0x3f4] sm:$0xf]
  %v301 = vld [vmem:[%s1 + $0x3f8] sm:$0xf]
  %v302 = vld [vmem:[%s1 + $0x3fc] sm:$0xf]
  %v303 = vld [vmem:[%s2] sm:$0x1]
  %v305 = vlaneseq
  %v306 = vshrl.u32 %v305, 7
  %v307 = vsub.s32 0, %v306
  %v308 = vrot.slane %v303, %v307
  %v342 = vunpack.c.l.b16 %v15
  %v343 = vunpack.c.h.b16 %v15
  %v344 = vunpack.c.l.b16 %v16
  %v345 = vunpack.c.h.b16 %v16
  %v346 = vunpack.c.l.b16 %v17
  %v347 = vunpack.c.h.b16 %v17
  %v348 = vunpack.c.l.b16 %v18
  %v349 = vunpack.c.h.b16 %v18
  %v350 = vunpack.c.l.b16 %v19
  %v351 = vunpack.c.h.b16 %v19
  %v352 = vunpack.c.l.b16 %v20
  %v353 = vunpack.c.h.b16 %v20
  %v354 = vunpack.c.l.b16 %v21
  %v355 = vunpack.c.h.b16 %v21
  %v356 = vunpack.c.l.b16 %v22
  %v357 = vunpack.c.h.b16 %v22
  %v358 = vunpack.c.l.b16 %v23
  %v359 = vunpack.c.h.b16 %v23
  %v360 = vunpack.c.l.b16 %v24
  %v361 = vunpack.c.h.b16 %v24
  %v362 = vunpack.c.l.b16 %v25
  %v363 = vunpack.c.h.b16 %v25
  %v364 = vunpack.c.l.b16 %v26
  %v365 = vunpack.c.h.b16 %v26
  %v366 = vunpack.c.l.b16 %v27
  %v367 = vunpack.c.h.b16 %v27
  %v368 = vunpack.c.l.b16 %v28
  %v369 = vunpack.c.h.b16 %v28
  %v370 = vunpack.c.l.b16 %v29
  %v371 = vunpack.c.h.b16 %v29
  %v372 = vunpack.c.l.b16 %v30
  %v373 = vunpack.c.h.b16 %v30
  %v374 = vunpack.c.l.b16 %v31
  %v375 = vunpack.c.h.b16 %v31
  %v376 = vunpack.c.l.b16 %v32
  %v377 = vunpack.c.h.b16 %v32
  %v378 = vunpack.c.l.b16 %v33
  %v379 = vunpack.c.h.b16 %v33
  %v380 = vunpack.c.l.b16 %v34
  %v381 = vunpack.c.h.b16 %v34
  %v382 = vunpack.c.l.b16 %v35
  %v383 = vunpack.c.h.b16 %v35
  %v384 = vunpack.c.l.b16 %v36
  %v385 = vunpack.c.h.b16 %v36
  %v386 = vunpack.c.l.b16 %v37
  %v387 = vunpack.c.h.b16 %v37
  %v388 = vunpack.c.l.b16 %v38
  %v389 = vunpack.c.h.b16 %v38
  %v390 = vunpack.c.l.b16 %v39
  %v391 = vunpack.c.h.b16 %v39
  %v392 = vunpack.c.l.b16 %v40
  %v393 = vunpack.c.h.b16 %v40
  %v394 = vunpack.c.l.b16 %v41
  %v395 = vunpack.c.h.b16 %v41
  %v396 = vunpack.c.l.b16 %v42
  %v397 = vunpack.c.h.b16 %v42
  %v398 = vunpack.c.l.b16 %v43
  %v399 = vunpack.c.h.b16 %v43
  %v400 = vunpack.c.l.b16 %v44
  %v401 = vunpack.c.h.b16 %v44
  %v402 = vunpack.c.l.b16 %v45
  %v403 = vunpack.c.h.b16 %v45
  %v404 = vunpack.c.l.b16 %v46
  %v405 = vunpack.c.h.b16 %v46
  %v406 = vpack.c.b16 %v358, %v342
  %v407 = vpack.c.b16 %v359, %v343
  %v408 = vpack.c.b16 %v360, %v344
  %v409 = vpack.c.b16 %v361, %v345
  %v410 = vpack.c.b16 %v362, %v346
  %v411 = vpack.c.b16 %v363, %v347
  %v412 = vpack.c.b16 %v364, %v348
  %v413 = vpack.c.b16 %v365, %v349
  %v414 = vpack.c.b16 %v366, %v350
  %v415 = vpack.c.b16 %v367, %v351
  %v416 = vpack.c.b16 %v368, %v352
  %v417 = vpack.c.b16 %v369, %v353
  %v418 = vpack.c.b16 %v370, %v354
  %v419 = vpack.c.b16 %v371, %v355
  %v420 = vpack.c.b16 %v372, %v356
  %v421 = vpack.c.b16 %v373, %v357
  %v422 = vpack.c.b16 %v390, %v374
  %v423 = vpack.c.b16 %v391, %v375
  %v424 = vpack.c.b16 %v392, %v376
  %v425 = vpack.c.b16 %v393, %v377
  %v426 = vpack.c.b16 %v394, %v378
  %v427 = vpack.c.b16 %v395, %v379
  %v428 = vpack.c.b16 %v396, %v380
  %v429 = vpack.c.b16 %v397, %v381
  %v430 = vpack.c.b16 %v398, %v382
  %v431 = vpack.c.b16 %v399, %v383
  %v432 = vpack.c.b16 %v400, %v384
  %v433 = vpack.c.b16 %v401, %v385
  %v434 = vpack.c.b16 %v402, %v386
  %v435 = vpack.c.b16 %v403, %v387
  %v436 = vpack.c.b16 %v404, %v388
  %v437 = vpack.c.b16 %v405, %v389
  %v726 = vunpack.c.l.b16 %v47
  %v727 = vunpack.c.l.b16 %v48
  %v728 = vunpack.c.l.b16 %v49
  %v729 = vunpack.c.l.b16 %v50
  %v730 = vunpack.c.l.b16 %v51
  %v731 = vunpack.c.l.b16 %v52
  %v732 = vunpack.c.l.b16 %v53
  %v733 = vunpack.c.l.b16 %v54
  %v734 = vunpack.c.l.b16 %v55
  %v735 = vunpack.c.l.b16 %v56
  %v736 = vunpack.c.l.b16 %v57
  %v737 = vunpack.c.l.b16 %v58
  %v738 = vunpack.c.l.b16 %v59
  %v739 = vunpack.c.l.b16 %v60
  %v740 = vunpack.c.l.b16 %v61
  %v741 = vunpack.c.l.b16 %v62
  %v742 = vunpack.c.l.b16 %v63
  %v743 = vunpack.c.l.b16 %v64
  %v744 = vunpack.c.l.b16 %v65
  %v745 = vunpack.c.l.b16 %v66
  %v746 = vunpack.c.l.b16 %v67
  %v747 = vunpack.c.l.b16 %v68
  %v748 = vunpack.c.l.b16 %v69
  %v749 = vunpack.c.l.b16 %v70
  %v750 = vunpack.c.l.b16 %v71
  %v751 = vunpack.c.l.b16 %v72
  %v752 = vunpack.c.l.b16 %v73
  %v753 = vunpack.c.l.b16 %v74
  %v754 = vunpack.c.l.b16 %v75
  %v755 = vunpack.c.l.b16 %v76
  %v756 = vunpack.c.l.b16 %v77
  %v757 = vunpack.c.l.b16 %v78
  %v758 = vunpack.c.l.b16 %v79
  %v759 = vunpack.c.l.b16 %v80
  %v760 = vunpack.c.l.b16 %v81
  %v761 = vunpack.c.l.b16 %v82
  %v762 = vunpack.c.l.b16 %v83
  %v763 = vunpack.c.l.b16 %v84
  %v764 = vunpack.c.l.b16 %v85
  %v765 = vunpack.c.l.b16 %v86
  %v766 = vunpack.c.l.b16 %v87
  %v767 = vunpack.c.l.b16 %v88
  %v768 = vunpack.c.l.b16 %v89
  %v769 = vunpack.c.l.b16 %v90
  %v770 = vunpack.c.l.b16 %v91
  %v771 = vunpack.c.l.b16 %v92
  %v772 = vunpack.c.l.b16 %v93
  %v773 = vunpack.c.l.b16 %v94
  %v774 = vunpack.c.l.b16 %v95
  %v775 = vunpack.c.l.b16 %v96
  %v776 = vunpack.c.l.b16 %v97
  %v777 = vunpack.c.l.b16 %v98
  %v778 = vunpack.c.l.b16 %v99
  %v779 = vunpack.c.l.b16 %v100
  %v780 = vunpack.c.l.b16 %v101
  %v781 = vunpack.c.l.b16 %v102
  %v782 = vunpack.c.l.b16 %v103
  %v783 = vunpack.c.l.b16 %v104
  %v784 = vunpack.c.l.b16 %v105
  %v785 = vunpack.c.l.b16 %v106
  %v786 = vunpack.c.l.b16 %v107
  %v787 = vunpack.c.l.b16 %v108
  %v788 = vunpack.c.l.b16 %v109
  %v789 = vunpack.c.l.b16 %v110
  %v790 = vunpack.c.l.b16 %v111
  %v791 = vunpack.c.l.b16 %v112
  %v792 = vunpack.c.l.b16 %v113
  %v793 = vunpack.c.l.b16 %v114
  %v794 = vunpack.c.l.b16 %v115
  %v795 = vunpack.c.l.b16 %v116
  %v796 = vunpack.c.l.b16 %v117
  %v797 = vunpack.c.l.b16 %v118
  %v798 = vunpack.c.l.b16 %v119
  %v799 = vunpack.c.l.b16 %v120
  %v800 = vunpack.c.l.b16 %v121
  %v801 = vunpack.c.l.b16 %v122
  %v802 = vunpack.c.l.b16 %v123
  %v803 = vunpack.c.l.b16 %v124
  %v804 = vunpack.c.l.b16 %v125
  %v805 = vunpack.c.l.b16 %v126
  %v806 = vunpack.c.l.b16 %v127
  %v807 = vunpack.c.l.b16 %v128
  %v808 = vunpack.c.l.b16 %v129
  %v809 = vunpack.c.l.b16 %v130
  %v810 = vunpack.c.l.b16 %v131
  %v811 = vunpack.c.l.b16 %v132
  %v812 = vunpack.c.l.b16 %v133
  %v813 = vunpack.c.l.b16 %v134
  %v814 = vunpack.c.l.b16 %v135
  %v815 = vunpack.c.l.b16 %v136
  %v816 = vunpack.c.l.b16 %v137
  %v817 = vunpack.c.l.b16 %v138
  %v818 = vunpack.c.l.b16 %v139
  %v819 = vunpack.c.l.b16 %v140
  %v820 = vunpack.c.l.b16 %v141
  %v821 = vunpack.c.l.b16 %v142
  %v822 = vunpack.c.l.b16 %v143
  %v823 = vunpack.c.l.b16 %v144
  %v824 = vunpack.c.l.b16 %v145
  %v825 = vunpack.c.l.b16 %v146
  %v826 = vunpack.c.l.b16 %v147
  %v827 = vunpack.c.l.b16 %v148
  %v828 = vunpack.c.l.b16 %v149
  %v829 = vunpack.c.l.b16 %v150
  %v830 = vunpack.c.l.b16 %v151
  %v831 = vunpack.c.l.b16 %v152
  %v832 = vunpack.c.l.b16 %v153
  %v833 = vunpack.c.l.b16 %v154
  %v834 = vunpack.c.l.b16 %v155
  %v835 = vunpack.c.l.b16 %v156
  %v836 = vunpack.c.l.b16 %v157
  %v837 = vunpack.c.l.b16 %v158
  %v838 = vunpack.c.l.b16 %v159
  %v839 = vunpack.c.l.b16 %v160
  %v840 = vunpack.c.l.b16 %v161
  %v841 = vunpack.c.l.b16 %v162
  %v842 = vunpack.c.l.b16 %v163
  %v843 = vunpack.c.l.b16 %v164
  %v844 = vunpack.c.l.b16 %v165
  %v845 = vunpack.c.l.b16 %v166
  %v846 = vunpack.c.l.b16 %v167
  %v847 = vunpack.c.l.b16 %v168
  %v848 = vunpack.c.l.b16 %v169
  %v849 = vunpack.c.l.b16 %v170
  %v850 = vunpack.c.l.b16 %v171
  %v851 = vunpack.c.l.b16 %v172
  %v852 = vunpack.c.l.b16 %v173
  %v853 = vunpack.c.l.b16 %v174
  %v854 = vunpack.c.l.b16 %v175
  %v855 = vunpack.c.l.b16 %v176
  %v856 = vunpack.c.l.b16 %v177
  %v857 = vunpack.c.l.b16 %v178
  %v858 = vunpack.c.l.b16 %v179
  %v859 = vunpack.c.l.b16 %v180
  %v860 = vunpack.c.l.b16 %v181
  %v861 = vunpack.c.l.b16 %v182
  %v862 = vunpack.c.l.b16 %v183
  %v863 = vunpack.c.l.b16 %v184
  %v864 = vunpack.c.l.b16 %v185
  %v865 = vunpack.c.l.b16 %v186
  %v866 = vunpack.c.l.b16 %v187
  %v867 = vunpack.c.l.b16 %v188
  %v868 = vunpack.c.l.b16 %v189
  %v869 = vunpack.c.l.b16 %v190
  %v870 = vunpack.c.l.b16 %v191
  %v871 = vunpack.c.l.b16 %v192
  %v872 = vunpack.c.l.b16 %v193
  %v873 = vunpack.c.l.b16 %v194
  %v874 = vunpack.c.l.b16 %v195
  %v875 = vunpack.c.l.b16 %v196
  %v876 = vunpack.c.l.b16 %v197
  %v877 = vunpack.c.l.b16 %v198
  %v878 = vunpack.c.l.b16 %v199
  %v879 = vunpack.c.l.b16 %v200
  %v880 = vunpack.c.l.b16 %v201
  %v881 = vunpack.c.l.b16 %v202
  %v882 = vunpack.c.l.b16 %v203
  %v883 = vunpack.c.l.b16 %v204
  %v884 = vunpack.c.l.b16 %v205
  %v885 = vunpack.c.l.b16 %v206
  %v886 = vunpack.c.l.b16 %v207
  %v887 = vunpack.c.l.b16 %v208
  %v888 = vunpack.c.l.b16 %v209
  %v889 = vunpack.c.l.b16 %v210
  %v890 = vunpack.c.l.b16 %v211
  %v891 = vunpack.c.l.b16 %v212
  %v892 = vunpack.c.l.b16 %v213
  %v893 = vunpack.c.l.b16 %v214
  %v894 = vunpack.c.l.b16 %v215
  %v895 = vunpack.c.l.b16 %v216
  %v896 = vunpack.c.l.b16 %v217
  %v897 = vunpack.c.l.b16 %v218
  %v898 = vunpack.c.l.b16 %v219
  %v899 = vunpack.c.l.b16 %v220
  %v900 = vunpack.c.l.b16 %v221
  %v901 = vunpack.c.l.b16 %v222
  %v902 = vunpack.c.l.b16 %v223
  %v903 = vunpack.c.l.b16 %v224
  %v904 = vunpack.c.l.b16 %v225
  %v905 = vunpack.c.l.b16 %v226
  %v906 = vunpack.c.l.b16 %v227
  %v907 = vunpack.c.l.b16 %v228
  %v908 = vunpack.c.l.b16 %v229
  %v909 = vunpack.c.l.b16 %v230
  %v910 = vunpack.c.l.b16 %v231
  %v911 = vunpack.c.l.b16 %v232
  %v912 = vunpack.c.l.b16 %v233
  %v913 = vunpack.c.l.b16 %v234
  %v914 = vunpack.c.l.b16 %v235
  %v915 = vunpack.c.l.b16 %v236
  %v916 = vunpack.c.l.b16 %v237
  %v917 = vunpack.c.l.b16 %v238
  %v918 = vunpack.c.l.b16 %v239
  %v919 = vunpack.c.l.b16 %v240
  %v920 = vunpack.c.l.b16 %v241
  %v921 = vunpack.c.l.b16 %v242
  %v922 = vunpack.c.l.b16 %v243
  %v923 = vunpack.c.l.b16 %v244
  %v924 = vunpack.c.l.b16 %v245
  %v925 = vunpack.c.l.b16 %v246
  %v926 = vunpack.c.l.b16 %v247
  %v927 = vunpack.c.l.b16 %v248
  %v928 = vunpack.c.l.b16 %v249
  %v929 = vunpack.c.l.b16 %v250
  %v930 = vunpack.c.l.b16 %v251
  %v931 = vunpack.c.l.b16 %v252
  %v932 = vunpack.c.l.b16 %v253
  %v933 = vunpack.c.l.b16 %v254
  %v934 = vunpack.c.l.b16 %v255
  %v935 = vunpack.c.l.b16 %v256
  %v936 = vunpack.c.l.b16 %v257
  %v937 = vunpack.c.l.b16 %v258
  %v938 = vunpack.c.l.b16 %v259
  %v939 = vunpack.c.l.b16 %v260
  %v940 = vunpack.c.l.b16 %v261
  %v941 = vunpack.c.l.b16 %v262
  %v942 = vunpack.c.l.b16 %v263
  %v943 = vunpack.c.l.b16 %v264
  %v944 = vunpack.c.l.b16 %v265
  %v945 = vunpack.c.l.b16 %v266
  %v946 = vunpack.c.l.b16 %v267
  %v947 = vunpack.c.l.b16 %v268
  %v948 = vunpack.c.l.b16 %v269
  %v949 = vunpack.c.l.b16 %v270
  %v950 = vunpack.c.l.b16 %v271
  %v951 = vunpack.c.l.b16 %v272
  %v952 = vunpack.c.l.b16 %v273
  %v953 = vunpack.c.l.b16 %v274
  %v954 = vunpack.c.l.b16 %v275
  %v955 = vunpack.c.l.b16 %v276
  %v956 = vunpack.c.l.b16 %v277
  %v957 = vunpack.c.l.b16 %v278
  %v958 = vunpack.c.l.b16 %v279
  %v959 = vunpack.c.l.b16 %v280
  %v960 = vunpack.c.l.b16 %v281
  %v961 = vunpack.c.l.b16 %v282
  %v962 = vunpack.c.l.b16 %v283
  %v963 = vunpack.c.l.b16 %v284
  %v964 = vunpack.c.l.b16 %v285
  %v965 = vunpack.c.l.b16 %v286
  %v966 = vunpack.c.l.b16 %v287
  %v967 = vunpack.c.l.b16 %v288
  %v968 = vunpack.c.l.b16 %v289
  %v969 = vunpack.c.l.b16 %v290
  %v970 = vunpack.c.l.b16 %v291
  %v971 = vunpack.c.l.b16 %v292
  %v972 = vunpack.c.l.b16 %v293
  %v973 = vunpack.c.l.b16 %v294
  %v974 = vunpack.c.l.b16 %v295
  %v975 = vunpack.c.l.b16 %v296
  %v976 = vunpack.c.l.b16 %v297
  %v977 = vunpack.c.l.b16 %v298
  %v978 = vunpack.c.l.b16 %v299
  %v979 = vunpack.c.l.b16 %v300
  %v980 = vunpack.c.l.b16 %v301
  %v981 = vunpack.c.l.b16 %v302
  %v982 = vpack.c.b16 %v727, %v726
  %v983 = vpack.c.b16 %v729, %v728
  %v984 = vpack.c.b16 %v731, %v730
  %v985 = vpack.c.b16 %v733, %v732
  %v986 = vpack.c.b16 %v735, %v734
  %v987 = vpack.c.b16 %v737, %v736
  %v988 = vpack.c.b16 %v739, %v738
  %v989 = vpack.c.b16 %v741, %v740
  %v990 = vpack.c.b16 %v743, %v742
  %v991 = vpack.c.b16 %v745, %v744
  %v992 = vpack.c.b16 %v747, %v746
  %v993 = vpack.c.b16 %v749, %v748
  %v994 = vpack.c.b16 %v751, %v750
  %v995 = vpack.c.b16 %v753, %v752
  %v996 = vpack.c.b16 %v755, %v754
  %v997 = vpack.c.b16 %v757, %v756
  %v998 = vpack.c.b16 %v759, %v758
  %v999 = vpack.c.b16 %v761, %v760
  %v1000 = vpack.c.b16 %v763, %v762
  %v1001 = vpack.c.b16 %v765, %v764
  %v1002 = vpack.c.b16 %v767, %v766
  %v1003 = vpack.c.b16 %v769, %v768
  %v1004 = vpack.c.b16 %v771, %v770
  %v1005 = vpack.c.b16 %v773, %v772
  %v1006 = vpack.c.b16 %v775, %v774
  %v1007 = vpack.c.b16 %v777, %v776
  %v1008 = vpack.c.b16 %v779, %v778
  %v1009 = vpack.c.b16 %v781, %v780
  %v1010 = vpack.c.b16 %v783, %v782
  %v1011 = vpack.c.b16 %v785, %v784
  %v1012 = vpack.c.b16 %v787, %v786
  %v1013 = vpack.c.b16 %v789, %v788
  %v1014 = vpack.c.b16 %v791, %v790
  %v1015 = vpack.c.b16 %v793, %v792
  %v1016 = vpack.c.b16 %v795, %v794
  %v1017 = vpack.c.b16 %v797, %v796
  %v1018 = vpack.c.b16 %v799, %v798
  %v1019 = vpack.c.b16 %v801, %v800
  %v1020 = vpack.c.b16 %v803, %v802
  %v1021 = vpack.c.b16 %v805, %v804
  %v1022 = vpack.c.b16 %v807, %v806
  %v1023 = vpack.c.b16 %v809, %v808
  %v1024 = vpack.c.b16 %v811, %v810
  %v1025 = vpack.c.b16 %v813, %v812
  %v1026 = vpack.c.b16 %v815, %v814
  %v1027 = vpack.c.b16 %v817, %v816
  %v1028 = vpack.c.b16 %v819, %v818
  %v1029 = vpack.c.b16 %v821, %v820
  %v1030 = vpack.c.b16 %v823, %v822
  %v1031 = vpack.c.b16 %v825, %v824
  %v1032 = vpack.c.b16 %v827, %v826
  %v1033 = vpack.c.b16 %v829, %v828
  %v1034 = vpack.c.b16 %v831, %v830
  %v1035 = vpack.c.b16 %v833, %v832
  %v1036 = vpack.c.b16 %v835, %v834
  %v1037 = vpack.c.b16 %v837, %v836
  %v1038 = vpack.c.b16 %v839, %v838
  %v1039 = vpack.c.b16 %v841, %v840
  %v1040 = vpack.c.b16 %v843, %v842
  %v1041 = vpack.c.b16 %v845, %v844
  %v1042 = vpack.c.b16 %v847, %v846
  %v1043 = vpack.c.b16 %v849, %v848
  %v1044 = vpack.c.b16 %v851, %v850
  %v1045 = vpack.c.b16 %v853, %v852
  %v1046 = vpack.c.b16 %v855, %v854
  %v1047 = vpack.c.b16 %v857, %v856
  %v1048 = vpack.c.b16 %v859, %v858
  %v1049 = vpack.c.b16 %v861, %v860
  %v1050 = vpack.c.b16 %v863, %v862
  %v1051 = vpack.c.b16 %v865, %v864
  %v1052 = vpack.c.b16 %v867, %v866
  %v1053 = vpack.c.b16 %v869, %v868
  %v1054 = vpack.c.b16 %v871, %v870
  %v1055 = vpack.c.b16 %v873, %v872
  %v1056 = vpack.c.b16 %v875, %v874
  %v1057 = vpack.c.b16 %v877, %v876
  %v1058 = vpack.c.b16 %v879, %v878
  %v1059 = vpack.c.b16 %v881, %v880
  %v1060 = vpack.c.b16 %v883, %v882
  %v1061 = vpack.c.b16 %v885, %v884
  %v1062 = vpack.c.b16 %v887, %v886
  %v1063 = vpack.c.b16 %v889, %v888
  %v1064 = vpack.c.b16 %v891, %v890
  %v1065 = vpack.c.b16 %v893, %v892
  %v1066 = vpack.c.b16 %v895, %v894
  %v1067 = vpack.c.b16 %v897, %v896
  %v1068 = vpack.c.b16 %v899, %v898
  %v1069 = vpack.c.b16 %v901, %v900
  %v1070 = vpack.c.b16 %v903, %v902
  %v1071 = vpack.c.b16 %v905, %v904
  %v1072 = vpack.c.b16 %v907, %v906
  %v1073 = vpack.c.b16 %v909, %v908
  %v1074 = vpack.c.b16 %v911, %v910
  %v1075 = vpack.c.b16 %v913, %v912
  %v1076 = vpack.c.b16 %v915, %v914
  %v1077 = vpack.c.b16 %v917, %v916
  %v1078 = vpack.c.b16 %v919, %v918
  %v1079 = vpack.c.b16 %v921, %v920
  %v1080 = vpack.c.b16 %v923, %v922
  %v1081 = vpack.c.b16 %v925, %v924
  %v1082 = vpack.c.b16 %v927, %v926
  %v1083 = vpack.c.b16 %v929, %v928
  %v1084 = vpack.c.b16 %v931, %v930
  %v1085 = vpack.c.b16 %v933, %v932
  %v1086 = vpack.c.b16 %v935, %v934
  %v1087 = vpack.c.b16 %v937, %v936
  %v1088 = vpack.c.b16 %v939, %v938
  %v1089 = vpack.c.b16 %v941, %v940
  %v1090 = vpack.c.b16 %v943, %v942
  %v1091 = vpack.c.b16 %v945, %v944
  %v1092 = vpack.c.b16 %v947, %v946
  %v1093 = vpack.c.b16 %v949, %v948
  %v1094 = vpack.c.b16 %v951, %v950
  %v1095 = vpack.c.b16 %v953, %v952
  %v1096 = vpack.c.b16 %v955, %v954
  %v1097 = vpack.c.b16 %v957, %v956
  %v1098 = vpack.c.b16 %v959, %v958
  %v1099 = vpack.c.b16 %v961, %v960
  %v1100 = vpack.c.b16 %v963, %v962
  %v1101 = vpack.c.b16 %v965, %v964
  %v1102 = vpack.c.b16 %v967, %v966
  %v1103 = vpack.c.b16 %v969, %v968
  %v1104 = vpack.c.b16 %v971, %v970
  %v1105 = vpack.c.b16 %v973, %v972
  %v1106 = vpack.c.b16 %v975, %v974
  %v1107 = vpack.c.b16 %v977, %v976
  %v1108 = vpack.c.b16 %v979, %v978
  %v1109 = vpack.c.b16 %v981, %v980
  %1238 = vmatprep.subr.bf16.mxu0 0
  %1239 = vmatpush1.bf16.msra.mxu0 %v982
  %1240 = vmatprep.subr.bf16.mxu0 0
  %1241 = vmatpush1.bf16.msra.mxu0 %v983
  %1242 = vmatprep.subr.bf16.mxu0 0
  %1243 = vmatpush1.bf16.msra.mxu0 %v984
  %1244 = vmatprep.subr.bf16.mxu0 0
  %1245 = vmatpush1.bf16.msra.mxu0 %v985
  %1246 = vmatprep.subr.bf16.mxu0 0
  %1247 = vmatpush1.bf16.msra.mxu0 %v986
  %1248 = vmatprep.subr.bf16.mxu0 0
  %1249 = vmatpush1.bf16.msra.mxu0 %v987
  %1250 = vmatprep.subr.bf16.mxu0 0
  %1251 = vmatpush1.bf16.msra.mxu0 %v988
  %1252 = vmatprep.subr.bf16.mxu0 0
  %1253 = vmatpush1.bf16.msra.mxu0 %v989
  %1254 = vmatprep.subr.bf16.mxu0 0
  %1255 = vmatpush1.bf16.msra.mxu0 %v990
  %1256 = vmatprep.subr.bf16.mxu0 0
  %1257 = vmatpush1.bf16.msra.mxu0 %v991
  %1258 = vmatprep.subr.bf16.mxu0 0
  %1259 = vmatpush1.bf16.msra.mxu0 %v992
  %1260 = vmatprep.subr.bf16.mxu0 0
  %1261 = vmatpush1.bf16.msra.mxu0 %v993
  %1262 = vmatprep.subr.bf16.mxu0 0
  %1263 = vmatpush1.bf16.msra.mxu0 %v994
  %1264 = vmatprep.subr.bf16.mxu0 0
  %1265 = vmatpush1.bf16.msra.mxu0 %v995
  %1266 = vmatprep.subr.bf16.mxu0 0
  %1267 = vmatpush1.bf16.msra.mxu0 %v996
  %1268 = vmatprep.subr.bf16.mxu0 0
  %1269 = vmatpush1.bf16.msra.mxu0 %v997
  %1270 = vmatprep.mubr.bf16.mxu0 %v407
  %1271 = vmatmul.mubr.bf16.gmra.mrb[0].mxu0 %v406
  %v1272 = vpop.f32.mrb[0].mxu0
  %v1273 = vadd.f32 %v308, %v1272
  %v1274 = vpop.f32.mrb[0].mxu0
  %v1275 = vpop.f32.mrb[0].mxu0
  %v1276 = vadd.f32 %v308, %v1275
  %v1277 = vpop.f32.mrb[0].mxu0
  %1278 = vmatprep.mubr.bf16.mxu0 %v423
  %1279 = vmatmul.mubr.bf16.gmra.mrb[0].mxu0 %v422
  %v1280 = vpop.f32.mrb[0].mxu0
  %v1281 = vadd.f32 %v308, %v1280
  %v1282 = vpop.f32.mrb[0].mxu0
  %v1283 = vpop.f32.mrb[0].mxu0
  %v1284 = vadd.f32 %v308, %v1283
  %v1285 = vpop.f32.mrb[0].mxu0
  %1286 = vdwg.mxu0
  %1287 = vmatprep.subr.bf16.mxu0 0
  %1288 = vmatpush1.bf16.msra.mxu0 %v998
  %1289 = vmatprep.subr.bf16.mxu0 0
  %1290 = vmatpush1.bf16.msra.mxu0 %v999
  %1291 = vmatprep.subr.bf16.mxu0 0
  %1292 = vmatpush1.bf16.msra.mxu0 %v1000
  %1293 = vmatprep.subr.bf16.mxu0 0
  %1294 = vmatpush1.bf16.msra.mxu0 %v1001
  %1295 = vmatprep.subr.bf16.mxu0 0
  %1296 = vmatpush1.bf16.msra.mxu0 %v1002
  %1297 = vmatprep.subr.bf16.mxu0 0
  %1298 = vmatpush1.bf16.msra.mxu0 %v1003
  %1299 = vmatprep.subr.bf16.mxu0 0
  %1300 = vmatpush1.bf16.msra.mxu0 %v1004
  %1301 = vmatprep.subr.bf16.mxu0 0
  %1302 = vmatpush1.bf16.msra.mxu0 %v1005
  %1303 = vmatprep.subr.bf16.mxu0 0
  %1304 = vmatpush1.bf16.msra.mxu0 %v1006
  %1305 = vmatprep.subr.bf16.mxu0 0
  %1306 = vmatpush1.bf16.msra.mxu0 %v1007
  %1307 = vmatprep.subr.bf16.mxu0 0
  %1308 = vmatpush1.bf16.msra.mxu0 %v1008
  %1309 = vmatprep.subr.bf16.mxu0 0
  %1310 = vmatpush1.bf16.msra.mxu0 %v1009
  %1311 = vmatprep.subr.bf16.mxu0 0
  %1312 = vmatpush1.bf16.msra.mxu0 %v1010
  %1313 = vmatprep.subr.bf16.mxu0 0
  %1314 = vmatpush1.bf16.msra.mxu0 %v1011
  %1315 = vmatprep.subr.bf16.mxu0 0
  %1316 = vmatpush1.bf16.msra.mxu0 %v1012
  %1317 = vmatprep.subr.bf16.mxu0 0
  %1318 = vmatpush1.bf16.msra.mxu0 %v1013
  %1319 = vmatprep.mubr.bf16.mxu0 %v409
  %1320 = vmatmul.mubr.bf16.gmra.mrb[0].mxu0 %v408
  %v1321 = vpop.f32.mrb[0].mxu0
  %v1322 = vadd.f32 %v1273, %v1321
  %v1323 = vpop.f32.mrb[0].mxu0
  %v1324 = vpop.f32.mrb[0].mxu0
  %v1325 = vadd.f32 %v1276, %v1324
  %v1326 = vpop.f32.mrb[0].mxu0
  %1327 = vmatprep.mubr.bf16.mxu0 %v425
  %1328 = vmatmul.mubr.bf16.gmra.mrb[0].mxu0 %v424
  %v1329 = vpop.f32.mrb[0].mxu0
  %v1330 = vadd.f32 %v1281, %v1329
  %v1331 = vpop.f32.mrb[0].mxu0
  %v1332 = vpop.f32.mrb[0].mxu0
  %v1333 = vadd.f32 %v1284, %v1332
  %v1334 = vpop.f32.mrb[0].mxu0
  %1335 = vdwg.mxu0
  %1336 = vmatprep.subr.bf16.mxu0 0
  %1337 = vmatpush1.bf16.msra.mxu0 %v1014
  %1338 = vmatprep.subr.bf16.mxu0 0
  %1339 = vmatpush1.bf16.msra.mxu0 %v1015
  %1340 = vmatprep.subr.bf16.mxu0 0
  %1341 = vmatpush1.bf16.msra.mxu0 %v1016
  %1342 = vmatprep.subr.bf16.mxu0 0
  %1343 = vmatpush1.bf16.msra.mxu0 %v1017
  %1344 = vmatprep.subr.bf16.mxu0 0
  %1345 = vmatpush1.bf16.msra.mxu0 %v1018
  %1346 = vmatprep.subr.bf16.mxu0 0
  %1347 = vmatpush1.bf16.msra.mxu0 %v1019
  %1348 = vmatprep.subr.bf16.mxu0 0
  %1349 = vmatpush1.bf16.msra.mxu0 %v1020
  %1350 = vmatprep.subr.bf16.mxu0 0
  %1351 = vmatpush1.bf16.msra.mxu0 %v1021
  %1352 = vmatprep.subr.bf16.mxu0 0
  %1353 = vmatpush1.bf16.msra.mxu0 %v1022
  %1354 = vmatprep.subr.bf16.mxu0 0
  %1355 = vmatpush1.bf16.msra.mxu0 %v1023
  %1356 = vmatprep.subr.bf16.mxu0 0
  %1357 = vmatpush1.bf16.msra.mxu0 %v1024
  %1358 = vmatprep.subr.bf16.mxu0 0
  %1359 = vmatpush1.bf16.msra.mxu0 %v1025
  %1360 = vmatprep.subr.bf16.mxu0 0
  %1361 = vmatpush1.bf16.msra.mxu0 %v1026
  %1362 = vmatprep.subr.bf16.mxu0 0
  %1363 = vmatpush1.bf16.msra.mxu0 %v1027
  %1364 = vmatprep.subr.bf16.mxu0 0
  %1365 = vmatpush1.bf16.msra.mxu0 %v1028
  %1366 = vmatprep.subr.bf16.mxu0 0
  %1367 = vmatpush1.bf16.msra.mxu0 %v1029
  %1368 = vmatprep.mubr.bf16.mxu0 %v411
  %1369 = vmatmul.mubr.bf16.gmra.mrb[0].mxu0 %v410
  %v1370 = vpop.f32.mrb[0].mxu0
  %v1371 = vadd.f32 %v1322, %v1370
  %v1372 = vpop.f32.mrb[0].mxu0
  %v1373 = vpop.f32.mrb[0].mxu0
  %v1374 = vadd.f32 %v1325, %v1373
  %v1375 = vpop.f32.mrb[0].mxu0
  %1376 = vmatprep.mubr.bf16.mxu0 %v427
  %1377 = vmatmul.mubr.bf16.gmra.mrb[0].mxu0 %v426
  %v1378 = vpop.f32.mrb[0].mxu0
  %v1379 = vadd.f32 %v1330, %v1378
  %v1380 = vpop.f32.mrb[0].mxu0
  %v1381 = vpop.f32.mrb[0].mxu0
  %v1382 = vadd.f32 %v1333, %v1381
  %v1383 = vpop.f32.mrb[0].mxu0
  %1384 = vdwg.mxu0
  %1385 = vmatprep.subr.bf16.mxu0 0
  %1386 = vmatpush1.bf16.msra.mxu0 %v1030
  %1387 = vmatprep.subr.bf16.mxu0 0
  %1388 = vmatpush1.bf16.msra.mxu0 %v1031
  %1389 = vmatprep.subr.bf16.mxu0 0
  %1390 = vmatpush1.bf16.msra.mxu0 %v1032
  %1391 = vmatprep.subr.bf16.mxu0 0
  %1392 = vmatpush1.bf16.msra.mxu0 %v1033
  %1393 = vmatprep.subr.bf16.mxu0 0
  %1394 = vmatpush1.bf16.msra.mxu0 %v1034
  %1395 = vmatprep.subr.bf16.mxu0 0
  %1396 = vmatpush1.bf16.msra.mxu0 %v1035
  %1397 = vmatprep.subr.bf16.mxu0 0
  %1398 = vmatpush1.bf16.msra.mxu0 %v1036
  %1399 = vmatprep.subr.bf16.mxu0 0
  %1400 = vmatpush1.bf16.msra.mxu0 %v1037
  %1401 = vmatprep.subr.bf16.mxu0 0
  %1402 = vmatpush1.bf16.msra.mxu0 %v1038
  %1403 = vmatprep.subr.bf16.mxu0 0
  %1404 = vmatpush1.bf16.msra.mxu0 %v1039
  %1405 = vmatprep.subr.bf16.mxu0 0
  %1406 = vmatpush1.bf16.msra.mxu0 %v1040
  %1407 = vmatprep.subr.bf16.mxu0 0
  %1408 = vmatpush1.bf16.msra.mxu0 %v1041
  %1409 = vmatprep.subr.bf16.mxu0 0
  %1410 = vmatpush1.bf16.msra.mxu0 %v1042
  %1411 = vmatprep.subr.bf16.mxu0 0
  %1412 = vmatpush1.bf16.msra.mxu0 %v1043
  %1413 = vmatprep.subr.bf16.mxu0 0
  %1414 = vmatpush1.bf16.msra.mxu0 %v1044
  %1415 = vmatprep.subr.bf16.mxu0 0
  %1416 = vmatpush1.bf16.msra.mxu0 %v1045
  %1417 = vmatprep.mubr.bf16.mxu0 %v413
  %1418 = vmatmul.mubr.bf16.gmra.mrb[0].mxu0 %v412
  %v1419 = vpop.f32.mrb[0].mxu0
  %v1420 = vadd.f32 %v1371, %v1419
  %v1421 = vpop.f32.mrb[0].mxu0
  %v1422 = vpop.f32.mrb[0].mxu0
  %v1423 = vadd.f32 %v1374, %v1422
  %v1424 = vpop.f32.mrb[0].mxu0
  %1425 = vmatprep.mubr.bf16.mxu0 %v429
  %1426 = vmatmul.mubr.bf16.gmra.mrb[0].mxu0 %v428
  %v1427 = vpop.f32.mrb[0].mxu0
  %v1428 = vadd.f32 %v1379, %v1427
  %v1429 = vpop.f32.mrb[0].mxu0
  %v1430 = vpop.f32.mrb[0].mxu0
  %v1431 = vadd.f32 %v1382, %v1430
  %v1432 = vpop.f32.mrb[0].mxu0
  %1433 = vdwg.mxu0
  %1434 = vmatprep.subr.bf16.mxu0 0
  %1435 = vmatpush1.bf16.msra.mxu0 %v1046
  %1436 = vmatprep.subr.bf16.mxu0 0
  %1437 = vmatpush1.bf16.msra.mxu0 %v1047
  %1438 = vmatprep.subr.bf16.mxu0 0
  %1439 = vmatpush1.bf16.msra.mxu0 %v1048
  %1440 = vmatprep.subr.bf16.mxu0 0
  %1441 = vmatpush1.bf16.msra.mxu0 %v1049
  %1442 = vmatprep.subr.bf16.mxu0 0
  %1443 = vmatpush1.bf16.msra.mxu0 %v1050
  %1444 = vmatprep.subr.bf16.mxu0 0
  %1445 = vmatpush1.bf16.msra.mxu0 %v1051
  %1446 = vmatprep.subr.bf16.mxu0 0
  %1447 = vmatpush1.bf16.msra.mxu0 %v1052
  %1448 = vmatprep.subr.bf16.mxu0 0
  %1449 = vmatpush1.bf16.msra.mxu0 %v1053
  %1450 = vmatprep.subr.bf16.mxu0 0
  %1451 = vmatpush1.bf16.msra.mxu0 %v1054
  %1452 = vmatprep.subr.bf16.mxu0 0
  %1453 = vmatpush1.bf16.msra.mxu0 %v1055
  %1454 = vmatprep.subr.bf16.mxu0 0
  %1455 = vmatpush1.bf16.msra.mxu0 %v1056
  %1456 = vmatprep.subr.bf16.mxu0 0
  %1457 = vmatpush1.bf16.msra.mxu0 %v1057
  %1458 = vmatprep.subr.bf16.mxu0 0
  %1459 = vmatpush1.bf16.msra.mxu0 %v1058
  %1460 = vmatprep.subr.bf16.mxu0 0
  %1461 = vmatpush1.bf16.msra.mxu0 %v1059
  %1462 = vmatprep.subr.bf16.mxu0 0
  %1463 = vmatpush1.bf16.msra.mxu0 %v1060
  %1464 = vmatprep.subr.bf16.mxu0 0
  %1465 = vmatpush1.bf16.msra.mxu0 %v1061
  %1466 = vmatprep.mubr.bf16.mxu0 %v415
  %1467 = vmatmul.mubr.bf16.gmra.mrb[0].mxu0 %v414
  %v1468 = vpop.f32.mrb[0].mxu0
  %v1469 = vadd.f32 %v1420, %v1468
  %v1470 = vpop.f32.mrb[0].mxu0
  %v1471 = vpop.f32.mrb[0].mxu0
  %v1472 = vadd.f32 %v1423, %v1471
  %v1473 = vpop.f32.mrb[0].mxu0
  %1474 = vmatprep.mubr.bf16.mxu0 %v431
  %1475 = vmatmul.mubr.bf16.gmra.mrb[0].mxu0 %v430
  %v1476 = vpop.f32.mrb[0].mxu0
  %v1477 = vadd.f32 %v1428, %v1476
  %v1478 = vpop.f32.mrb[0].mxu0
  %v1479 = vpop.f32.mrb[0].mxu0
  %v1480 = vadd.f32 %v1431, %v1479
  %v1481 = vpop.f32.mrb[0].mxu0
  %1482 = vdwg.mxu0
  %1483 = vmatprep.subr.bf16.mxu0 0
  %1484 = vmatpush1.bf16.msra.mxu0 %v1062
  %1485 = vmatprep.subr.bf16.mxu0 0
  %1486 = vmatpush1.bf16.msra.mxu0 %v1063
  %1487 = vmatprep.subr.bf16.mxu0 0
  %1488 = vmatpush1.bf16.msra.mxu0 %v1064
  %1489 = vmatprep.subr.bf16.mxu0 0
  %1490 = vmatpush1.bf16.msra.mxu0 %v1065
  %1491 = vmatprep.subr.bf16.mxu0 0
  %1492 = vmatpush1.bf16.msra.mxu0 %v1066
  %1493 = vmatprep.subr.bf16.mxu0 0
  %1494 = vmatpush1.bf16.msra.mxu0 %v1067
  %1495 = vmatprep.subr.bf16.mxu0 0
  %1496 = vmatpush1.bf16.msra.mxu0 %v1068
  %1497 = vmatprep.subr.bf16.mxu0 0
  %1498 = vmatpush1.bf16.msra.mxu0 %v1069
  %1499 = vmatprep.subr.bf16.mxu0 0
  %1500 = vmatpush1.bf16.msra.mxu0 %v1070
  %1501 = vmatprep.subr.bf16.mxu0 0
  %1502 = vmatpush1.bf16.msra.mxu0 %v1071
  %1503 = vmatprep.subr.bf16.mxu0 0
  %1504 = vmatpush1.bf16.msra.mxu0 %v1072
  %1505 = vmatprep.subr.bf16.mxu0 0
  %1506 = vmatpush1.bf16.msra.mxu0 %v1073
  %1507 = vmatprep.subr.bf16.mxu0 0
  %1508 = vmatpush1.bf16.msra.mxu0 %v1074
  %1509 = vmatprep.subr.bf16.mxu0 0
  %1510 = vmatpush1.bf16.msra.mxu0 %v1075
  %1511 = vmatprep.subr.bf16.mxu0 0
  %1512 = vmatpush1.bf16.msra.mxu0 %v1076
  %1513 = vmatprep.subr.bf16.mxu0 0
  %1514 = vmatpush1.bf16.msra.mxu0 %v1077
  %1515 = vmatprep.mubr.bf16.mxu0 %v417
  %1516 = vmatmul.mubr.bf16.gmra.mrb[0].mxu0 %v416
  %v1517 = vpop.f32.mrb[0].mxu0
  %v1518 = vadd.f32 %v1469, %v1517
  %v1519 = vpop.f32.mrb[0].mxu0
  %v1520 = vpop.f32.mrb[0].mxu0
  %v1521 = vadd.f32 %v1472, %v1520
  %v1522 = vpop.f32.mrb[0].mxu0
  %1523 = vmatprep.mubr.bf16.mxu0 %v433
  %1524 = vmatmul.mubr.bf16.gmra.mrb[0].mxu0 %v432
  %v1525 = vpop.f32.mrb[0].mxu0
  %v1526 = vadd.f32 %v1477, %v1525
  %v1527 = vpop.f32.mrb[0].mxu0
  %v1528 = vpop.f32.mrb[0].mxu0
  %v1529 = vadd.f32 %v1480, %v1528
  %v1530 = vpop.f32.mrb[0].mxu0
  %1531 = vdwg.mxu0
  %1532 = vmatprep.subr.bf16.mxu0 0
  %1533 = vmatpush1.bf16.msra.mxu0 %v1078
  %1534 = vmatprep.subr.bf16.mxu0 0
  %1535 = vmatpush1.bf16.msra.mxu0 %v1079
  %1536 = vmatprep.subr.bf16.mxu0 0
  %1537 = vmatpush1.bf16.msra.mxu0 %v1080
  %1538 = vmatprep.subr.bf16.mxu0 0
  %1539 = vmatpush1.bf16.msra.mxu0 %v1081
  %1540 = vmatprep.subr.bf16.mxu0 0
  %1541 = vmatpush1.bf16.msra.mxu0 %v1082
  %1542 = vmatprep.subr.bf16.mxu0 0
  %1543 = vmatpush1.bf16.msra.mxu0 %v1083
  %1544 = vmatprep.subr.bf16.mxu0 0
  %1545 = vmatpush1.bf16.msra.mxu0 %v1084
  %1546 = vmatprep.subr.bf16.mxu0 0
  %1547 = vmatpush1.bf16.msra.mxu0 %v1085
  %1548 = vmatprep.subr.bf16.mxu0 0
  %1549 = vmatpush1.bf16.msra.mxu0 %v1086
  %1550 = vmatprep.subr.bf16.mxu0 0
  %1551 = vmatpush1.bf16.msra.mxu0 %v1087
  %1552 = vmatprep.subr.bf16.mxu0 0
  %1553 = vmatpush1.bf16.msra.mxu0 %v1088
  %1554 = vmatprep.subr.bf16.mxu0 0
  %1555 = vmatpush1.bf16.msra.mxu0 %v1089
  %1556 = vmatprep.subr.bf16.mxu0 0
  %1557 = vmatpush1.bf16.msra.mxu0 %v1090
  %1558 = vmatprep.subr.bf16.mxu0 0
  %1559 = vmatpush1.bf16.msra.mxu0 %v1091
  %1560 = vmatprep.subr.bf16.mxu0 0
  %1561 = vmatpush1.bf16.msra.mxu0 %v1092
  %1562 = vmatprep.subr.bf16.mxu0 0
  %1563 = vmatpush1.bf16.msra.mxu0 %v1093
  %1564 = vmatprep.mubr.bf16.mxu0 %v419
  %1565 = vmatmul.mubr.bf16.gmra.mrb[0].mxu0 %v418
  %v1566 = vpop.f32.mrb[0].mxu0
  %v1567 = vadd.f32 %v1518, %v1566
  %v1568 = vpop.f32.mrb[0].mxu0
  %v1569 = vpop.f32.mrb[0].mxu0
  %v1570 = vadd.f32 %v1521, %v1569
  %v1571 = vpop.f32.mrb[0].mxu0
  %1572 = vmatprep.mubr.bf16.mxu0 %v435
  %1573 = vmatmul.mubr.bf16.gmra.mrb[0].mxu0 %v434
  %v1574 = vpop.f32.mrb[0].mxu0
  %v1575 = vadd.f32 %v1526, %v1574
  %v1576 = vpop.f32.mrb[0].mxu0
  %v1577 = vpop.f32.mrb[0].mxu0
  %v1578 = vadd.f32 %v1529, %v1577
  %v1579 = vpop.f32.mrb[0].mxu0
  %1580 = vdwg.mxu0
  %1581 = vmatprep.subr.bf16.mxu0 0
  %1582 = vmatpush1.bf16.msra.mxu0 %v1094
  %1583 = vmatprep.subr.bf16.mxu0 0
  %1584 = vmatpush1.bf16.msra.mxu0 %v1095
  %1585 = vmatprep.subr.bf16.mxu0 0
  %1586 = vmatpush1.bf16.msra.mxu0 %v1096
  %1587 = vmatprep.subr.bf16.mxu0 0
  %1588 = vmatpush1.bf16.msra.mxu0 %v1097
  %1589 = vmatprep.subr.bf16.mxu0 0
  %1590 = vmatpush1.bf16.msra.mxu0 %v1098
  %1591 = vmatprep.subr.bf16.mxu0 0
  %1592 = vmatpush1.bf16.msra.mxu0 %v1099
  %1593 = vmatprep.subr.bf16.mxu0 0
  %1594 = vmatpush1.bf16.msra.mxu0 %v1100
  %1595 = vmatprep.subr.bf16.mxu0 0
  %1596 = vmatpush1.bf16.msra.mxu0 %v1101
  %1597 = vmatprep.subr.bf16.mxu0 0
  %1598 = vmatpush1.bf16.msra.mxu0 %v1102
  %1599 = vmatprep.subr.bf16.mxu0 0
  %1600 = vmatpush1.bf16.msra.mxu0 %v1103
  %1601 = vmatprep.subr.bf16.mxu0 0
  %1602 = vmatpush1.bf16.msra.mxu0 %v1104
  %1603 = vmatprep.subr.bf16.mxu0 0
  %1604 = vmatpush1.bf16.msra.mxu0 %v1105
  %1605 = vmatprep.subr.bf16.mxu0 0
  %1606 = vmatpush1.bf16.msra.mxu0 %v1106
  %1607 = vmatprep.subr.bf16.mxu0 0
  %1608 = vmatpush1.bf16.msra.mxu0 %v1107
  %1609 = vmatprep.subr.bf16.mxu0 0
  %1610 = vmatpush1.bf16.msra.mxu0 %v1108
  %1611 = vmatprep.subr.bf16.mxu0 0
  %1612 = vmatpush1.bf16.msra.mxu0 %v1109
  %1613 = vmatprep.mubr.bf16.mxu0 %v421
  %1614 = vmatmul.mubr.bf16.gmra.mrb[0].mxu0 %v420
  %v1615 = vpop.f32.mrb[0].mxu0
  %v1616 = vadd.f32 %v1567, %v1615
  %v1617 = vpop.f32.mrb[0].mxu0
  %v1618 = vpop.f32.mrb[0].mxu0
  %v1619 = vadd.f32 %v1570, %v1618
  %v1620 = vpop.f32.mrb[0].mxu0
  %1621 = vmatprep.mubr.bf16.mxu0 %v437
  %1622 = vmatmul.mubr.bf16.gmra.mrb[0].mxu0 %v436
  %v1623 = vpop.f32.mrb[0].mxu0
  %v1624 = vadd.f32 %v1575, %v1623
  %v1625 = vpop.f32.mrb[0].mxu0
  %v1626 = vpop.f32.mrb[0].mxu0
  %v1627 = vadd.f32 %v1578, %v1626
  %v1628 = vpop.f32.mrb[0].mxu0
  %1629 = vdwg.mxu0
  %v1630 = vmax.f32 %v1616, 0.0
  %v1631 = vmax.f32 %v1619, 0.0
  %v1632 = vmax.f32 %v1624, 0.0
  %v1633 = vmax.f32 %v1627, 0.0
  %1634 = vst [vmem:[%s3] sm:$0xff] %v1630
  %1635 = vst [vmem:[%s3 + $0x8] sm:$0xff] %v1631
  %1636 = vst [vmem:[%s3 + $0x10] sm:$0xff] %v1632
  %1637 = vst [vmem:[%s3 + $0x18] sm:$0xff] %v1633
  // Predicated region
  $region14: #{model_forward.9} parent=0 // pred_check
    _
  $region15: #{model_forward.9} parent=0 // pred_check_branch
    %1639 = sbr.rel (0) target = $region17
  $region16: #{model_forward.9} parent=0 // pred_region
    _
  $region17: #{model_forward.9} parent=0 // pred_fallthru
    _
  // Predicated region
  $region18: #{model_forward.9} parent=0 // pred_check
    _
  $region19: #{model_forward.9} parent=0 // pred_check_branch
    %1641 = sbr.rel (0) target = $region21
  $region20: #{model_forward.9} parent=0 // pred_region
    _
  $region21: #{model_forward.9} parent=0 // pred_fallthru
    _

// kernel: model_forward.10
$region0: #{model_forward.10}
  #allocation0 [shape = 'u32[]', space=smem, size = 0x4, offset = 0x4, fixed_abs, tag = 'smem constant byte address 0x4 - core index']
  #allocation1 [shape = 'u32[144,128]{1,0:T(1,128)}', space=vmem, size = 0x12000, scoped, tag = 'internal scratch']
  %s0 = inlined_call_operand.vmem [shape: bf16[32,1152], index: 0, kind: input, shape index: {}]
  %s1 = inlined_call_operand.vmem [shape: f32[32,128], index: 1, kind: input, shape index: {}]
  %s2 = inlined_call_operand.vmem [shape: bf16[1152,128], index: 2, kind: input, shape index: {}]
  %s3 = inlined_call_operand.vmem [shape: f32[1,128], index: 3, kind: input, shape index: {}]
  %s4 = inlined_call_operand.vmem [shape: bf16[128,128], index: 4, kind: input, shape index: {}]
  %s5 = inlined_call_operand.vmem [shape: f32[1,128], index: 5, kind: input, shape index: {}]
  %s6 = inlined_call_operand.vmem [shape: f32[32,128], index: 6, kind: output, shape index: {}]
  %s7 = sld [smem:[#allocation0]]
  $region34: #{model_forward.10} parent=0
    _
  %s9 = ssub.s32 1, %s7
  %s10 = scalar_select 0, %s9, %s7
  // Predicated region
  $region2: #{model_forward.10} parent=0 // pred_check
    _
  $region3: #{model_forward.10} parent=0 // pred_check_branch
    %12 = sbr.rel (0) target = $region5
  $region4: #{model_forward.10} parent=0 // pred_region
    _
  $region5: #{model_forward.10} parent=0 // pred_fallthru
    _
  // Predicated region
  $region6: #{model_forward.10} parent=0 // pred_check
    _
  $region7: #{model_forward.10} parent=0 // pred_check_branch
    %14 = sbr.rel (0) target = $region9
  $region8: #{model_forward.10} parent=0 // pred_region
    _
  $region9: #{model_forward.10} parent=0 // pred_fallthru
    _
  // Predicated region
  $region10: #{model_forward.10} parent=0 // pred_check
    _
  $region11: #{model_forward.10} parent=0 // pred_check_branch
    %16 = sbr.rel (0) target = $region13
  $region12: #{model_forward.10} parent=0 // pred_region
    _
  $region13: #{model_forward.10} parent=0 // pred_fallthru
    _
  // Predicated region
  $region14: #{model_forward.10} parent=0 // pred_check
    _
  $region15: #{model_forward.10} parent=0 // pred_check_branch
    %18 = sbr.rel (0) target = $region17
  $region16: #{model_forward.10} parent=0 // pred_region
    _
  $region17: #{model_forward.10} parent=0 // pred_fallthru
    _
  // Predicated region
  $region18: #{model_forward.10} parent=0 // pred_check
    _
  $region19: #{model_forward.10} parent=0 // pred_check_branch
    %20 = sbr.rel (0) target = $region21
  $region20: #{model_forward.10} parent=0 // pred_region
    _
  $region21: #{model_forward.10} parent=0 // pred_fallthru
    _
  // Predicated region
  $region22: #{model_forward.10} parent=0 // pred_check
    _
  $region23: #{model_forward.10} parent=0 // pred_check_branch
    %22 = sbr.rel (0) target = $region25
  $region24: #{model_forward.10} parent=0 // pred_region
    _
  $region25: #{model_forward.10} parent=0 // pred_fallthru
    _
  %v24 = vld [vmem:[%s0] sm:$0xff]
  %v25 = vld [vmem:[%s0 + $0x8] sm:$0xff]
  %v26 = vld [vmem:[%s0 + $0x10] sm:$0xff]
  %v27 = vld [vmem:[%s0 + $0x18] sm:$0xff]
  %v28 = vld [vmem:[%s0 + $0x20] sm:$0xf]
  %v29 = vld [vmem:[%s0 + $0x24] sm:$0xff]
  %v30 = vld [vmem:[%s0 + $0x2c] sm:$0xff]
  %v31 = vld [vmem:[%s0 + $0x34] sm:$0xff]
  %v32 = vld [vmem:[%s0 + $0x3c] sm:$0xff]
  %v33 = vld [vmem:[%s0 + $0x44] sm:$0xf]
  %v34 = vld [vmem:[%s0 + $0x48] sm:$0xff]
  %v35 = vld [vmem:[%s0 + $0x50] sm:$0xff]
  %v36 = vld [vmem:[%s0 + $0x58] sm:$0xff]
  %v37 = vld [vmem:[%s0 + $0x60] sm:$0xff]
  %v38 = vld [vmem:[%s0 + $0x68] sm:$0xf]
  %v39 = vld [vmem:[%s0 + $0x6c] sm:$0xff]
  %v40 = vld [vmem:[%s0 + $0x74] sm:$0xff]
  %v41 = vld [vmem:[%s0 + $0x7c] sm:$0xff]
  %v42 = vld [vmem:[%s0 + $0x84] sm:$0xff]
  %v43 = vld [vmem:[%s0 + $0x8c] sm:$0xf]
  %v44 = vld [vmem:[%s2] sm:$0xf]
  %v45 = vld [vmem:[%s2 + $0x4] sm:$0xf]
  %v46 = vld [vmem:[%s2 + $0x8] sm:$0xf]
  %v47 = vld [vmem:[%s2 + $0xc] sm:$0xf]
  %v48 = vld [vmem:[%s2 + $0x10] sm:$0xf]
  %v49 = vld [vmem:[%s2 + $0x14] sm:$0xf]
  %v50 = vld [vmem:[%s2 + $0x18] sm:$0xf]
  %v51 = vld [vmem:[%s2 + $0x1c] sm:$0xf]
  %v52 = vld [vmem:[%s2 + $0x20] sm:$0xf]
  %v53 = vld [vmem:[%s2 + $0x24] sm:$0xf]
  %v54 = vld [vmem:[%s2 + $0x28] sm:$0xf]
  %v55 = vld [vmem:[%s2 + $0x2c] sm:$0xf]
  %v56 = vld [vmem:[%s2 + $0x30] sm:$0xf]
  %v57 = vld [vmem:[%s2 + $0x34] sm:$0xf]
  %v58 = vld [vmem:[%s2 + $0x38] sm:$0xf]
  %v59 = vld [vmem:[%s2 + $0x3c] sm:$0xf]
  %v60 = vld [vmem:[%s2 + $0x40] sm:$0xf]
  %v61 = vld [vmem:[%s2 + $0x44] sm:$0xf]
  %v62 = vld [vmem:[%s2 + $0x48] sm:$0xf]
  %v63 = vld [vmem:[%s2 + $0x4c] sm:$0xf]
  %v64 = vld [vmem:[%s2 + $0x50] sm:$0xf]
  %v65 = vld [vmem:[%s2 + $0x54] sm:$0xf]
  %v66 = vld [vmem:[%s2 + $0x58] sm:$0xf]
  %v67 = vld [vmem:[%s2 + $0x5c] sm:$0xf]
  %v68 = vld [vmem:[%s2 + $0x60] sm:$0xf]
  %v69 = vld [vmem:[%s2 + $0x64] sm:$0xf]
  %v70 = vld [vmem:[%s2 + $0x68] sm:$0xf]
  %v71 = vld [vmem:[%s2 + $0x6c] sm:$0xf]
  %v72 = vld [vmem:[%s2 + $0x70] sm:$0xf]
  %v73 = vld [vmem:[%s2 + $0x74] sm:$0xf]
  %v74 = vld [vmem:[%s2 + $0x78] sm:$0xf]
  %v75 = vld [vmem:[%s2 + $0x7c] sm:$0xf]
  %v76 = vld [vmem:[%s2 + $0x80] sm:$0xf]
  %v77 = vld [vmem:[%s2 + $0x84] sm:$0xf]
  %v78 = vld [vmem:[%s2 + $0x88] sm:$0xf]
  %v79 = vld [vmem:[%s2 + $0x8c] sm:$0xf]
  %v80 = vld [vmem:[%s2 + $0x90] sm:$0xf]
  %v81 = vld [vmem:[%s2 + $0x94] sm:$0xf]
  %v82 = vld [vmem:[%s2 + $0x98] sm:$0xf]
  %v83 = vld [vmem:[%s2 + $0x9c] sm:$0xf]
  %v84 = vld [vmem:[%s2 + $0xa0] sm:$0xf]
  %v85 = vld [vmem:[%s2 + $0xa4] sm:$0xf]
  %v86 = vld [vmem:[%s2 + $0xa8] sm:$0xf]
  %v87 = vld [vmem:[%s2 + $0xac] sm:$0xf]
  %v88 = vld [vmem:[%s2 + $0xb0] sm:$0xf]
  %v89 = vld [vmem:[%s2 + $0xb4] sm:$0xf]
  %v90 = vld [vmem:[%s2 + $0xb8] sm:$0xf]
  %v91 = vld [vmem:[%s2 + $0xbc] sm:$0xf]
  %v92 = vld [vmem:[%s2 + $0xc0] sm:$0xf]
  %v93 = vld [vmem:[%s2 + $0xc4] sm:$0xf]
  %v94 = vld [vmem:[%s2 + $0xc8] sm:$0xf]
  %v95 = vld [vmem:[%s2 + $0xcc] sm:$0xf]
  %v96 = vld [vmem:[%s2 + $0xd0] sm:$0xf]
  %v97 = vld [vmem:[%s2 + $0xd4] sm:$0xf]
  %v98 = vld [vmem:[%s2 + $0xd8] sm:$0xf]
  %v99 = vld [vmem:[%s2 + $0xdc] sm:$0xf]
  %v100 = vld [vmem:[%s2 + $0xe0] sm:$0xf]
  %v101 = vld [vmem:[%s2 + $0xe4] sm:$0xf]
  %v102 = vld [vmem:[%s2 + $0xe8] sm:$0xf]
  %v103 = vld [vmem:[%s2 + $0xec] sm:$0xf]
  %v104 = vld [vmem:[%s2 + $0xf0] sm:$0xf]
  %v105 = vld [vmem:[%s2 + $0xf4] sm:$0xf]
  %v106 = vld [vmem:[%s2 + $0xf8] sm:$0xf]
  %v107 = vld [vmem:[%s2 + $0xfc] sm:$0xf]
  %v108 = vld [vmem:[%s2 + $0x100] sm:$0xf]
  %v109 = vld [vmem:[%s2 + $0x104] sm:$0xf]
  %v110 = vld [vmem:[%s2 + $0x108] sm:$0xf]
  %v111 = vld [vmem:[%s2 + $0x10c] sm:$0xf]
  %v112 = vld [vmem:[%s2 + $0x110] sm:$0xf]
  %v113 = vld [vmem:[%s2 + $0x114] sm:$0xf]
  %v114 = vld [vmem:[%s2 + $0x118] sm:$0xf]
  %v115 = vld [vmem:[%s2 + $0x11c] sm:$0xf]
  %v116 = vld [vmem:[%s2 + $0x120] sm:$0xf]
  %v117 = vld [vmem:[%s2 + $0x124] sm:$0xf]
  %v118 = vld [vmem:[%s2 + $0x128] sm:$0xf]
  %v119 = vld [vmem:[%s2 + $0x12c] sm:$0xf]
  %v120 = vld [vmem:[%s2 + $0x130] sm:$0xf]
  %v121 = vld [vmem:[%s2 + $0x134] sm:$0xf]
  %v122 = vld [vmem:[%s2 + $0x138] sm:$0xf]
  %v123 = vld [vmem:[%s2 + $0x13c] sm:$0xf]
  %v124 = vld [vmem:[%s2 + $0x140] sm:$0xf]
  %v125 = vld [vmem:[%s2 + $0x144] sm:$0xf]
  %v126 = vld [vmem:[%s2 + $0x148] sm:$0xf]
  %v127 = vld [vmem:[%s2 + $0x14c] sm:$0xf]
  %v128 = vld [vmem:[%s2 + $0x150] sm:$0xf]
  %v129 = vld [vmem:[%s2 + $0x154] sm:$0xf]
  %v130 = vld [vmem:[%s2 + $0x158] sm:$0xf]
  %v131 = vld [vmem:[%s2 + $0x15c] sm:$0xf]
  %v132 = vld [vmem:[%s2 + $0x160] sm:$0xf]
  %v133 = vld [vmem:[%s2 + $0x164] sm:$0xf]
  %v134 = vld [vmem:[%s2 + $0x168] sm:$0xf]
  %v135 = vld [vmem:[%s2 + $0x16c] sm:$0xf]
  %v136 = vld [vmem:[%s2 + $0x170] sm:$0xf]
  %v137 = vld [vmem:[%s2 + $0x174] sm:$0xf]
  %v138 = vld [vmem:[%s2 + $0x178] sm:$0xf]
  %v139 = vld [vmem:[%s2 + $0x17c] sm:$0xf]
  %v140 = vld [vmem:[%s2 + $0x180] sm:$0xf]
  %v141 = vld [vmem:[%s2 + $0x184] sm:$0xf]
  %v142 = vld [vmem:[%s2 + $0x188] sm:$0xf]
  %v143 = vld [vmem:[%s2 + $0x18c] sm:$0xf]
  %v144 = vld [vmem:[%s2 + $0x190] sm:$0xf]
  %v145 = vld [vmem:[%s2 + $0x194] sm:$0xf]
  %v146 = vld [vmem:[%s2 + $0x198] sm:$0xf]
  %v147 = vld [vmem:[%s2 + $0x19c] sm:$0xf]
  %v148 = vld [vmem:[%s2 + $0x1a0] sm:$0xf]
  %v149 = vld [vmem:[%s2 + $0x1a4] sm:$0xf]
  %v150 = vld [vmem:[%s2 + $0x1a8] sm:$0xf]
  %v151 = vld [vmem:[%s2 + $0x1ac] sm:$0xf]
  %v152 = vld [vmem:[%s2 + $0x1b0] sm:$0xf]
  %v153 = vld [vmem:[%s2 + $0x1b4] sm:$0xf]
  %v154 = vld [vmem:[%s2 + $0x1b8] sm:$0xf]
  %v155 = vld [vmem:[%s2 + $0x1bc] sm:$0xf]
  %v156 = vld [vmem:[%s2 + $0x1c0] sm:$0xf]
  %v157 = vld [vmem:[%s2 + $0x1c4] sm:$0xf]
  %v158 = vld [vmem:[%s2 + $0x1c8] sm:$0xf]
  %v159 = vld [vmem:[%s2 + $0x1cc] sm:$0xf]
  %v160 = vld [vmem:[%s2 + $0x1d0] sm:$0xf]
  %v161 = vld [vmem:[%s2 + $0x1d4] sm:$0xf]
  %v162 = vld [vmem:[%s2 + $0x1d8] sm:$0xf]
  %v163 = vld [vmem:[%s2 + $0x1dc] sm:$0xf]
  %v164 = vld [vmem:[%s2 + $0x1e0] sm:$0xf]
  %v165 = vld [vmem:[%s2 + $0x1e4] sm:$0xf]
  %v166 = vld [vmem:[%s2 + $0x1e8] sm:$0xf]
  %v167 = vld [vmem:[%s2 + $0x1ec] sm:$0xf]
  %v168 = vld [vmem:[%s2 + $0x1f0] sm:$0xf]
  %v169 = vld [vmem:[%s2 + $0x1f4] sm:$0xf]
  %v170 = vld [vmem:[%s2 + $0x1f8] sm:$0xf]
  %v171 = vld [vmem:[%s2 + $0x1fc] sm:$0xf]
  %v172 = vld [vmem:[%s2 + $0x200] sm:$0xf]
  %v173 = vld [vmem:[%s2 + $0x204] sm:$0xf]
  %v174 = vld [vmem:[%s2 + $0x208] sm:$0xf]
  %v175 = vld [vmem:[%s2 + $0x20c] sm:$0xf]
  %v176 = vld [vmem:[%s2 + $0x210] sm:$0xf]
  %v177 = vld [vmem:[%s2 + $0x214] sm:$0xf]
  %v178 = vld [vmem:[%s2 + $0x218] sm:$0xf]
  %v179 = vld [vmem:[%s2 + $0x21c] sm:$0xf]
  %v180 = vld [vmem:[%s2 + $0x220] sm:$0xf]
  %v181 = vld [vmem:[%s2 + $0x224] sm:$0xf]
  %v182 = vld [vmem:[%s2 + $0x228] sm:$0xf]
  %v183 = vld [vmem:[%s2 + $0x22c] sm:$0xf]
  %v184 = vld [vmem:[%s2 + $0x230] sm:$0xf]
  %v185 = vld [vmem:[%s2 + $0x234] sm:$0xf]
  %v186 = vld [vmem:[%s2 + $0x238] sm:$0xf]
  %v187 = vld [vmem:[%s2 + $0x23c] sm:$0xf]
  %v188 = vld [vmem:[%s3] sm:$0x1]
  %v190 = vlaneseq
  %v191 = vshrl.u32 %v190, 7
  %v192 = vsub.s32 0, %v191
  %v193 = vrot.slane %v188, %v192
  %v215 = vunpack.c.l.b16 %v24
  %v216 = vunpack.c.h.b16 %v24
  %v217 = vunpack.c.l.b16 %v25
  %v218 = vunpack.c.h.b16 %v25
  %v219 = vunpack.c.l.b16 %v26
  %v220 = vunpack.c.h.b16 %v26
  %v221 = vunpack.c.l.b16 %v27
  %v222 = vunpack.c.h.b16 %v27
  %v223 = vunpack.c.l.b16 %v28
  %v224 = vunpack.c.l.b16 %v29
  %v225 = vunpack.c.h.b16 %v29
  %v226 = vunpack.c.l.b16 %v30
  %v227 = vunpack.c.h.b16 %v30
  %v228 = vunpack.c.l.b16 %v31
  %v229 = vunpack.c.h.b16 %v31
  %v230 = vunpack.c.l.b16 %v32
  %v231 = vunpack.c.h.b16 %v32
  %v232 = vunpack.c.l.b16 %v33
  %v233 = vunpack.c.l.b16 %v34
  %v234 = vunpack.c.h.b16 %v34
  %v235 = vunpack.c.l.b16 %v35
  %v236 = vunpack.c.h.b16 %v35
  %v237 = vunpack.c.l.b16 %v36
  %v238 = vunpack.c.h.b16 %v36
  %v239 = vunpack.c.l.b16 %v37
  %v240 = vunpack.c.h.b16 %v37
  %v241 = vunpack.c.l.b16 %v38
  %v242 = vunpack.c.l.b16 %v39
  %v243 = vunpack.c.h.b16 %v39
  %v244 = vunpack.c.l.b16 %v40
  %v245 = vunpack.c.h.b16 %v40
  %v246 = vunpack.c.l.b16 %v41
  %v247 = vunpack.c.h.b16 %v41
  %v248 = vunpack.c.l.b16 %v42
  %v249 = vunpack.c.h.b16 %v42
  %v250 = vunpack.c.l.b16 %v43
  %v251 = vpack.c.b16 %v224, %v215
  %v252 = vpack.c.b16 %v225, %v216
  %v253 = vpack.c.b16 %v226, %v217
  %v254 = vpack.c.b16 %v227, %v218
  %v255 = vpack.c.b16 %v228, %v219
  %v256 = vpack.c.b16 %v229, %v220
  %v257 = vpack.c.b16 %v230, %v221
  %v258 = vpack.c.b16 %v231, %v222
  %v259 = vpack.c.b16 %v232, %v223
  %v260 = vpack.c.b16 %v242, %v233
  %v261 = vpack.c.b16 %v243, %v234
  %v262 = vpack.c.b16 %v244, %v235
  %v263 = vpack.c.b16 %v245, %v236
  %v264 = vpack.c.b16 %v246, %v237
  %v265 = vpack.c.b16 %v247, %v238
  %v266 = vpack.c.b16 %v248, %v239
  %v267 = vpack.c.b16 %v249, %v240
  %v268 = vpack.c.b16 %v250, %v241
  %v431 = vunpack.c.l.b16 %v44
  %v432 = vunpack.c.l.b16 %v45
  %v433 = vunpack.c.l.b16 %v46
  %v434 = vunpack.c.l.b16 %v47
  %v435 = vunpack.c.l.b16 %v48
  %v436 = vunpack.c.l.b16 %v49
  %v437 = vunpack.c.l.b16 %v50
  %v438 = vunpack.c.l.b16 %v51
  %v439 = vunpack.c.l.b16 %v52
  %v440 = vunpack.c.l.b16 %v53
  %v441 = vunpack.c.l.b16 %v54
  %v442 = vunpack.c.l.b16 %v55
  %v443 = vunpack.c.l.b16 %v56
  %v444 = vunpack.c.l.b16 %v57
  %v445 = vunpack.c.l.b16 %v58
  %v446 = vunpack.c.l.b16 %v59
  %v447 = vunpack.c.l.b16 %v60
  %v448 = vunpack.c.l.b16 %v61
  %v449 = vunpack.c.l.b16 %v62
  %v450 = vunpack.c.l.b16 %v63
  %v451 = vunpack.c.l.b16 %v64
  %v452 = vunpack.c.l.b16 %v65
  %v453 = vunpack.c.l.b16 %v66
  %v454 = vunpack.c.l.b16 %v67
  %v455 = vunpack.c.l.b16 %v68
  %v456 = vunpack.c.l.b16 %v69
  %v457 = vunpack.c.l.b16 %v70
  %v458 = vunpack.c.l.b16 %v71
  %v459 = vunpack.c.l.b16 %v72
  %v460 = vunpack.c.l.b16 %v73
  %v461 = vunpack.c.l.b16 %v74
  %v462 = vunpack.c.l.b16 %v75
  %v463 = vunpack.c.l.b16 %v76
  %v464 = vunpack.c.l.b16 %v77
  %v465 = vunpack.c.l.b16 %v78
  %v466 = vunpack.c.l.b16 %v79
  %v467 = vunpack.c.l.b16 %v80
  %v468 = vunpack.c.l.b16 %v81
  %v469 = vunpack.c.l.b16 %v82
  %v470 = vunpack.c.l.b16 %v83
  %v471 = vunpack.c.l.b16 %v84
  %v472 = vunpack.c.l.b16 %v85
  %v473 = vunpack.c.l.b16 %v86
  %v474 = vunpack.c.l.b16 %v87
  %v475 = vunpack.c.l.b16 %v88
  %v476 = vunpack.c.l.b16 %v89
  %v477 = vunpack.c.l.b16 %v90
  %v478 = vunpack.c.l.b16 %v91
  %v479 = vunpack.c.l.b16 %v92
  %v480 = vunpack.c.l.b16 %v93
  %v481 = vunpack.c.l.b16 %v94
  %v482 = vunpack.c.l.b16 %v95
  %v483 = vunpack.c.l.b16 %v96
  %v484 = vunpack.c.l.b16 %v97
  %v485 = vunpack.c.l.b16 %v98
  %v486 = vunpack.c.l.b16 %v99
  %v487 = vunpack.c.l.b16 %v100
  %v488 = vunpack.c.l.b16 %v101
  %v489 = vunpack.c.l.b16 %v102
  %v490 = vunpack.c.l.b16 %v103
  %v491 = vunpack.c.l.b16 %v104
  %v492 = vunpack.c.l.b16 %v105
  %v493 = vunpack.c.l.b16 %v106
  %v494 = vunpack.c.l.b16 %v107
  %v495 = vunpack.c.l.b16 %v108
  %v496 = vunpack.c.l.b16 %v109
  %v497 = vunpack.c.l.b16 %v110
  %v498 = vunpack.c.l.b16 %v111
  %v499 = vunpack.c.l.b16 %v112
  %v500 = vunpack.c.l.b16 %v113
  %v501 = vunpack.c.l.b16 %v114
  %v502 = vunpack.c.l.b16 %v115
  %v503 = vunpack.c.l.b16 %v116
  %v504 = vunpack.c.l.b16 %v117
  %v505 = vunpack.c.l.b16 %v118
  %v506 = vunpack.c.l.b16 %v119
  %v507 = vunpack.c.l.b16 %v120
  %v508 = vunpack.c.l.b16 %v121
  %v509 = vunpack.c.l.b16 %v122
  %v510 = vunpack.c.l.b16 %v123
  %v511 = vunpack.c.l.b16 %v124
  %v512 = vunpack.c.l.b16 %v125
  %v513 = vunpack.c.l.b16 %v126
  %v514 = vunpack.c.l.b16 %v127
  %v515 = vunpack.c.l.b16 %v128
  %v516 = vunpack.c.l.b16 %v129
  %v517 = vunpack.c.l.b16 %v130
  %v518 = vunpack.c.l.b16 %v131
  %v519 = vunpack.c.l.b16 %v132
  %v520 = vunpack.c.l.b16 %v133
  %v521 = vunpack.c.l.b16 %v134
  %v522 = vunpack.c.l.b16 %v135
  %v523 = vunpack.c.l.b16 %v136
  %v524 = vunpack.c.l.b16 %v137
  %v525 = vunpack.c.l.b16 %v138
  %v526 = vunpack.c.l.b16 %v139
  %v527 = vunpack.c.l.b16 %v140
  %v528 = vunpack.c.l.b16 %v141
  %v529 = vunpack.c.l.b16 %v142
  %v530 = vunpack.c.l.b16 %v143
  %v531 = vunpack.c.l.b16 %v144
  %v532 = vunpack.c.l.b16 %v145
  %v533 = vunpack.c.l.b16 %v146
  %v534 = vunpack.c.l.b16 %v147
  %v535 = vunpack.c.l.b16 %v148
  %v536 = vunpack.c.l.b16 %v149
  %v537 = vunpack.c.l.b16 %v150
  %v538 = vunpack.c.l.b16 %v151
  %v539 = vunpack.c.l.b16 %v152
  %v540 = vunpack.c.l.b16 %v153
  %v541 = vunpack.c.l.b16 %v154
  %v542 = vunpack.c.l.b16 %v155
  %v543 = vunpack.c.l.b16 %v156
  %v544 = vunpack.c.l.b16 %v157
  %v545 = vunpack.c.l.b16 %v158
  %v546 = vunpack.c.l.b16 %v159
  %v547 = vunpack.c.l.b16 %v160
  %v548 = vunpack.c.l.b16 %v161
  %v549 = vunpack.c.l.b16 %v162
  %v550 = vunpack.c.l.b16 %v163
  %v551 = vunpack.c.l.b16 %v164
  %v552 = vunpack.c.l.b16 %v165
  %v553 = vunpack.c.l.b16 %v166
  %v554 = vunpack.c.l.b16 %v167
  %v555 = vunpack.c.l.b16 %v168
  %v556 = vunpack.c.l.b16 %v169
  %v557 = vunpack.c.l.b16 %v170
  %v558 = vunpack.c.l.b16 %v171
  %v559 = vunpack.c.l.b16 %v172
  %v560 = vunpack.c.l.b16 %v173
  %v561 = vunpack.c.l.b16 %v174
  %v562 = vunpack.c.l.b16 %v175
  %v563 = vunpack.c.l.b16 %v176
  %v564 = vunpack.c.l.b16 %v177
  %v565 = vunpack.c.l.b16 %v178
  %v566 = vunpack.c.l.b16 %v179
  %v567 = vunpack.c.l.b16 %v180
  %v568 = vunpack.c.l.b16 %v181
  %v569 = vunpack.c.l.b16 %v182
  %v570 = vunpack.c.l.b16 %v183
  %v571 = vunpack.c.l.b16 %v184
  %v572 = vunpack.c.l.b16 %v185
  %v573 = vunpack.c.l.b16 %v186
  %v574 = vunpack.c.l.b16 %v187
  %v575 = vpack.c.b16 %v432, %v431
  %v576 = vpack.c.b16 %v434, %v433
  %v577 = vpack.c.b16 %v436, %v435
  %v578 = vpack.c.b16 %v438, %v437
  %v579 = vpack.c.b16 %v440, %v439
  %v580 = vpack.c.b16 %v442, %v441
  %v581 = vpack.c.b16 %v444, %v443
  %v582 = vpack.c.b16 %v446, %v445
  %v583 = vpack.c.b16 %v448, %v447
  %v584 = vpack.c.b16 %v450, %v449
  %v585 = vpack.c.b16 %v452, %v451
  %v586 = vpack.c.b16 %v454, %v453
  %v587 = vpack.c.b16 %v456, %v455
  %v588 = vpack.c.b16 %v458, %v457
  %v589 = vpack.c.b16 %v460, %v459
  %v590 = vpack.c.b16 %v462, %v461
  %v591 = vpack.c.b16 %v464, %v463
  %v592 = vpack.c.b16 %v466, %v465
  %v593 = vpack.c.b16 %v468, %v467
  %v594 = vpack.c.b16 %v470, %v469
  %v595 = vpack.c.b16 %v472, %v471
  %v596 = vpack.c.b16 %v474, %v473
  %v597 = vpack.c.b16 %v476, %v475
  %v598 = vpack.c.b16 %v478, %v477
  %v599 = vpack.c.b16 %v480, %v479
  %v600 = vpack.c.b16 %v482, %v481
  %v601 = vpack.c.b16 %v484, %v483
  %v602 = vpack.c.b16 %v486, %v485
  %v603 = vpack.c.b16 %v488, %v487
  %v604 = vpack.c.b16 %v490, %v489
  %v605 = vpack.c.b16 %v492, %v491
  %v606 = vpack.c.b16 %v494, %v493
  %v607 = vpack.c.b16 %v496, %v495
  %v608 = vpack.c.b16 %v498, %v497
  %v609 = vpack.c.b16 %v500, %v499
  %v610 = vpack.c.b16 %v502, %v501
  %v611 = vpack.c.b16 %v504, %v503
  %v612 = vpack.c.b16 %v506, %v505
  %v613 = vpack.c.b16 %v508, %v507
  %v614 = vpack.c.b16 %v510, %v509
  %v615 = vpack.c.b16 %v512, %v511
  %v616 = vpack.c.b16 %v514, %v513
  %v617 = vpack.c.b16 %v516, %v515
  %v618 = vpack.c.b16 %v518, %v517
  %v619 = vpack.c.b16 %v520, %v519
  %v620 = vpack.c.b16 %v522, %v521
  %v621 = vpack.c.b16 %v524, %v523
  %v622 = vpack.c.b16 %v526, %v525
  %v623 = vpack.c.b16 %v528, %v527
  %v624 = vpack.c.b16 %v530, %v529
  %v625 = vpack.c.b16 %v532, %v531
  %v626 = vpack.c.b16 %v534, %v533
  %v627 = vpack.c.b16 %v536, %v535
  %v628 = vpack.c.b16 %v538, %v537
  %v629 = vpack.c.b16 %v540, %v539
  %v630 = vpack.c.b16 %v542, %v541
  %v631 = vpack.c.b16 %v544, %v543
  %v632 = vpack.c.b16 %v546, %v545
  %v633 = vpack.c.b16 %v548, %v547
  %v634 = vpack.c.b16 %v550, %v549
  %v635 = vpack.c.b16 %v552, %v551
  %v636 = vpack.c.b16 %v554, %v553
  %v637 = vpack.c.b16 %v556, %v555
  %v638 = vpack.c.b16 %v558, %v557
  %v639 = vpack.c.b16 %v560, %v559
  %v640 = vpack.c.b16 %v562, %v561
  %v641 = vpack.c.b16 %v564, %v563
  %v642 = vpack.c.b16 %v566, %v565
  %v643 = vpack.c.b16 %v568, %v567
  %v644 = vpack.c.b16 %v570, %v569
  %v645 = vpack.c.b16 %v572, %v571
  %v646 = vpack.c.b16 %v574, %v573
  %719 = vmatprep.subr.bf16.mxu0 0
  %720 = vmatpush1.bf16.msra.mxu0 %v575
  %721 = vmatprep.subr.bf16.mxu0 0
  %722 = vmatpush1.bf16.msra.mxu0 %v576
  %723 = vmatprep.subr.bf16.mxu0 0
  %724 = vmatpush1.bf16.msra.mxu0 %v577
  %725 = vmatprep.subr.bf16.mxu0 0
  %726 = vmatpush1.bf16.msra.mxu0 %v578
  %727 = vmatprep.subr.bf16.mxu0 0
  %728 = vmatpush1.bf16.msra.mxu0 %v579
  %729 = vmatprep.subr.bf16.mxu0 0
  %730 = vmatpush1.bf16.msra.mxu0 %v580
  %731 = vmatprep.subr.bf16.mxu0 0
  %732 = vmatpush1.bf16.msra.mxu0 %v581
  %733 = vmatprep.subr.bf16.mxu0 0
  %734 = vmatpush1.bf16.msra.mxu0 %v582
  %735 = vmatprep.subr.bf16.mxu0 0
  %736 = vmatpush1.bf16.msra.mxu0 %v583
  %737 = vmatprep.subr.bf16.mxu0 0
  %738 = vmatpush1.bf16.msra.mxu0 %v584
  %739 = vmatprep.subr.bf16.mxu0 0
  %740 = vmatpush1.bf16.msra.mxu0 %v585
  %741 = vmatprep.subr.bf16.mxu0 0
  %742 = vmatpush1.bf16.msra.mxu0 %v586
  %743 = vmatprep.subr.bf16.mxu0 0
  %744 = vmatpush1.bf16.msra.mxu0 %v587
  %745 = vmatprep.subr.bf16.mxu0 0
  %746 = vmatpush1.bf16.msra.mxu0 %v588
  %747 = vmatprep.subr.bf16.mxu0 0
  %748 = vmatpush1.bf16.msra.mxu0 %v589
  %749 = vmatprep.subr.bf16.mxu0 0
  %750 = vmatpush1.bf16.msra.mxu0 %v590
  %751 = vmatprep.mubr.bf16.mxu0 %v252
  %752 = vmatmul.mubr.bf16.gmra.mrb[0].mxu0 %v251
  %v753 = vpop.f32.mrb[0].mxu0
  %v754 = vadd.f32 %v193, %v753
  %v755 = vpop.f32.mrb[0].mxu0
  %v756 = vpop.f32.mrb[0].mxu0
  %v757 = vadd.f32 %v193, %v756
  %v758 = vpop.f32.mrb[0].mxu0
  %759 = vmatprep.mubr.bf16.mxu0 %v261
  %760 = vmatmul.mubr.bf16.gmra.mrb[0].mxu0 %v260
  %v761 = vpop.f32.mrb[0].mxu0
  %v762 = vadd.f32 %v193, %v761
  %v763 = vpop.f32.mrb[0].mxu0
  %v764 = vpop.f32.mrb[0].mxu0
  %v765 = vadd.f32 %v193, %v764
  %v766 = vpop.f32.mrb[0].mxu0
  %767 = vdwg.mxu0
  %768 = vmatprep.subr.bf16.mxu0 0
  %769 = vmatpush1.bf16.msra.mxu0 %v591
  %770 = vmatprep.subr.bf16.mxu0 0
  %771 = vmatpush1.bf16.msra.mxu0 %v592
  %772 = vmatprep.subr.bf16.mxu0 0
  %773 = vmatpush1.bf16.msra.mxu0 %v593
  %774 = vmatprep.subr.bf16.mxu0 0
  %775 = vmatpush1.bf16.msra.mxu0 %v594
  %776 = vmatprep.subr.bf16.mxu0 0
  %777 = vmatpush1.bf16.msra.mxu0 %v595
  %778 = vmatprep.subr.bf16.mxu0 0
  %779 = vmatpush1.bf16.msra.mxu0 %v596
  %780 = vmatprep.subr.bf16.mxu0 0
  %781 = vmatpush1.bf16.msra.mxu0 %v597
  %782 = vmatprep.subr.bf16.mxu0 0
  %783 = vmatpush1.bf16.msra.mxu0 %v598
  %784 = vmatprep.subr.bf16.mxu0 0
  %785 = vmatpush1.bf16.msra.mxu0 %v599
  %786 = vmatprep.subr.bf16.mxu0 0
  %787 = vmatpush1.bf16.msra.mxu0 %v600
  %788 = vmatprep.subr.bf16.mxu0 0
  %789 = vmatpush1.bf16.msra.mxu0 %v601
  %790 = vmatprep.subr.bf16.mxu0 0
  %791 = vmatpush1.bf16.msra.mxu0 %v602
  %792 = vmatprep.subr.bf16.mxu0 0
  %793 = vmatpush1.bf16.msra.mxu0 %v603
  %794 = vmatprep.subr.bf16.mxu0 0
  %795 = vmatpush1.bf16.msra.mxu0 %v604
  %796 = vmatprep.subr.bf16.mxu0 0
  %797 = vmatpush1.bf16.msra.mxu0 %v605
  %798 = vmatprep.subr.bf16.mxu0 0
  %799 = vmatpush1.bf16.msra.mxu0 %v606
  %800 = vmatprep.mubr.bf16.mxu0 %v254
  %801 = vmatmul.mubr.bf16.gmra.mrb[0].mxu0 %v253
  %v802 = vpop.f32.mrb[0].mxu0
  %v803 = vadd.f32 %v754, %v802
  %v804 = vpop.f32.mrb[0].mxu0
  %v805 = vpop.f32.mrb[0].mxu0
  %v806 = vadd.f32 %v757, %v805
  %v807 = vpop.f32.mrb[0].mxu0
  %808 = vmatprep.mubr.bf16.mxu0 %v263
  %809 = vmatmul.mubr.bf16.gmra.mrb[0].mxu0 %v262
  %v810 = vpop.f32.mrb[0].mxu0
  %v811 = vadd.f32 %v762, %v810
  %v812 = vpop.f32.mrb[0].mxu0
  %v813 = vpop.f32.mrb[0].mxu0
  %v814 = vadd.f32 %v765, %v813
  %v815 = vpop.f32.mrb[0].mxu0
  %816 = vdwg.mxu0
  %817 = vmatprep.subr.bf16.mxu0 0
  %818 = vmatpush1.bf16.msra.mxu0 %v607
  %819 = vmatprep.subr.bf16.mxu0 0
  %820 = vmatpush1.bf16.msra.mxu0 %v608
  %821 = vmatprep.subr.bf16.mxu0 0
  %822 = vmatpush1.bf16.msra.mxu0 %v609
  %823 = vmatprep.subr.bf16.mxu0 0
  %824 = vmatpush1.bf16.msra.mxu0 %v610
  %825 = vmatprep.subr.bf16.mxu0 0
  %826 = vmatpush1.bf16.msra.mxu0 %v611
  %827 = vmatprep.subr.bf16.mxu0 0
  %828 = vmatpush1.bf16.msra.mxu0 %v612
  %829 = vmatprep.subr.bf16.mxu0 0
  %830 = vmatpush1.bf16.msra.mxu0 %v613
  %831 = vmatprep.subr.bf16.mxu0 0
  %832 = vmatpush1.bf16.msra.mxu0 %v614
  %833 = vmatprep.subr.bf16.mxu0 0
  %834 = vmatpush1.bf16.msra.mxu0 %v615
  %835 = vmatprep.subr.bf16.mxu0 0
  %836 = vmatpush1.bf16.msra.mxu0 %v616
  %837 = vmatprep.subr.bf16.mxu0 0
  %838 = vmatpush1.bf16.msra.mxu0 %v617
  %839 = vmatprep.subr.bf16.mxu0 0
  %840 = vmatpush1.bf16.msra.mxu0 %v618
  %841 = vmatprep.subr.bf16.mxu0 0
  %842 = vmatpush1.bf16.msra.mxu0 %v619
  %843 = vmatprep.subr.bf16.mxu0 0
  %844 = vmatpush1.bf16.msra.mxu0 %v620
  %845 = vmatprep.subr.bf16.mxu0 0
  %846 = vmatpush1.bf16.msra.mxu0 %v621
  %847 = vmatprep.subr.bf16.mxu0 0
  %848 = vmatpush1.bf16.msra.mxu0 %v622
  %849 = vmatprep.mubr.bf16.mxu0 %v256
  %850 = vmatmul.mubr.bf16.gmra.mrb[0].mxu0 %v255
  %v851 = vpop.f32.mrb[0].mxu0
  %v852 = vadd.f32 %v803, %v851
  %v853 = vpop.f32.mrb[0].mxu0
  %v854 = vpop.f32.mrb[0].mxu0
  %v855 = vadd.f32 %v806, %v854
  %v856 = vpop.f32.mrb[0].mxu0
  %857 = vmatprep.mubr.bf16.mxu0 %v265
  %858 = vmatmul.mubr.bf16.gmra.mrb[0].mxu0 %v264
  %v859 = vpop.f32.mrb[0].mxu0
  %v860 = vadd.f32 %v811, %v859
  %v861 = vpop.f32.mrb[0].mxu0
  %v862 = vpop.f32.mrb[0].mxu0
  %v863 = vadd.f32 %v814, %v862
  %v864 = vpop.f32.mrb[0].mxu0
  %865 = vdwg.mxu0
  %866 = vmatprep.subr.bf16.mxu0 0
  %867 = vmatpush1.bf16.msra.mxu0 %v623
  %868 = vmatprep.subr.bf16.mxu0 0
  %869 = vmatpush1.bf16.msra.mxu0 %v624
  %870 = vmatprep.subr.bf16.mxu0 0
  %871 = vmatpush1.bf16.msra.mxu0 %v625
  %872 = vmatprep.subr.bf16.mxu0 0
  %873 = vmatpush1.bf16.msra.mxu0 %v626
  %874 = vmatprep.subr.bf16.mxu0 0
  %875 = vmatpush1.bf16.msra.mxu0 %v627
  %876 = vmatprep.subr.bf16.mxu0 0
  %877 = vmatpush1.bf16.msra.mxu0 %v628
  %878 = vmatprep.subr.bf16.mxu0 0
  %879 = vmatpush1.bf16.msra.mxu0 %v629
  %880 = vmatprep.subr.bf16.mxu0 0
  %881 = vmatpush1.bf16.msra.mxu0 %v630
  %882 = vmatprep.subr.bf16.mxu0 0
  %883 = vmatpush1.bf16.msra.mxu0 %v631
  %884 = vmatprep.subr.bf16.mxu0 0
  %885 = vmatpush1.bf16.msra.mxu0 %v632
  %886 = vmatprep.subr.bf16.mxu0 0
  %887 = vmatpush1.bf16.msra.mxu0 %v633
  %888 = vmatprep.subr.bf16.mxu0 0
  %889 = vmatpush1.bf16.msra.mxu0 %v634
  %890 = vmatprep.subr.bf16.mxu0 0
  %891 = vmatpush1.bf16.msra.mxu0 %v635
  %892 = vmatprep.subr.bf16.mxu0 0
  %893 = vmatpush1.bf16.msra.mxu0 %v636
  %894 = vmatprep.subr.bf16.mxu0 0
  %895 = vmatpush1.bf16.msra.mxu0 %v637
  %896 = vmatprep.subr.bf16.mxu0 0
  %897 = vmatpush1.bf16.msra.mxu0 %v638
  %898 = vmatprep.mubr.bf16.mxu0 %v258
  %899 = vmatmul.mubr.bf16.gmra.mrb[0].mxu0 %v257
  %v900 = vpop.f32.mrb[0].mxu0
  %v901 = vadd.f32 %v852, %v900
  %v902 = vpop.f32.mrb[0].mxu0
  %v903 = vpop.f32.mrb[0].mxu0
  %v904 = vadd.f32 %v855, %v903
  %v905 = vpop.f32.mrb[0].mxu0
  %906 = vmatprep.mubr.bf16.mxu0 %v267
  %907 = vmatmul.mubr.bf16.gmra.mrb[0].mxu0 %v266
  %v908 = vpop.f32.mrb[0].mxu0
  %v909 = vadd.f32 %v860, %v908
  %v910 = vpop.f32.mrb[0].mxu0
  %v911 = vpop.f32.mrb[0].mxu0
  %v912 = vadd.f32 %v863, %v911
  %v913 = vpop.f32.mrb[0].mxu0
  %914 = vdwg.mxu0
  %915 = vmatprep.subr.bf16.mxu0 0
  %916 = vmatpush1.bf16.msra.mxu0 %v639
  %917 = vmatprep.subr.bf16.mxu0 0
  %918 = vmatpush1.bf16.msra.mxu0 %v640
  %919 = vmatprep.subr.bf16.mxu0 0
  %920 = vmatpush1.bf16.msra.mxu0 %v641
  %921 = vmatprep.subr.bf16.mxu0 0
  %922 = vmatpush1.bf16.msra.mxu0 %v642
  %923 = vmatprep.subr.bf16.mxu0 0
  %924 = vmatpush1.bf16.msra.mxu0 %v643
  %925 = vmatprep.subr.bf16.mxu0 0
  %926 = vmatpush1.bf16.msra.mxu0 %v644
  %927 = vmatprep.subr.bf16.mxu0 0
  %928 = vmatpush1.bf16.msra.mxu0 %v645
  %929 = vmatprep.subr.bf16.mxu0 0
  %930 = vmatpush1.bf16.msra.mxu0 %v646
  %931 = vmatprep.subr.bf16.mxu0 0
  %932 = vmatpush1.bf16.msra.mxu0 0
  %933 = vmatprep.subr.bf16.mxu0 0
  %934 = vmatpush1.bf16.msra.mxu0 0
  %935 = vmatprep.subr.bf16.mxu0 0
  %936 = vmatpush1.bf16.msra.mxu0 0
  %937 = vmatprep.subr.bf16.mxu0 0
  %938 = vmatpush1.bf16.msra.mxu0 0
  %939 = vmatprep.subr.bf16.mxu0 0
  %940 = vmatpush1.bf16.msra.mxu0 0
  %941 = vmatprep.subr.bf16.mxu0 0
  %942 = vmatpush1.bf16.msra.mxu0 0
  %943 = vmatprep.subr.bf16.mxu0 0
  %944 = vmatpush1.bf16.msra.mxu0 0
  %945 = vmatprep.subr.bf16.mxu0 0
  %946 = vmatpush1.bf16.msra.mxu0 0
  %947 = vmatprep.mubr.bf16.mxu0 0
  %948 = vmatmul.mubr.bf16.gmra.mrb[0].mxu0 %v259
  %v949 = vpop.f32.mrb[0].mxu0
  %v950 = vadd.f32 %v901, %v949
  %v951 = vpop.f32.mrb[0].mxu0
  %v952 = vpop.f32.mrb[0].mxu0
  %v953 = vadd.f32 %v904, %v952
  %v954 = vpop.f32.mrb[0].mxu0
  %955 = vmatprep.mubr.bf16.mxu0 0
  %956 = vmatmul.mubr.bf16.gmra.mrb[0].mxu0 %v268
  %v957 = vpop.f32.mrb[0].mxu0
  %v958 = vadd.f32 %v909, %v957
  %v959 = vpop.f32.mrb[0].mxu0
  %v960 = vpop.f32.mrb[0].mxu0
  %v961 = vadd.f32 %v912, %v960
  %v962 = vpop.f32.mrb[0].mxu0
  %963 = vdwg.mxu0
  %v964 = vld [vmem:[%s1] sm:$0xff]
  %v965 = vld [vmem:[%s1 + $0x8] sm:$0xff]
  %v966 = vld [vmem:[%s1 + $0x10] sm:$0xff]
  %v967 = vld [vmem:[%s1 + $0x18] sm:$0xff]
  %v968 = vadd.f32 %v950, %v964
  %v969 = vadd.f32 %v953, %v965
  %v970 = vadd.f32 %v958, %v966
  %v971 = vadd.f32 %v961, %v967
  %v972 = vmax.f32 %v968, 0.0
  %v973 = vmax.f32 %v969, 0.0
  %v974 = vmax.f32 %v970, 0.0
  %v975 = vmax.f32 %v971, 0.0
  %v976 = vpack.c.bf16 %v973, %v972
  %v977 = vpack.c.bf16 %v975, %v974
  %v978 = vld [vmem:[%s4] sm:$0xf]
  %v979 = vld [vmem:[%s4 + $0x4] sm:$0xf]
  %v980 = vld [vmem:[%s4 + $0x8] sm:$0xf]
  %v981 = vld [vmem:[%s4 + $0xc] sm:$0xf]
  %v982 = vld [vmem:[%s4 + $0x10] sm:$0xf]
  %v983 = vld [vmem:[%s4 + $0x14] sm:$0xf]
  %v984 = vld [vmem:[%s4 + $0x18] sm:$0xf]
  %v985 = vld [vmem:[%s4 + $0x1c] sm:$0xf]
  %v986 = vld [vmem:[%s4 + $0x20] sm:$0xf]
  %v987 = vld [vmem:[%s4 + $0x24] sm:$0xf]
  %v988 = vld [vmem:[%s4 + $0x28] sm:$0xf]
  %v989 = vld [vmem:[%s4 + $0x2c] sm:$0xf]
  %v990 = vld [vmem:[%s4 + $0x30] sm:$0xf]
  %v991 = vld [vmem:[%s4 + $0x34] sm:$0xf]
  %v992 = vld [vmem:[%s4 + $0x38] sm:$0xf]
  %v993 = vld [vmem:[%s4 + $0x3c] sm:$0xf]
  %v994 = vld [vmem:[%s5] sm:$0x1]
  %v996 = vlaneseq
  %v997 = vshrl.u32 %v996, 7
  %v998 = vsub.s32 0, %v997
  %v999 = vrot.slane %v994, %v998
  %v1017 = vunpack.c.l.b16 %v978
  %v1018 = vunpack.c.l.b16 %v979
  %v1019 = vunpack.c.l.b16 %v980
  %v1020 = vunpack.c.l.b16 %v981
  %v1021 = vunpack.c.l.b16 %v982
  %v1022 = vunpack.c.l.b16 %v983
  %v1023 = vunpack.c.l.b16 %v984
  %v1024 = vunpack.c.l.b16 %v985
  %v1025 = vunpack.c.l.b16 %v986
  %v1026 = vunpack.c.l.b16 %v987
  %v1027 = vunpack.c.l.b16 %v988
  %v1028 = vunpack.c.l.b16 %v989
  %v1029 = vunpack.c.l.b16 %v990
  %v1030 = vunpack.c.l.b16 %v991
  %v1031 = vunpack.c.l.b16 %v992
  %v1032 = vunpack.c.l.b16 %v993
  %v1033 = vpack.c.b16 %v1018, %v1017
  %v1034 = vpack.c.b16 %v1020, %v1019
  %v1035 = vpack.c.b16 %v1022, %v1021
  %v1036 = vpack.c.b16 %v1024, %v1023
  %v1037 = vpack.c.b16 %v1026, %v1025
  %v1038 = vpack.c.b16 %v1028, %v1027
  %v1039 = vpack.c.b16 %v1030, %v1029
  %v1040 = vpack.c.b16 %v1032, %v1031
  %1049 = vmatprep.subr.bf16.mxu0 0
  %1050 = vmatpush1.bf16.msra.mxu0 %v1033
  %1051 = vmatprep.subr.bf16.mxu0 0
  %1052 = vmatpush1.bf16.msra.mxu0 %v1034
  %1053 = vmatprep.subr.bf16.mxu0 0
  %1054 = vmatpush1.bf16.msra.mxu0 %v1035
  %1055 = vmatprep.subr.bf16.mxu0 0
  %1056 = vmatpush1.bf16.msra.mxu0 %v1036
  %1057 = vmatprep.subr.bf16.mxu0 0
  %1058 = vmatpush1.bf16.msra.mxu0 %v1037
  %1059 = vmatprep.subr.bf16.mxu0 0
  %1060 = vmatpush1.bf16.msra.mxu0 %v1038
  %1061 = vmatprep.subr.bf16.mxu0 0
  %1062 = vmatpush1.bf16.msra.mxu0 %v1039
  %1063 = vmatprep.subr.bf16.mxu0 0
  %1064 = vmatpush1.bf16.msra.mxu0 %v1040
  %1065 = vmatprep.subr.bf16.mxu0 0
  %1066 = vmatpush1.bf16.msra.mxu0 0
  %1067 = vmatprep.subr.bf16.mxu0 0
  %1068 = vmatpush1.bf16.msra.mxu0 0
  %1069 = vmatprep.subr.bf16.mxu0 0
  %1070 = vmatpush1.bf16.msra.mxu0 0
  %1071 = vmatprep.subr.bf16.mxu0 0
  %1072 = vmatpush1.bf16.msra.mxu0 0
  %1073 = vmatprep.subr.bf16.mxu0 0
  %1074 = vmatpush1.bf16.msra.mxu0 0
  %1075 = vmatprep.subr.bf16.mxu0 0
  %1076 = vmatpush1.bf16.msra.mxu0 0
  %1077 = vmatprep.subr.bf16.mxu0 0
  %1078 = vmatpush1.bf16.msra.mxu0 0
  %1079 = vmatprep.subr.bf16.mxu0 0
  %1080 = vmatpush1.bf16.msra.mxu0 0
  %1081 = vmatprep.mubr.bf16.mxu0 0
  %1082 = vmatmul.mubr.bf16.gmra.mrb[0].mxu0 %v976
  %v1083 = vpop.f32.mrb[0].mxu0
  %v1084 = vadd.f32 %v999, %v1083
  %v1085 = vpop.f32.mrb[0].mxu0
  %v1086 = vpop.f32.mrb[0].mxu0
  %v1087 = vadd.f32 %v999, %v1086
  %v1088 = vpop.f32.mrb[0].mxu0
  %1089 = vmatprep.mubr.bf16.mxu0 0
  %1090 = vmatmul.mubr.bf16.gmra.mrb[0].mxu0 %v977
  %v1091 = vpop.f32.mrb[0].mxu0
  %v1092 = vadd.f32 %v999, %v1091
  %v1093 = vpop.f32.mrb[0].mxu0
  %v1094 = vpop.f32.mrb[0].mxu0
  %v1095 = vadd.f32 %v999, %v1094
  %v1096 = vpop.f32.mrb[0].mxu0
  %1097 = vdwg.mxu0
  %v1098 = vadd.f32 %v1084, %v972
  %v1099 = vadd.f32 %v1087, %v973
  %v1100 = vadd.f32 %v1092, %v974
  %v1101 = vadd.f32 %v1095, %v975
  %1102 = vst [vmem:[%s6] sm:$0xff] %v1098
  %1103 = vst [vmem:[%s6 + $0x8] sm:$0xff] %v1099
  %1104 = vst [vmem:[%s6 + $0x10] sm:$0xff] %v1100
  %1105 = vst [vmem:[%s6 + $0x18] sm:$0xff] %v1101
  // Predicated region
  $region26: #{model_forward.10} parent=0 // pred_check
    _
  $region27: #{model_forward.10} parent=0 // pred_check_branch
    %1107 = sbr.rel (0) target = $region29
  $region28: #{model_forward.10} parent=0 // pred_region
    _
  $region29: #{model_forward.10} parent=0 // pred_fallthru
    _
  // Predicated region
  $region30: #{model_forward.10} parent=0 // pred_check
    _
  $region31: #{model_forward.10} parent=0 // pred_check_branch
    %1109 = sbr.rel (0) target = $region33
  $region32: #{model_forward.10} parent=0 // pred_region
    _
  $region33: #{model_forward.10} parent=0 // pred_fallthru
    _

// kernel: model_forward.11
$region0: #{model_forward.11}
  #allocation0 [shape = 'u32[]', space=smem, size = 0x4, offset = 0x4, fixed_abs, tag = 'smem constant byte address 0x4 - core index']
  #allocation1 [shape = 'u32[144,128]{1,0:T(1,128)}', space=vmem, size = 0x12000, scoped, tag = 'internal scratch']
  %s0 = inlined_call_operand.vmem [shape: f32[32,128], index: 0, kind: input, shape index: {}]
  %s1 = inlined_call_operand.vmem [shape: f32[128,128], index: 1, kind: input, shape index: {}]
  %s2 = inlined_call_operand.vmem [shape: f32[32,128], index: 2, kind: output, shape index: {0}]
  %s3 = inlined_call_operand.vmem [shape: f32[3], index: 3, kind: output, shape index: {1}]
  %4 = xla_tuple %s2, %s3
  %s5 = sld [smem:[#allocation0]]
  $region26: #{model_forward.11} parent=0
    _
  %s7 = ssub.s32 1, %s5
  %s8 = scalar_select 0, %s7, %s5
  $region1: #{model_forward.11} parent=0
    #allocation2 [shape = 'u8[512]{0}', space=smem, size = 0x200, scoped, tag = 'output window, operand 1, single buffered']
    #allocation3 [shape = 's32[1]{0}', space=sflag, size = 0x4, scoped, tag = 'scoped memory for model_forward.11']
    %9 = vsyncpa [#allocation3], 0
    // Predicated region
    $region2: #{model_forward.11} parent=1 // pred_check
      _
    $region3: #{model_forward.11} parent=1 // pred_check_branch
      %11 = sbr.rel (0) target = $region5
    $region4: #{model_forward.11} parent=1 // pred_region
      _
    $region5: #{model_forward.11} parent=1 // pred_fallthru
      _
    // Predicated region
    $region6: #{model_forward.11} parent=1 // pred_check
      _
    $region7: #{model_forward.11} parent=1 // pred_check_branch
      %13 = sbr.rel (0) target = $region9
    $region8: #{model_forward.11} parent=1 // pred_region
      _
    $region9: #{model_forward.11} parent=1 // pred_fallthru
      _
    %v15 = vld [vmem:[%s0] sm:$0xff]
    %v16 = vld [vmem:[%s0 + $0x8] sm:$0xff]
    %v17 = vld [vmem:[%s0 + $0x10] sm:$0xff]
    %v18 = vld [vmem:[%s0 + $0x18] sm:$0xff]
    %v19 = vld [vmem:[%s1] sm:$0xff]
    %v20 = vld [vmem:[%s1 + $0x8] sm:$0xff]
    %v21 = vld [vmem:[%s1 + $0x10] sm:$0xff]
    %v22 = vld [vmem:[%s1 + $0x18] sm:$0xff]
    %v23 = vld [vmem:[%s1 + $0x20] sm:$0xff]
    %v24 = vld [vmem:[%s1 + $0x28] sm:$0xff]
    %v25 = vld [vmem:[%s1 + $0x30] sm:$0xff]
    %v26 = vld [vmem:[%s1 + $0x38] sm:$0xff]
    %v27 = vld [vmem:[%s1 + $0x40] sm:$0xff]
    %v28 = vld [vmem:[%s1 + $0x48] sm:$0xff]
    %v29 = vld [vmem:[%s1 + $0x50] sm:$0xff]
    %v30 = vld [vmem:[%s1 + $0x58] sm:$0xff]
    %v31 = vld [vmem:[%s1 + $0x60] sm:$0xff]
    %v32 = vld [vmem:[%s1 + $0x68] sm:$0xff]
    %v33 = vld [vmem:[%s1 + $0x70] sm:$0xff]
    %v34 = vld [vmem:[%s1 + $0x78] sm:$0xff]
    %v35 = vpack.c.bf16 %v16, %v15
    %v36 = vpack.c.bf16 %v18, %v17
    %v37 = vpack.c.bf16 %v20, %v19
    %v38 = vpack.c.bf16 %v22, %v21
    %v39 = vpack.c.bf16 %v24, %v23
    %v40 = vpack.c.bf16 %v26, %v25
    %v41 = vpack.c.bf16 %v28, %v27
    %v42 = vpack.c.bf16 %v30, %v29
    %v43 = vpack.c.bf16 %v32, %v31
    %v44 = vpack.c.bf16 %v34, %v33
    %45 = vmatprep.subr.bf16.mxu0 0
    %46 = vmatpush1.bf16.xpose.msra.mxu0 %v37
    %47 = vmatprep.subr.bf16.mxu0 0
    %48 = vmatpush1.bf16.xpose.msra.mxu0 %v38
    %49 = vmatprep.subr.bf16.mxu0 0
    %50 = vmatpush1.bf16.xpose.msra.mxu0 %v39
    %51 = vmatprep.subr.bf16.mxu0 0
    %52 = vmatpush1.bf16.xpose.msra.mxu0 %v40
    %53 = vmatprep.subr.bf16.mxu0 0
    %54 = vmatpush1.bf16.xpose.msra.mxu0 %v41
    %55 = vmatprep.subr.bf16.mxu0 0
    %56 = vmatpush1.bf16.xpose.msra.mxu0 %v42
    %57 = vmatprep.subr.bf16.mxu0 0
    %58 = vmatpush1.bf16.xpose.msra.mxu0 %v43
    %59 = vmatprep.subr.bf16.mxu0 0
    %60 = vmatpush1.bf16.xpose.msra.mxu0 %v44
    %61 = vmatprep.subr.bf16.mxu0 0
    %62 = vmatpush1.bf16.xpose.msra.mxu0 0
    %63 = vmatprep.subr.bf16.mxu0 0
    %64 = vmatpush1.bf16.xpose.msra.mxu0 0
    %65 = vmatprep.subr.bf16.mxu0 0
    %66 = vmatpush1.bf16.xpose.msra.mxu0 0
    %67 = vmatprep.subr.bf16.mxu0 0
    %68 = vmatpush1.bf16.xpose.msra.mxu0 0
    %69 = vmatprep.subr.bf16.mxu0 0
    %70 = vmatpush1.bf16.xpose.msra.mxu0 0
    %71 = vmatprep.subr.bf16.mxu0 0
    %72 = vmatpush1.bf16.xpose.msra.mxu0 0
    %73 = vmatprep.subr.bf16.mxu0 0
    %74 = vmatpush1.bf16.xpose.msra.mxu0 0
    %75 = vmatprep.subr.bf16.mxu0 0
    %76 = vmatpush1.bf16.xpose.msra.mxu0 0
    %77 = vmatprep.mubr.bf16.mxu0 0
    %78 = vmatmul.mubr.bf16.gmra.mrb[0].mxu0 %v35
    %v79 = vpop.f32.mrb[0].mxu0
    %v80 = vadd.f32 0.0, %v79
    %v81 = vpop.f32.mrb[0].mxu0
    %v82 = vpop.f32.mrb[0].mxu0
    %v83 = vadd.f32 0.0, %v82
    %v84 = vpop.f32.mrb[0].mxu0
    %85 = vmatprep.mubr.bf16.mxu0 0
    %86 = vmatmul.mubr.bf16.gmra.mrb[0].mxu0 %v36
    %v87 = vpop.f32.mrb[0].mxu0
    %v88 = vadd.f32 0.0, %v87
    %v89 = vpop.f32.mrb[0].mxu0
    %v90 = vpop.f32.mrb[0].mxu0
    %v91 = vadd.f32 0.0, %v90
    %v92 = vpop.f32.mrb[0].mxu0
    %93 = vdwg.mxu0
    %v94 = vmul.f32 %v19, %v19
    %v95 = vmul.f32 %v20, %v20
    %v96 = vmul.f32 %v21, %v21
    %v97 = vmul.f32 %v22, %v22
    %v98 = vmul.f32 %v23, %v23
    %v99 = vmul.f32 %v24, %v24
    %v100 = vmul.f32 %v25, %v25
    %v101 = vmul.f32 %v26, %v26
    %v102 = vmul.f32 %v27, %v27
    %v103 = vmul.f32 %v28, %v28
    %v104 = vmul.f32 %v29, %v29
    %v105 = vmul.f32 %v30, %v30
    %v106 = vmul.f32 %v31, %v31
    %v107 = vmul.f32 %v32, %v32
    %v108 = vmul.f32 %v33, %v33
    %v109 = vmul.f32 %v34, %v34
    %110 = vmatprep.subr.mxu0 0.0
    %111 = vmatpush1.xpose.msra.mxu0 %v94
    %112 = vmatprep.subr.mxu0 0.0
    %113 = vmatpush1.xpose.msra.mxu0 %v95
    %114 = vmatprep.subr.mxu0 0.0
    %115 = vmatpush1.xpose.msra.mxu0 %v96
    %116 = vmatprep.subr.mxu0 0.0
    %117 = vmatpush1.xpose.msra.mxu0 %v97
    %118 = vmatprep.subr.mxu0 0.0
    %119 = vmatpush1.xpose.msra.mxu0 %v98
    %120 = vmatprep.subr.mxu0 0.0
    %121 = vmatpush1.xpose.msra.mxu0 %v99
    %122 = vmatprep.subr.mxu0 0.0
    %123 = vmatpush1.xpose.msra.mxu0 %v100
    %124 = vmatprep.subr.mxu0 0.0
    %125 = vmatpush1.xpose.msra.mxu0 %v101
    %126 = vmatprep.subr.mxu0 0.0
    %127 = vmatpush1.xpose.msra.mxu0 %v102
    %128 = vmatprep.subr.mxu0 0.0
    %129 = vmatpush1.xpose.msra.mxu0 %v103
    %130 = vmatprep.subr.mxu0 0.0
    %131 = vmatpush1.xpose.msra.mxu0 %v104
    %132 = vmatprep.subr.mxu0 0.0
    %133 = vmatpush1.xpose.msra.mxu0 %v105
    %134 = vmatprep.subr.mxu0 0.0
    %135 = vmatpush1.xpose.msra.mxu0 %v106
    %136 = vmatprep.subr.mxu0 0.0
    %137 = vmatpush1.xpose.msra.mxu0 %v107
    %138 = vmatprep.subr.mxu0 0.0
    %139 = vmatpush1.xpose.msra.mxu0 %v108
    %140 = vmatprep.subr.mxu0 0.0
    %141 = vmatpush1.xpose.msra.mxu0 %v109
    %142 = vmatprep.subr.mxu0 0.0
    %143 = vmatpush1.xpose.msra.mxu0 0.0
    %144 = vmatprep.subr.mxu0 0.0
    %145 = vmatpush1.xpose.msra.mxu0 0.0
    %146 = vmatprep.subr.mxu0 0.0
    %147 = vmatpush1.xpose.msra.mxu0 0.0
    %148 = vmatprep.subr.mxu0 0.0
    %149 = vmatpush1.xpose.msra.mxu0 0.0
    %150 = vmatprep.subr.mxu0 0.0
    %151 = vmatpush1.xpose.msra.mxu0 0.0
    %152 = vmatprep.subr.mxu0 0.0
    %153 = vmatpush1.xpose.msra.mxu0 0.0
    %154 = vmatprep.subr.mxu0 0.0
    %155 = vmatpush1.xpose.msra.mxu0 0.0
    %156 = vmatprep.subr.mxu0 0.0
    %157 = vmatpush1.xpose.msra.mxu0 0.0
    %158 = vmatprep.subr.mxu0 0.0
    %159 = vmatpush1.xpose.msra.mxu0 0.0
    %160 = vmatprep.subr.mxu0 0.0
    %161 = vmatpush1.xpose.msra.mxu0 0.0
    %162 = vmatprep.subr.mxu0 0.0
    %163 = vmatpush1.xpose.msra.mxu0 0.0
    %164 = vmatprep.subr.mxu0 0.0
    %165 = vmatpush1.xpose.msra.mxu0 0.0
    %166 = vmatprep.subr.mxu0 0.0
    %167 = vmatpush1.xpose.msra.mxu0 0.0
    %168 = vmatprep.subr.mxu0 0.0
    %169 = vmatpush1.xpose.msra.mxu0 0.0
    %170 = vmatprep.subr.mxu0 0.0
    %171 = vmatpush1.xpose.msra.mxu0 0.0
    %172 = vmatprep.subr.mxu0 0.0
    %173 = vmatpush1.xpose.msra.mxu0 0.0
    %174 = vmatprep.mubr.f32.mxu0 0.0
    %175 = vmatmul.mubr.f32.gmra.mrb[0].mxu0 1.0
    %v176 = vpop.f32.mrb[0].mxu0
    %v177 = vadd.f32 0.0, %v176
    %v178 = vpop.f32.mrb[0].mxu0
    %179 = vdwg.mxu0
    %v180 = vmul.f32 %v80, 2.0
    %v181 = vmul.f32 %v83, 2.0
    %v182 = vmul.f32 %v88, 2.0
    %v183 = vmul.f32 %v91, 2.0
    %v184 = vlaneseq
    %v185 = vshrl.u32 %v184, 7
    %v186 = vsub.s32 0, %v185
    %v187 = vrot.slane %v177, %v186
    %v188 = vsub.f32 %v187, %v180
    %v189 = vsub.f32 %v187, %v181
    %v190 = vsub.f32 %v187, %v182
    %v191 = vsub.f32 %v187, %v183
    %v192 = vlaneseq
    %v193 = vand.u32 %v192, 127
    %194 = vmin.xlane.f32.xlu0 %v188
    %v195 = vpop.xlane.xlu0 %194
    %196 = vmin.xlane.f32.xlu0 %v189
    %v197 = vpop.xlane.xlu0 %196
    %198 = vmin.xlane.f32.xlu0 %v190
    %v199 = vpop.xlane.xlu0 %198
    %200 = vmin.xlane.f32.xlu0 %v191
    %v201 = vpop.xlane.xlu0 %200
    %vm202 = vcmp.le.f32.partialorder %v188, %v195
    %vm203 = vcmp.le.f32.partialorder %v189, %v197
    %vm204 = vcmp.le.f32.partialorder %v190, %v199
    %vm205 = vcmp.le.f32.partialorder %v191, %v201
    %v206 = vsel %vm202, %v193, 128
    %v207 = vsel %vm203, %v193, 128
    %v208 = vsel %vm204, %v193, 128
    %v209 = vsel %vm205, %v193, 128
    %v210 = vand.u32 %v206, 65535
    %v211 = vshra.s32 %v206, 16
    %v212 = vcvt.s32.f32 %v210
    %v213 = vcvt.s32.f32 %v211
    %214 = vmin.xlane.f32.xlu0 %v213
    %v215 = vpop.xlane.xlu0 %214
    %vm216 = vcmp.eq.f32.partialorder %v213, %v215
    %v217 = vsel %vm216, %v212, inf
    %218 = vmin.xlane.f32.xlu0 %v217
    %v219 = vpop.xlane.xlu0 %218
    %v220 = vcvt.f32.s32 %v219
    %v221 = vcvt.f32.s32 %v215
    %v222 = vshll.u32 %v221, 16
    %v223 = vadd.s32 %v222, %v220
    %v224 = vand.u32 %v207, 65535
    %v225 = vshra.s32 %v207, 16
    %v226 = vcvt.s32.f32 %v224
    %v227 = vcvt.s32.f32 %v225
    %228 = vmin.xlane.f32.xlu0 %v227
    %v229 = vpop.xlane.xlu0 %228
    %vm230 = vcmp.eq.f32.partialorder %v227, %v229
    %v231 = vsel %vm230, %v226, inf
    %232 = vmin.xlane.f32.xlu0 %v231
    %v233 = vpop.xlane.xlu0 %232
    %v234 = vcvt.f32.s32 %v233
    %v235 = vcvt.f32.s32 %v229
    %v236 = vshll.u32 %v235, 16
    %v237 = vadd.s32 %v236, %v234
    %v238 = vand.u32 %v208, 65535
    %v239 = vshra.s32 %v208, 16
    %v240 = vcvt.s32.f32 %v238
    %v241 = vcvt.s32.f32 %v239
    %242 = vmin.xlane.f32.xlu0 %v241
    %v243 = vpop.xlane.xlu0 %242
    %vm244 = vcmp.eq.f32.partialorder %v241, %v243
    %v245 = vsel %vm244, %v240, inf
    %246 = vmin.xlane.f32.xlu0 %v245
    %v247 = vpop.xlane.xlu0 %246
    %v248 = vcvt.f32.s32 %v247
    %v249 = vcvt.f32.s32 %v243
    %v250 = vshll.u32 %v249, 16
    %v251 = vadd.s32 %v250, %v248
    %v252 = vand.u32 %v209, 65535
    %v253 = vshra.s32 %v209, 16
    %v254 = vcvt.s32.f32 %v252
    %v255 = vcvt.s32.f32 %v253
    %256 = vmin.xlane.f32.xlu0 %v255
    %v257 = vpop.xlane.xlu0 %256
    %vm258 = vcmp.eq.f32.partialorder %v255, %v257
    %v259 = vsel %vm258, %v254, inf
    %260 = vmin.xlane.f32.xlu0 %v259
    %v261 = vpop.xlane.xlu0 %260
    %v262 = vcvt.f32.s32 %v261
    %v263 = vcvt.f32.s32 %v257
    %v264 = vshll.u32 %v263, 16
    %v265 = vadd.s32 %v264, %v262
    %vm266 = vcmp.eq.s32.totalorder %v193, %v223
    %vm267 = vcmp.eq.s32.totalorder %v193, %v237
    %vm268 = vcmp.eq.s32.totalorder %v193, %v251
    %vm269 = vcmp.eq.s32.totalorder %v193, %v265
    %v270 = vsel %vm266, 1, 0
    %v271 = vsel %vm267, 1, 0
    %v272 = vsel %vm268, 1, 0
    %v273 = vsel %vm269, 1, 0
    %v274 = vcvt.s32.f32 %v270
    %v275 = vcvt.s32.f32 %v271
    %v276 = vcvt.s32.f32 %v272
    %v277 = vcvt.s32.f32 %v273
    %278 = vmatprep.subr.mxu0 0.0
    %279 = vmatpush1.msra.mxu0 %v19
    %280 = vmatprep.subr.mxu0 0.0
    %281 = vmatpush1.msra.mxu0 %v20
    %282 = vmatprep.subr.mxu0 0.0
    %283 = vmatpush1.msra.mxu0 %v21
    %284 = vmatprep.subr.mxu0 0.0
    %285 = vmatpush1.msra.mxu0 %v22
    %286 = vmatprep.subr.mxu0 0.0
    %287 = vmatpush1.msra.mxu0 %v23
    %288 = vmatprep.subr.mxu0 0.0
    %289 = vmatpush1.msra.mxu0 %v24
    %290 = vmatprep.subr.mxu0 0.0
    %291 = vmatpush1.msra.mxu0 %v25
    %292 = vmatprep.subr.mxu0 0.0
    %293 = vmatpush1.msra.mxu0 %v26
    %294 = vmatprep.subr.mxu0 0.0
    %295 = vmatpush1.msra.mxu0 %v27
    %296 = vmatprep.subr.mxu0 0.0
    %297 = vmatpush1.msra.mxu0 %v28
    %298 = vmatprep.subr.mxu0 0.0
    %299 = vmatpush1.msra.mxu0 %v29
    %300 = vmatprep.subr.mxu0 0.0
    %301 = vmatpush1.msra.mxu0 %v30
    %302 = vmatprep.subr.mxu0 0.0
    %303 = vmatpush1.msra.mxu0 %v31
    %304 = vmatprep.subr.mxu0 0.0
    %305 = vmatpush1.msra.mxu0 %v32
    %306 = vmatprep.subr.mxu0 0.0
    %307 = vmatpush1.msra.mxu0 %v33
    %308 = vmatprep.subr.mxu0 0.0
    %309 = vmatpush1.msra.mxu0 %v34
    %310 = vmatprep.subr.mxu0 0.0
    %311 = vmatpush1.msra.mxu0 0.0
    %312 = vmatprep.subr.mxu0 0.0
    %313 = vmatpush1.msra.mxu0 0.0
    %314 = vmatprep.subr.mxu0 0.0
    %315 = vmatpush1.msra.mxu0 0.0
    %316 = vmatprep.subr.mxu0 0.0
    %317 = vmatpush1.msra.mxu0 0.0
    %318 = vmatprep.subr.mxu0 0.0
    %319 = vmatpush1.msra.mxu0 0.0
    %320 = vmatprep.subr.mxu0 0.0
    %321 = vmatpush1.msra.mxu0 0.0
    %322 = vmatprep.subr.mxu0 0.0
    %323 = vmatpush1.msra.mxu0 0.0
    %324 = vmatprep.subr.mxu0 0.0
    %325 = vmatpush1.msra.mxu0 0.0
    %326 = vmatprep.subr.mxu0 0.0
    %327 = vmatpush1.msra.mxu0 0.0
    %328 = vmatprep.subr.mxu0 0.0
    %329 = vmatpush1.msra.mxu0 0.0
    %330 = vmatprep.subr.mxu0 0.0
    %331 = vmatpush1.msra.mxu0 0.0
    %332 = vmatprep.subr.mxu0 0.0
    %333 = vmatpush1.msra.mxu0 0.0
    %334 = vmatprep.subr.mxu0 0.0
    %335 = vmatpush1.msra.mxu0 0.0
    %336 = vmatprep.subr.mxu0 0.0
    %337 = vmatpush1.msra.mxu0 0.0
    %338 = vmatprep.subr.mxu0 0.0
    %339 = vmatpush1.msra.mxu0 0.0
    %340 = vmatprep.subr.mxu0 0.0
    %341 = vmatpush1.msra.mxu0 0.0
    %342 = vmatprep.mubr.f32.mxu0 0.0
    %343 = vmatmul.mubr.f32.gmra.mrb[0].mxu0 %v274
    %v344 = vpop.f32.mrb[0].mxu0
    %v345 = vadd.f32 0.0, %v344
    %v346 = vpop.f32.mrb[0].mxu0
    %347 = vmatprep.mubr.f32.mxu0 0.0
    %348 = vmatmul.mubr.f32.gmra.mrb[0].mxu0 %v275
    %v349 = vpop.f32.mrb[0].mxu0
    %v350 = vadd.f32 0.0, %v349
    %v351 = vpop.f32.mrb[0].mxu0
    %352 = vmatprep.mubr.f32.mxu0 0.0
    %353 = vmatmul.mubr.f32.gmra.mrb[0].mxu0 %v276
    %v354 = vpop.f32.mrb[0].mxu0
    %v355 = vadd.f32 0.0, %v354
    %v356 = vpop.f32.mrb[0].mxu0
    %357 = vmatprep.mubr.f32.mxu0 0.0
    %358 = vmatmul.mubr.f32.gmra.mrb[0].mxu0 %v277
    %v359 = vpop.f32.mrb[0].mxu0
    %v360 = vadd.f32 0.0, %v359
    %v361 = vpop.f32.mrb[0].mxu0
    %362 = vdwg.mxu0
    %363 = vst [vmem:[%s2] sm:$0xff] %v345
    %364 = vst [vmem:[%s2 + $0x8] sm:$0xff] %v350
    %365 = vst [vmem:[%s2 + $0x10] sm:$0xff] %v355
    %366 = vst [vmem:[%s2 + $0x18] sm:$0xff] %v360
    %v367 = vsub.f32 %v345, %v15
    %v368 = vsub.f32 %v350, %v16
    %v369 = vsub.f32 %v355, %v17
    %v370 = vsub.f32 %v360, %v18
    %v371 = vmul.f32 %v367, %v367
    %v372 = vmul.f32 %v368, %v368
    %v373 = vmul.f32 %v369, %v369
    %v374 = vmul.f32 %v370, %v370
    %v375 = vadd.f32 %v371, %v372
    %v376 = vadd.f32 %v375, %v373
    %v377 = vadd.f32 %v376, %v374
    %378 = vadd.xlane.f32.xlu0 %v377
    %v379 = vpop.xlane.xlu0 %378
    %v380 = vrot.slane %v379, 4
    %v381 = vadd.f32 %v379, %v380
    %v382 = vrot.slane %v381, 2
    %v383 = vadd.f32 %v381, %v382
    %v384 = vrot.slane %v383, 1
    %v385 = vadd.f32 %v383, %v384
    %s386 = vtos %v385
    %v387 = vrcp.pop 4096.0
    %s388 = vtos %v387
    %s389 = smul.f32 %s386, %s388
    %s390 = smul.f32 %s389, 0.25
    %s391 = scalar_lea.smem [#allocation2], 0
    %392 = sst [smem:[%s391]] %s390
    %s393 = scalar_lea.smem [#allocation2], 1
    %394 = sst [smem:[%s393]] %s389
    %v395 = vadd.f32 %v274, %v275
    %v396 = vadd.f32 %v395, %v276
    %v397 = vadd.f32 %v396, %v277
    %v398 = vrot.slane %v397, 4
    %v399 = vadd.f32 %v397, %v398
    %v400 = vrot.slane %v399, 2
    %v401 = vadd.f32 %v399, %v400
    %v402 = vrot.slane %v401, 1
    %v403 = vadd.f32 %v401, %v402
    %v404 = vrcp.pop 32.0
    %v405 = vmul.f32 %v403, %v404
    %v406 = vadd.f32 %v405, 1e-10
    %v407 = vlog2.pop %v406
    %v408 = vmul.f32 %v407, 0.6931472
    %v409 = vmul.f32 %v405, %v408
    %410 = vadd.xlane.f32.xlu0 %v409
    %v411 = vpop.xlane.xlu0 %410
    %s412 = vtos %v411
    %s413 = ssub.f32 0.0, %s412
    %v414 = vstv %s413
    %v415 = vmul.f32 %v414, 1.442695
    %v416 = vpow.pop %v415
    %s417 = vtos %v416
    %s418 = scalar_lea.smem [#allocation2], 2
    %419 = sst [smem:[%s418]] %s417
    // Predicated region
    $region10: #{model_forward.11} parent=1 // pred_check
      _
    $region11: #{model_forward.11} parent=1 // pred_check_branch
      %421 = sbr.rel (0) target = $region13
    $region12: #{model_forward.11} parent=1 // pred_region
      _
    $region13: #{model_forward.11} parent=1 // pred_fallthru
      _
    // Predicated region
    $region14: #{model_forward.11} parent=1 // pred_check
      _
    $region15: #{model_forward.11} parent=1 // pred_check_branch
      %423 = sbr.rel (0) target = $region17
    $region16: #{model_forward.11} parent=1 // pred_region
      %s425 = ssub.s32 16, 16
      %426 = vsyncadd [#allocation3], %s425
      %s428 = sshll.u32 %s3, 4
      %s429 = int_to_ptr.vmem [resolvable:$true] %s428
      %431 = dma.smem_to_vmem [#allocation2], 16, %s429, [#allocation3]
    $region17: #{model_forward.11} parent=1 // pred_fallthru
      _
    // Predicated region
    $region18: #{model_forward.11} parent=1 // pred_check
      _
    $region19: #{model_forward.11} parent=1 // pred_check_branch
      %433 = sbr.rel (0) target = $region21
    $region20: #{model_forward.11} parent=1 // pred_region
      _
    $region21: #{model_forward.11} parent=1 // pred_fallthru
      _
    // Predicated region
    $region22: #{model_forward.11} parent=1 // pred_check
      _
    $region23: #{model_forward.11} parent=1 // pred_check_branch
      %435 = sbr.rel (0) target = $region25
    $region24: #{model_forward.11} parent=1 // pred_region
      %436 = dma.done [#allocation3], 16
    $region25: #{model_forward.11} parent=1 // pred_fallthru
      _
    %437 = sfence
    %438 = vsyncpa [#allocation3], 1

// kernel: model_forward.12
$region0: #{model_forward.12}
  #allocation0 [shape = 'u32[]', space=smem, size = 0x4, offset = 0x4, fixed_abs, tag = 'smem constant byte address 0x4 - core index']
  #allocation1 [shape = 'u32[144,128]{1,0:T(1,128)}', space=vmem, size = 0x12000, scoped, tag = 'internal scratch']
  %s0 = inlined_call_operand.vmem [shape: bf16[32,128], index: 0, kind: input, shape index: {}]
  %s1 = inlined_call_operand.vmem [shape: bf16[128,128], index: 1, kind: input, shape index: {}]
  %s2 = inlined_call_operand.vmem [shape: f32[1,128], index: 2, kind: input, shape index: {}]
  %s3 = inlined_call_operand.vmem [shape: f32[32,128], index: 3, kind: input, shape index: {}]
  %s4 = inlined_call_operand.vmem [shape: f32[32,128], index: 4, kind: output, shape index: {}]
  %s5 = sld [smem:[#allocation0]]
  $region26: #{model_forward.12} parent=0
    _
  %s7 = ssub.s32 1, %s5
  %s8 = scalar_select 0, %s7, %s5
  // Predicated region
  $region2: #{model_forward.12} parent=0 // pred_check
    _
  $region3: #{model_forward.12} parent=0 // pred_check_branch
    %10 = sbr.rel (0) target = $region5
  $region4: #{model_forward.12} parent=0 // pred_region
    _
  $region5: #{model_forward.12} parent=0 // pred_fallthru
    _
  // Predicated region
  $region6: #{model_forward.12} parent=0 // pred_check
    _
  $region7: #{model_forward.12} parent=0 // pred_check_branch
    %12 = sbr.rel (0) target = $region9
  $region8: #{model_forward.12} parent=0 // pred_region
    _
  $region9: #{model_forward.12} parent=0 // pred_fallthru
    _
  // Predicated region
  $region10: #{model_forward.12} parent=0 // pred_check
    _
  $region11: #{model_forward.12} parent=0 // pred_check_branch
    %14 = sbr.rel (0) target = $region13
  $region12: #{model_forward.12} parent=0 // pred_region
    _
  $region13: #{model_forward.12} parent=0 // pred_fallthru
    _
  // Predicated region
  $region14: #{model_forward.12} parent=0 // pred_check
    _
  $region15: #{model_forward.12} parent=0 // pred_check_branch
    %16 = sbr.rel (0) target = $region17
  $region16: #{model_forward.12} parent=0 // pred_region
    _
  $region17: #{model_forward.12} parent=0 // pred_fallthru
    _
  %v18 = vld [vmem:[%s0] sm:$0xf]
  %v19 = vld [vmem:[%s0 + $0x4] sm:$0xf]
  %v20 = vld [vmem:[%s0 + $0x8] sm:$0xf]
  %v21 = vld [vmem:[%s0 + $0xc] sm:$0xf]
  %v22 = vld [vmem:[%s1] sm:$0xf]
  %v23 = vld [vmem:[%s1 + $0x4] sm:$0xf]
  %v24 = vld [vmem:[%s1 + $0x8] sm:$0xf]
  %v25 = vld [vmem:[%s1 + $0xc] sm:$0xf]
  %v26 = vld [vmem:[%s1 + $0x10] sm:$0xf]
  %v27 = vld [vmem:[%s1 + $0x14] sm:$0xf]
  %v28 = vld [vmem:[%s1 + $0x18] sm:$0xf]
  %v29 = vld [vmem:[%s1 + $0x1c] sm:$0xf]
  %v30 = vld [vmem:[%s1 + $0x20] sm:$0xf]
  %v31 = vld [vmem:[%s1 + $0x24] sm:$0xf]
  %v32 = vld [vmem:[%s1 + $0x28] sm:$0xf]
  %v33 = vld [vmem:[%s1 + $0x2c] sm:$0xf]
  %v34 = vld [vmem:[%s1 + $0x30] sm:$0xf]
  %v35 = vld [vmem:[%s1 + $0x34] sm:$0xf]
  %v36 = vld [vmem:[%s1 + $0x38] sm:$0xf]
  %v37 = vld [vmem:[%s1 + $0x3c] sm:$0xf]
  %v38 = vld [vmem:[%s2] sm:$0x1]
  %v40 = vlaneseq
  %v41 = vshrl.u32 %v40, 7
  %v42 = vsub.s32 0, %v41
  %v43 = vrot.slane %v38, %v42
  %v49 = vunpack.c.l.b16 %v18
  %v50 = vunpack.c.l.b16 %v19
  %v51 = vunpack.c.l.b16 %v20
  %v52 = vunpack.c.l.b16 %v21
  %v53 = vpack.c.b16 %v50, %v49
  %v54 = vpack.c.b16 %v52, %v51
  %v73 = vunpack.c.l.b16 %v22
  %v74 = vunpack.c.l.b16 %v23
  %v75 = vunpack.c.l.b16 %v24
  %v76 = vunpack.c.l.b16 %v25
  %v77 = vunpack.c.l.b16 %v26
  %v78 = vunpack.c.l.b16 %v27
  %v79 = vunpack.c.l.b16 %v28
  %v80 = vunpack.c.l.b16 %v29
  %v81 = vunpack.c.l.b16 %v30
  %v82 = vunpack.c.l.b16 %v31
  %v83 = vunpack.c.l.b16 %v32
  %v84 = vunpack.c.l.b16 %v33
  %v85 = vunpack.c.l.b16 %v34
  %v86 = vunpack.c.l.b16 %v35
  %v87 = vunpack.c.l.b16 %v36
  %v88 = vunpack.c.l.b16 %v37
  %v89 = vpack.c.b16 %v74, %v73
  %v90 = vpack.c.b16 %v76, %v75
  %v91 = vpack.c.b16 %v78, %v77
  %v92 = vpack.c.b16 %v80, %v79
  %v93 = vpack.c.b16 %v82, %v81
  %v94 = vpack.c.b16 %v84, %v83
  %v95 = vpack.c.b16 %v86, %v85
  %v96 = vpack.c.b16 %v88, %v87
  %105 = vmatprep.subr.bf16.mxu0 0
  %106 = vmatpush1.bf16.msra.mxu0 %v89
  %107 = vmatprep.subr.bf16.mxu0 0
  %108 = vmatpush1.bf16.msra.mxu0 %v90
  %109 = vmatprep.subr.bf16.mxu0 0
  %110 = vmatpush1.bf16.msra.mxu0 %v91
  %111 = vmatprep.subr.bf16.mxu0 0
  %112 = vmatpush1.bf16.msra.mxu0 %v92
  %113 = vmatprep.subr.bf16.mxu0 0
  %114 = vmatpush1.bf16.msra.mxu0 %v93
  %115 = vmatprep.subr.bf16.mxu0 0
  %116 = vmatpush1.bf16.msra.mxu0 %v94
  %117 = vmatprep.subr.bf16.mxu0 0
  %118 = vmatpush1.bf16.msra.mxu0 %v95
  %119 = vmatprep.subr.bf16.mxu0 0
  %120 = vmatpush1.bf16.msra.mxu0 %v96
  %121 = vmatprep.subr.bf16.mxu0 0
  %122 = vmatpush1.bf16.msra.mxu0 0
  %123 = vmatprep.subr.bf16.mxu0 0
  %124 = vmatpush1.bf16.msra.mxu0 0
  %125 = vmatprep.subr.bf16.mxu0 0
  %126 = vmatpush1.bf16.msra.mxu0 0
  %127 = vmatprep.subr.bf16.mxu0 0
  %128 = vmatpush1.bf16.msra.mxu0 0
  %129 = vmatprep.subr.bf16.mxu0 0
  %130 = vmatpush1.bf16.msra.mxu0 0
  %131 = vmatprep.subr.bf16.mxu0 0
  %132 = vmatpush1.bf16.msra.mxu0 0
  %133 = vmatprep.subr.bf16.mxu0 0
  %134 = vmatpush1.bf16.msra.mxu0 0
  %135 = vmatprep.subr.bf16.mxu0 0
  %136 = vmatpush1.bf16.msra.mxu0 0
  %137 = vmatprep.mubr.bf16.mxu0 0
  %138 = vmatmul.mubr.bf16.gmra.mrb[0].mxu0 %v53
  %v139 = vpop.f32.mrb[0].mxu0
  %v140 = vadd.f32 %v43, %v139
  %v141 = vpop.f32.mrb[0].mxu0
  %v142 = vpop.f32.mrb[0].mxu0
  %v143 = vadd.f32 %v43, %v142
  %v144 = vpop.f32.mrb[0].mxu0
  %145 = vmatprep.mubr.bf16.mxu0 0
  %146 = vmatmul.mubr.bf16.gmra.mrb[0].mxu0 %v54
  %v147 = vpop.f32.mrb[0].mxu0
  %v148 = vadd.f32 %v43, %v147
  %v149 = vpop.f32.mrb[0].mxu0
  %v150 = vpop.f32.mrb[0].mxu0
  %v151 = vadd.f32 %v43, %v150
  %v152 = vpop.f32.mrb[0].mxu0
  %153 = vdwg.mxu0
  %v154 = vld [vmem:[%s3] sm:$0xff]
  %v155 = vld [vmem:[%s3 + $0x8] sm:$0xff]
  %v156 = vld [vmem:[%s3 + $0x10] sm:$0xff]
  %v157 = vld [vmem:[%s3 + $0x18] sm:$0xff]
  %v158 = vadd.f32 %v140, %v154
  %v159 = vadd.f32 %v143, %v155
  %v160 = vadd.f32 %v148, %v156
  %v161 = vadd.f32 %v151, %v157
  %v162 = vmax.f32 %v158, 0.0
  %v163 = vmax.f32 %v159, 0.0
  %v164 = vmax.f32 %v160, 0.0
  %v165 = vmax.f32 %v161, 0.0
  %166 = vst [vmem:[%s4] sm:$0xff] %v162
  %167 = vst [vmem:[%s4 + $0x8] sm:$0xff] %v163
  %168 = vst [vmem:[%s4 + $0x10] sm:$0xff] %v164
  %169 = vst [vmem:[%s4 + $0x18] sm:$0xff] %v165
  // Predicated region
  $region18: #{model_forward.12} parent=0 // pred_check
    _
  $region19: #{model_forward.12} parent=0 // pred_check_branch
    %171 = sbr.rel (0) target = $region21
  $region20: #{model_forward.12} parent=0 // pred_region
    _
  $region21: #{model_forward.12} parent=0 // pred_fallthru
    _
  // Predicated region
  $region22: #{model_forward.12} parent=0 // pred_check
    _
  $region23: #{model_forward.12} parent=0 // pred_check_branch
    %173 = sbr.rel (0) target = $region25
  $region24: #{model_forward.12} parent=0 // pred_region
    _
  $region25: #{model_forward.12} parent=0 // pred_fallthru
    _

// kernel: tile.13
$region0: #{tile.13}
  #allocation0 [shape = 's32[1]{0}', space=sflag, size = 0x4, scoped, tag = 'scoped memory for tile.13']
  %s0 = inlined_call_operand.vmem [shape: f32[128], index: 0, kind: input, shape index: {}]
  %s1 = inlined_call_operand.vmem [shape: f32[4,128], index: 1, kind: output, shape index: {}]
  // Predicated region
  $region2: #{tile.13} parent=0 // pred_check
    _
  $region3: #{tile.13} parent=0 // pred_check_branch
    %3 = sbr.rel (0) target = $region5
  $region4: #{tile.13} parent=0 // pred_region
    _
  $region5: #{tile.13} parent=0 // pred_fallthru
    _
  %v4 = vld [vmem:[%s0] ss:$0 sm:$0xff]
  %5 = vst [vmem:[%s1] sm:$0xf] %v4

// kernel: model_forward.13
$region0: #{model_forward.13}
  #allocation0 [shape = 'u32[]', space=smem, size = 0x4, offset = 0x4, fixed_abs, tag = 'smem constant byte address 0x4 - core index']
  #allocation1 [shape = 'u32[144,128]{1,0:T(1,128)}', space=vmem, size = 0x12000, scoped, tag = 'internal scratch']
  %s0 = inlined_call_operand.vmem [shape: bf16[32,1152], index: 0, kind: input, shape index: {}]
  %s1 = inlined_call_operand.vmem [shape: bf16[1152,128], index: 1, kind: input, shape index: {}]
  %s2 = inlined_call_operand.vmem [shape: f32[1,128], index: 2, kind: input, shape index: {}]
  %s3 = inlined_call_operand.vmem [shape: f32[32,128], index: 3, kind: input, shape index: {}]
  %s4 = inlined_call_operand.vmem [shape: f32[32,128], index: 4, kind: output, shape index: {}]
  %s5 = sld [smem:[#allocation0]]
  $region26: #{model_forward.13} parent=0
    _
  %s7 = ssub.s32 1, %s5
  %s8 = scalar_select 0, %s7, %s5
  // Predicated region
  $region2: #{model_forward.13} parent=0 // pred_check
    _
  $region3: #{model_forward.13} parent=0 // pred_check_branch
    %10 = sbr.rel (0) target = $region5
  $region4: #{model_forward.13} parent=0 // pred_region
    _
  $region5: #{model_forward.13} parent=0 // pred_fallthru
    _
  // Predicated region
  $region6: #{model_forward.13} parent=0 // pred_check
    _
  $region7: #{model_forward.13} parent=0 // pred_check_branch
    %12 = sbr.rel (0) target = $region9
  $region8: #{model_forward.13} parent=0 // pred_region
    _
  $region9: #{model_forward.13} parent=0 // pred_fallthru
    _
  // Predicated region
  $region10: #{model_forward.13} parent=0 // pred_check
    _
  $region11: #{model_forward.13} parent=0 // pred_check_branch
    %14 = sbr.rel (0) target = $region13
  $region12: #{model_forward.13} parent=0 // pred_region
    _
  $region13: #{model_forward.13} parent=0 // pred_fallthru
    _
  // Predicated region
  $region14: #{model_forward.13} parent=0 // pred_check
    _
  $region15: #{model_forward.13} parent=0 // pred_check_branch
    %16 = sbr.rel (0) target = $region17
  $region16: #{model_forward.13} parent=0 // pred_region
    _
  $region17: #{model_forward.13} parent=0 // pred_fallthru
    _
  %v18 = vld [vmem:[%s0] sm:$0xff]
  %v19 = vld [vmem:[%s0 + $0x8] sm:$0xff]
  %v20 = vld [vmem:[%s0 + $0x10] sm:$0xff]
  %v21 = vld [vmem:[%s0 + $0x18] sm:$0xff]
  %v22 = vld [vmem:[%s0 + $0x20] sm:$0xf]
  %v23 = vld [vmem:[%s0 + $0x24] sm:$0xff]
  %v24 = vld [vmem:[%s0 + $0x2c] sm:$0xff]
  %v25 = vld [vmem:[%s0 + $0x34] sm:$0xff]
  %v26 = vld [vmem:[%s0 + $0x3c] sm:$0xff]
  %v27 = vld [vmem:[%s0 + $0x44] sm:$0xf]
  %v28 = vld [vmem:[%s0 + $0x48] sm:$0xff]
  %v29 = vld [vmem:[%s0 + $0x50] sm:$0xff]
  %v30 = vld [vmem:[%s0 + $0x58] sm:$0xff]
  %v31 = vld [vmem:[%s0 + $0x60] sm:$0xff]
  %v32 = vld [vmem:[%s0 + $0x68] sm:$0xf]
  %v33 = vld [vmem:[%s0 + $0x6c] sm:$0xff]
  %v34 = vld [vmem:[%s0 + $0x74] sm:$0xff]
  %v35 = vld [vmem:[%s0 + $0x7c] sm:$0xff]
  %v36 = vld [vmem:[%s0 + $0x84] sm:$0xff]
  %v37 = vld [vmem:[%s0 + $0x8c] sm:$0xf]
  %v38 = vld [vmem:[%s1] sm:$0xf]
  %v39 = vld [vmem:[%s1 + $0x4] sm:$0xf]
  %v40 = vld [vmem:[%s1 + $0x8] sm:$0xf]
  %v41 = vld [vmem:[%s1 + $0xc] sm:$0xf]
  %v42 = vld [vmem:[%s1 + $0x10] sm:$0xf]
  %v43 = vld [vmem:[%s1 + $0x14] sm:$0xf]
  %v44 = vld [vmem:[%s1 + $0x18] sm:$0xf]
  %v45 = vld [vmem:[%s1 + $0x1c] sm:$0xf]
  %v46 = vld [vmem:[%s1 + $0x20] sm:$0xf]
  %v47 = vld [vmem:[%s1 + $0x24] sm:$0xf]
  %v48 = vld [vmem:[%s1 + $0x28] sm:$0xf]
  %v49 = vld [vmem:[%s1 + $0x2c] sm:$0xf]
  %v50 = vld [vmem:[%s1 + $0x30] sm:$0xf]
  %v51 = vld [vmem:[%s1 + $0x34] sm:$0xf]
  %v52 = vld [vmem:[%s1 + $0x38] sm:$0xf]
  %v53 = vld [vmem:[%s1 + $0x3c] sm:$0xf]
  %v54 = vld [vmem:[%s1 + $0x40] sm:$0xf]
  %v55 = vld [vmem:[%s1 + $0x44] sm:$0xf]
  %v56 = vld [vmem:[%s1 + $0x48] sm:$0xf]
  %v57 = vld [vmem:[%s1 + $0x4c] sm:$0xf]
  %v58 = vld [vmem:[%s1 + $0x50] sm:$0xf]
  %v59 = vld [vmem:[%s1 + $0x54] sm:$0xf]
  %v60 = vld [vmem:[%s1 + $0x58] sm:$0xf]
  %v61 = vld [vmem:[%s1 + $0x5c] sm:$0xf]
  %v62 = vld [vmem:[%s1 + $0x60] sm:$0xf]
  %v63 = vld [vmem:[%s1 + $0x64] sm:$0xf]
  %v64 = vld [vmem:[%s1 + $0x68] sm:$0xf]
  %v65 = vld [vmem:[%s1 + $0x6c] sm:$0xf]
  %v66 = vld [vmem:[%s1 + $0x70] sm:$0xf]
  %v67 = vld [vmem:[%s1 + $0x74] sm:$0xf]
  %v68 = vld [vmem:[%s1 + $0x78] sm:$0xf]
  %v69 = vld [vmem:[%s1 + $0x7c] sm:$0xf]
  %v70 = vld [vmem:[%s1 + $0x80] sm:$0xf]
  %v71 = vld [vmem:[%s1 + $0x84] sm:$0xf]
  %v72 = vld [vmem:[%s1 + $0x88] sm:$0xf]
  %v73 = vld [vmem:[%s1 + $0x8c] sm:$0xf]
  %v74 = vld [vmem:[%s1 + $0x90] sm:$0xf]
  %v75 = vld [vmem:[%s1 + $0x94] sm:$0xf]
  %v76 = vld [vmem:[%s1 + $0x98] sm:$0xf]
  %v77 = vld [vmem:[%s1 + $0x9c] sm:$0xf]
  %v78 = vld [vmem:[%s1 + $0xa0] sm:$0xf]
  %v79 = vld [vmem:[%s1 + $0xa4] sm:$0xf]
  %v80 = vld [vmem:[%s1 + $0xa8] sm:$0xf]
  %v81 = vld [vmem:[%s1 + $0xac] sm:$0xf]
  %v82 = vld [vmem:[%s1 + $0xb0] sm:$0xf]
  %v83 = vld [vmem:[%s1 + $0xb4] sm:$0xf]
  %v84 = vld [vmem:[%s1 + $0xb8] sm:$0xf]
  %v85 = vld [vmem:[%s1 + $0xbc] sm:$0xf]
  %v86 = vld [vmem:[%s1 + $0xc0] sm:$0xf]
  %v87 = vld [vmem:[%s1 + $0xc4] sm:$0xf]
  %v88 = vld [vmem:[%s1 + $0xc8] sm:$0xf]
  %v89 = vld [vmem:[%s1 + $0xcc] sm:$0xf]
  %v90 = vld [vmem:[%s1 + $0xd0] sm:$0xf]
  %v91 = vld [vmem:[%s1 + $0xd4] sm:$0xf]
  %v92 = vld [vmem:[%s1 + $0xd8] sm:$0xf]
  %v93 = vld [vmem:[%s1 + $0xdc] sm:$0xf]
  %v94 = vld [vmem:[%s1 + $0xe0] sm:$0xf]
  %v95 = vld [vmem:[%s1 + $0xe4] sm:$0xf]
  %v96 = vld [vmem:[%s1 + $0xe8] sm:$0xf]
  %v97 = vld [vmem:[%s1 + $0xec] sm:$0xf]
  %v98 = vld [vmem:[%s1 + $0xf0] sm:$0xf]
  %v99 = vld [vmem:[%s1 + $0xf4] sm:$0xf]
  %v100 = vld [vmem:[%s1 + $0xf8] sm:$0xf]
  %v101 = vld [vmem:[%s1 + $0xfc] sm:$0xf]
  %v102 = vld [vmem:[%s1 + $0x100] sm:$0xf]
  %v103 = vld [vmem:[%s1 + $0x104] sm:$0xf]
  %v104 = vld [vmem:[%s1 + $0x108] sm:$0xf]
  %v105 = vld [vmem:[%s1 + $0x10c] sm:$0xf]
  %v106 = vld [vmem:[%s1 + $0x110] sm:$0xf]
  %v107 = vld [vmem:[%s1 + $0x114] sm:$0xf]
  %v108 = vld [vmem:[%s1 + $0x118] sm:$0xf]
  %v109 = vld [vmem:[%s1 + $0x11c] sm:$0xf]
  %v110 = vld [vmem:[%s1 + $0x120] sm:$0xf]
  %v111 = vld [vmem:[%s1 + $0x124] sm:$0xf]
  %v112 = vld [vmem:[%s1 + $0x128] sm:$0xf]
  %v113 = vld [vmem:[%s1 + $0x12c] sm:$0xf]
  %v114 = vld [vmem:[%s1 + $0x130] sm:$0xf]
  %v115 = vld [vmem:[%s1 + $0x134] sm:$0xf]
  %v116 = vld [vmem:[%s1 + $0x138] sm:$0xf]
  %v117 = vld [vmem:[%s1 + $0x13c] sm:$0xf]
  %v118 = vld [vmem:[%s1 + $0x140] sm:$0xf]
  %v119 = vld [vmem:[%s1 + $0x144] sm:$0xf]
  %v120 = vld [vmem:[%s1 + $0x148] sm:$0xf]
  %v121 = vld [vmem:[%s1 + $0x14c] sm:$0xf]
  %v122 = vld [vmem:[%s1 + $0x150] sm:$0xf]
  %v123 = vld [vmem:[%s1 + $0x154] sm:$0xf]
  %v124 = vld [vmem:[%s1 + $0x158] sm:$0xf]
  %v125 = vld [vmem:[%s1 + $0x15c] sm:$0xf]
  %v126 = vld [vmem:[%s1 + $0x160] sm:$0xf]
  %v127 = vld [vmem:[%s1 + $0x164] sm:$0xf]
  %v128 = vld [vmem:[%s1 + $0x168] sm:$0xf]
  %v129 = vld [vmem:[%s1 + $0x16c] sm:$0xf]
  %v130 = vld [vmem:[%s1 + $0x170] sm:$0xf]
  %v131 = vld [vmem:[%s1 + $0x174] sm:$0xf]
  %v132 = vld [vmem:[%s1 + $0x178] sm:$0xf]
  %v133 = vld [vmem:[%s1 + $0x17c] sm:$0xf]
  %v134 = vld [vmem:[%s1 + $0x180] sm:$0xf]
  %v135 = vld [vmem:[%s1 + $0x184] sm:$0xf]
  %v136 = vld [vmem:[%s1 + $0x188] sm:$0xf]
  %v137 = vld [vmem:[%s1 + $0x18c] sm:$0xf]
  %v138 = vld [vmem:[%s1 + $0x190] sm:$0xf]
  %v139 = vld [vmem:[%s1 + $0x194] sm:$0xf]
  %v140 = vld [vmem:[%s1 + $0x198] sm:$0xf]
  %v141 = vld [vmem:[%s1 + $0x19c] sm:$0xf]
  %v142 = vld [vmem:[%s1 + $0x1a0] sm:$0xf]
  %v143 = vld [vmem:[%s1 + $0x1a4] sm:$0xf]
  %v144 = vld [vmem:[%s1 + $0x1a8] sm:$0xf]
  %v145 = vld [vmem:[%s1 + $0x1ac] sm:$0xf]
  %v146 = vld [vmem:[%s1 + $0x1b0] sm:$0xf]
  %v147 = vld [vmem:[%s1 + $0x1b4] sm:$0xf]
  %v148 = vld [vmem:[%s1 + $0x1b8] sm:$0xf]
  %v149 = vld [vmem:[%s1 + $0x1bc] sm:$0xf]
  %v150 = vld [vmem:[%s1 + $0x1c0] sm:$0xf]
  %v151 = vld [vmem:[%s1 + $0x1c4] sm:$0xf]
  %v152 = vld [vmem:[%s1 + $0x1c8] sm:$0xf]
  %v153 = vld [vmem:[%s1 + $0x1cc] sm:$0xf]
  %v154 = vld [vmem:[%s1 + $0x1d0] sm:$0xf]
  %v155 = vld [vmem:[%s1 + $0x1d4] sm:$0xf]
  %v156 = vld [vmem:[%s1 + $0x1d8] sm:$0xf]
  %v157 = vld [vmem:[%s1 + $0x1dc] sm:$0xf]
  %v158 = vld [vmem:[%s1 + $0x1e0] sm:$0xf]
  %v159 = vld [vmem:[%s1 + $0x1e4] sm:$0xf]
  %v160 = vld [vmem:[%s1 + $0x1e8] sm:$0xf]
  %v161 = vld [vmem:[%s1 + $0x1ec] sm:$0xf]
  %v162 = vld [vmem:[%s1 + $0x1f0] sm:$0xf]
  %v163 = vld [vmem:[%s1 + $0x1f4] sm:$0xf]
  %v164 = vld [vmem:[%s1 + $0x1f8] sm:$0xf]
  %v165 = vld [vmem:[%s1 + $0x1fc] sm:$0xf]
  %v166 = vld [vmem:[%s1 + $0x200] sm:$0xf]
  %v167 = vld [vmem:[%s1 + $0x204] sm:$0xf]
  %v168 = vld [vmem:[%s1 + $0x208] sm:$0xf]
  %v169 = vld [vmem:[%s1 + $0x20c] sm:$0xf]
  %v170 = vld [vmem:[%s1 + $0x210] sm:$0xf]
  %v171 = vld [vmem:[%s1 + $0x214] sm:$0xf]
  %v172 = vld [vmem:[%s1 + $0x218] sm:$0xf]
  %v173 = vld [vmem:[%s1 + $0x21c] sm:$0xf]
  %v174 = vld [vmem:[%s1 + $0x220] sm:$0xf]
  %v175 = vld [vmem:[%s1 + $0x224] sm:$0xf]
  %v176 = vld [vmem:[%s1 + $0x228] sm:$0xf]
  %v177 = vld [vmem:[%s1 + $0x22c] sm:$0xf]
  %v178 = vld [vmem:[%s1 + $0x230] sm:$0xf]
  %v179 = vld [vmem:[%s1 + $0x234] sm:$0xf]
  %v180 = vld [vmem:[%s1 + $0x238] sm:$0xf]
  %v181 = vld [vmem:[%s1 + $0x23c] sm:$0xf]
  %v182 = vld [vmem:[%s2] sm:$0x1]
  %v184 = vlaneseq
  %v185 = vshrl.u32 %v184, 7
  %v186 = vsub.s32 0, %v185
  %v187 = vrot.slane %v182, %v186
  %v209 = vunpack.c.l.b16 %v18
  %v210 = vunpack.c.h.b16 %v18
  %v211 = vunpack.c.l.b16 %v19
  %v212 = vunpack.c.h.b16 %v19
  %v213 = vunpack.c.l.b16 %v20
  %v214 = vunpack.c.h.b16 %v20
  %v215 = vunpack.c.l.b16 %v21
  %v216 = vunpack.c.h.b16 %v21
  %v217 = vunpack.c.l.b16 %v22
  %v218 = vunpack.c.l.b16 %v23
  %v219 = vunpack.c.h.b16 %v23
  %v220 = vunpack.c.l.b16 %v24
  %v221 = vunpack.c.h.b16 %v24
  %v222 = vunpack.c.l.b16 %v25
  %v223 = vunpack.c.h.b16 %v25
  %v224 = vunpack.c.l.b16 %v26
  %v225 = vunpack.c.h.b16 %v26
  %v226 = vunpack.c.l.b16 %v27
  %v227 = vunpack.c.l.b16 %v28
  %v228 = vunpack.c.h.b16 %v28
  %v229 = vunpack.c.l.b16 %v29
  %v230 = vunpack.c.h.b16 %v29
  %v231 = vunpack.c.l.b16 %v30
  %v232 = vunpack.c.h.b16 %v30
  %v233 = vunpack.c.l.b16 %v31
  %v234 = vunpack.c.h.b16 %v31
  %v235 = vunpack.c.l.b16 %v32
  %v236 = vunpack.c.l.b16 %v33
  %v237 = vunpack.c.h.b16 %v33
  %v238 = vunpack.c.l.b16 %v34
  %v239 = vunpack.c.h.b16 %v34
  %v240 = vunpack.c.l.b16 %v35
  %v241 = vunpack.c.h.b16 %v35
  %v242 = vunpack.c.l.b16 %v36
  %v243 = vunpack.c.h.b16 %v36
  %v244 = vunpack.c.l.b16 %v37
  %v245 = vpack.c.b16 %v218, %v209
  %v246 = vpack.c.b16 %v219, %v210
  %v247 = vpack.c.b16 %v220, %v211
  %v248 = vpack.c.b16 %v221, %v212
  %v249 = vpack.c.b16 %v222, %v213
  %v250 = vpack.c.b16 %v223, %v214
  %v251 = vpack.c.b16 %v224, %v215
  %v252 = vpack.c.b16 %v225, %v216
  %v253 = vpack.c.b16 %v226, %v217
  %v254 = vpack.c.b16 %v236, %v227
  %v255 = vpack.c.b16 %v237, %v228
  %v256 = vpack.c.b16 %v238, %v229
  %v257 = vpack.c.b16 %v239, %v230
  %v258 = vpack.c.b16 %v240, %v231
  %v259 = vpack.c.b16 %v241, %v232
  %v260 = vpack.c.b16 %v242, %v233
  %v261 = vpack.c.b16 %v243, %v234
  %v262 = vpack.c.b16 %v244, %v235
  %v425 = vunpack.c.l.b16 %v38
  %v426 = vunpack.c.l.b16 %v39
  %v427 = vunpack.c.l.b16 %v40
  %v428 = vunpack.c.l.b16 %v41
  %v429 = vunpack.c.l.b16 %v42
  %v430 = vunpack.c.l.b16 %v43
  %v431 = vunpack.c.l.b16 %v44
  %v432 = vunpack.c.l.b16 %v45
  %v433 = vunpack.c.l.b16 %v46
  %v434 = vunpack.c.l.b16 %v47
  %v435 = vunpack.c.l.b16 %v48
  %v436 = vunpack.c.l.b16 %v49
  %v437 = vunpack.c.l.b16 %v50
  %v438 = vunpack.c.l.b16 %v51
  %v439 = vunpack.c.l.b16 %v52
  %v440 = vunpack.c.l.b16 %v53
  %v441 = vunpack.c.l.b16 %v54
  %v442 = vunpack.c.l.b16 %v55
  %v443 = vunpack.c.l.b16 %v56
  %v444 = vunpack.c.l.b16 %v57
  %v445 = vunpack.c.l.b16 %v58
  %v446 = vunpack.c.l.b16 %v59
  %v447 = vunpack.c.l.b16 %v60
  %v448 = vunpack.c.l.b16 %v61
  %v449 = vunpack.c.l.b16 %v62
  %v450 = vunpack.c.l.b16 %v63
  %v451 = vunpack.c.l.b16 %v64
  %v452 = vunpack.c.l.b16 %v65
  %v453 = vunpack.c.l.b16 %v66
  %v454 = vunpack.c.l.b16 %v67
  %v455 = vunpack.c.l.b16 %v68
  %v456 = vunpack.c.l.b16 %v69
  %v457 = vunpack.c.l.b16 %v70
  %v458 = vunpack.c.l.b16 %v71
  %v459 = vunpack.c.l.b16 %v72
  %v460 = vunpack.c.l.b16 %v73
  %v461 = vunpack.c.l.b16 %v74
  %v462 = vunpack.c.l.b16 %v75
  %v463 = vunpack.c.l.b16 %v76
  %v464 = vunpack.c.l.b16 %v77
  %v465 = vunpack.c.l.b16 %v78
  %v466 = vunpack.c.l.b16 %v79
  %v467 = vunpack.c.l.b16 %v80
  %v468 = vunpack.c.l.b16 %v81
  %v469 = vunpack.c.l.b16 %v82
  %v470 = vunpack.c.l.b16 %v83
  %v471 = vunpack.c.l.b16 %v84
  %v472 = vunpack.c.l.b16 %v85
  %v473 = vunpack.c.l.b16 %v86
  %v474 = vunpack.c.l.b16 %v87
  %v475 = vunpack.c.l.b16 %v88
  %v476 = vunpack.c.l.b16 %v89
  %v477 = vunpack.c.l.b16 %v90
  %v478 = vunpack.c.l.b16 %v91
  %v479 = vunpack.c.l.b16 %v92
  %v480 = vunpack.c.l.b16 %v93
  %v481 = vunpack.c.l.b16 %v94
  %v482 = vunpack.c.l.b16 %v95
  %v483 = vunpack.c.l.b16 %v96
  %v484 = vunpack.c.l.b16 %v97
  %v485 = vunpack.c.l.b16 %v98
  %v486 = vunpack.c.l.b16 %v99
  %v487 = vunpack.c.l.b16 %v100
  %v488 = vunpack.c.l.b16 %v101
  %v489 = vunpack.c.l.b16 %v102
  %v490 = vunpack.c.l.b16 %v103
  %v491 = vunpack.c.l.b16 %v104
  %v492 = vunpack.c.l.b16 %v105
  %v493 = vunpack.c.l.b16 %v106
  %v494 = vunpack.c.l.b16 %v107
  %v495 = vunpack.c.l.b16 %v108
  %v496 = vunpack.c.l.b16 %v109
  %v497 = vunpack.c.l.b16 %v110
  %v498 = vunpack.c.l.b16 %v111
  %v499 = vunpack.c.l.b16 %v112
  %v500 = vunpack.c.l.b16 %v113
  %v501 = vunpack.c.l.b16 %v114
  %v502 = vunpack.c.l.b16 %v115
  %v503 = vunpack.c.l.b16 %v116
  %v504 = vunpack.c.l.b16 %v117
  %v505 = vunpack.c.l.b16 %v118
  %v506 = vunpack.c.l.b16 %v119
  %v507 = vunpack.c.l.b16 %v120
  %v508 = vunpack.c.l.b16 %v121
  %v509 = vunpack.c.l.b16 %v122
  %v510 = vunpack.c.l.b16 %v123
  %v511 = vunpack.c.l.b16 %v124
  %v512 = vunpack.c.l.b16 %v125
  %v513 = vunpack.c.l.b16 %v126
  %v514 = vunpack.c.l.b16 %v127
  %v515 = vunpack.c.l.b16 %v128
  %v516 = vunpack.c.l.b16 %v129
  %v517 = vunpack.c.l.b16 %v130
  %v518 = vunpack.c.l.b16 %v131
  %v519 = vunpack.c.l.b16 %v132
  %v520 = vunpack.c.l.b16 %v133
  %v521 = vunpack.c.l.b16 %v134
  %v522 = vunpack.c.l.b16 %v135
  %v523 = vunpack.c.l.b16 %v136
  %v524 = vunpack.c.l.b16 %v137
  %v525 = vunpack.c.l.b16 %v138
  %v526 = vunpack.c.l.b16 %v139
  %v527 = vunpack.c.l.b16 %v140
  %v528 = vunpack.c.l.b16 %v141
  %v529 = vunpack.c.l.b16 %v142
  %v530 = vunpack.c.l.b16 %v143
  %v531 = vunpack.c.l.b16 %v144
  %v532 = vunpack.c.l.b16 %v145
  %v533 = vunpack.c.l.b16 %v146
  %v534 = vunpack.c.l.b16 %v147
  %v535 = vunpack.c.l.b16 %v148
  %v536 = vunpack.c.l.b16 %v149
  %v537 = vunpack.c.l.b16 %v150
  %v538 = vunpack.c.l.b16 %v151
  %v539 = vunpack.c.l.b16 %v152
  %v540 = vunpack.c.l.b16 %v153
  %v541 = vunpack.c.l.b16 %v154
  %v542 = vunpack.c.l.b16 %v155
  %v543 = vunpack.c.l.b16 %v156
  %v544 = vunpack.c.l.b16 %v157
  %v545 = vunpack.c.l.b16 %v158
  %v546 = vunpack.c.l.b16 %v159
  %v547 = vunpack.c.l.b16 %v160
  %v548 = vunpack.c.l.b16 %v161
  %v549 = vunpack.c.l.b16 %v162
  %v550 = vunpack.c.l.b16 %v163
  %v551 = vunpack.c.l.b16 %v164
  %v552 = vunpack.c.l.b16 %v165
  %v553 = vunpack.c.l.b16 %v166
  %v554 = vunpack.c.l.b16 %v167
  %v555 = vunpack.c.l.b16 %v168
  %v556 = vunpack.c.l.b16 %v169
  %v557 = vunpack.c.l.b16 %v170
  %v558 = vunpack.c.l.b16 %v171
  %v559 = vunpack.c.l.b16 %v172
  %v560 = vunpack.c.l.b16 %v173
  %v561 = vunpack.c.l.b16 %v174
  %v562 = vunpack.c.l.b16 %v175
  %v563 = vunpack.c.l.b16 %v176
  %v564 = vunpack.c.l.b16 %v177
  %v565 = vunpack.c.l.b16 %v178
  %v566 = vunpack.c.l.b16 %v179
  %v567 = vunpack.c.l.b16 %v180
  %v568 = vunpack.c.l.b16 %v181
  %v569 = vpack.c.b16 %v426, %v425
  %v570 = vpack.c.b16 %v428, %v427
  %v571 = vpack.c.b16 %v430, %v429
  %v572 = vpack.c.b16 %v432, %v431
  %v573 = vpack.c.b16 %v434, %v433
  %v574 = vpack.c.b16 %v436, %v435
  %v575 = vpack.c.b16 %v438, %v437
  %v576 = vpack.c.b16 %v440, %v439
  %v577 = vpack.c.b16 %v442, %v441
  %v578 = vpack.c.b16 %v444, %v443
  %v579 = vpack.c.b16 %v446, %v445
  %v580 = vpack.c.b16 %v448, %v447
  %v581 = vpack.c.b16 %v450, %v449
  %v582 = vpack.c.b16 %v452, %v451
  %v583 = vpack.c.b16 %v454, %v453
  %v584 = vpack.c.b16 %v456, %v455
  %v585 = vpack.c.b16 %v458, %v457
  %v586 = vpack.c.b16 %v460, %v459
  %v587 = vpack.c.b16 %v462, %v461
  %v588 = vpack.c.b16 %v464, %v463
  %v589 = vpack.c.b16 %v466, %v465
  %v590 = vpack.c.b16 %v468, %v467
  %v591 = vpack.c.b16 %v470, %v469
  %v592 = vpack.c.b16 %v472, %v471
  %v593 = vpack.c.b16 %v474, %v473
  %v594 = vpack.c.b16 %v476, %v475
  %v595 = vpack.c.b16 %v478, %v477
  %v596 = vpack.c.b16 %v480, %v479
  %v597 = vpack.c.b16 %v482, %v481
  %v598 = vpack.c.b16 %v484, %v483
  %v599 = vpack.c.b16 %v486, %v485
  %v600 = vpack.c.b16 %v488, %v487
  %v601 = vpack.c.b16 %v490, %v489
  %v602 = vpack.c.b16 %v492, %v491
  %v603 = vpack.c.b16 %v494, %v493
  %v604 = vpack.c.b16 %v496, %v495
  %v605 = vpack.c.b16 %v498, %v497
  %v606 = vpack.c.b16 %v500, %v499
  %v607 = vpack.c.b16 %v502, %v501
  %v608 = vpack.c.b16 %v504, %v503
  %v609 = vpack.c.b16 %v506, %v505
  %v610 = vpack.c.b16 %v508, %v507
  %v611 = vpack.c.b16 %v510, %v509
  %v612 = vpack.c.b16 %v512, %v511
  %v613 = vpack.c.b16 %v514, %v513
  %v614 = vpack.c.b16 %v516, %v515
  %v615 = vpack.c.b16 %v518, %v517
  %v616 = vpack.c.b16 %v520, %v519
  %v617 = vpack.c.b16 %v522, %v521
  %v618 = vpack.c.b16 %v524, %v523
  %v619 = vpack.c.b16 %v526, %v525
  %v620 = vpack.c.b16 %v528, %v527
  %v621 = vpack.c.b16 %v530, %v529
  %v622 = vpack.c.b16 %v532, %v531
  %v623 = vpack.c.b16 %v534, %v533
  %v624 = vpack.c.b16 %v536, %v535
  %v625 = vpack.c.b16 %v538, %v537
  %v626 = vpack.c.b16 %v540, %v539
  %v627 = vpack.c.b16 %v542, %v541
  %v628 = vpack.c.b16 %v544, %v543
  %v629 = vpack.c.b16 %v546, %v545
  %v630 = vpack.c.b16 %v548, %v547
  %v631 = vpack.c.b16 %v550, %v549
  %v632 = vpack.c.b16 %v552, %v551
  %v633 = vpack.c.b16 %v554, %v553
  %v634 = vpack.c.b16 %v556, %v555
  %v635 = vpack.c.b16 %v558, %v557
  %v636 = vpack.c.b16 %v560, %v559
  %v637 = vpack.c.b16 %v562, %v561
  %v638 = vpack.c.b16 %v564, %v563
  %v639 = vpack.c.b16 %v566, %v565
  %v640 = vpack.c.b16 %v568, %v567
  %713 = vmatprep.subr.bf16.mxu0 0
  %714 = vmatpush1.bf16.msra.mxu0 %v569
  %715 = vmatprep.subr.bf16.mxu0 0
  %716 = vmatpush1.bf16.msra.mxu0 %v570
  %717 = vmatprep.subr.bf16.mxu0 0
  %718 = vmatpush1.bf16.msra.mxu0 %v571
  %719 = vmatprep.subr.bf16.mxu0 0
  %720 = vmatpush1.bf16.msra.mxu0 %v572
  %721 = vmatprep.subr.bf16.mxu0 0
  %722 = vmatpush1.bf16.msra.mxu0 %v573
  %723 = vmatprep.subr.bf16.mxu0 0
  %724 = vmatpush1.bf16.msra.mxu0 %v574
  %725 = vmatprep.subr.bf16.mxu0 0
  %726 = vmatpush1.bf16.msra.mxu0 %v575
  %727 = vmatprep.subr.bf16.mxu0 0
  %728 = vmatpush1.bf16.msra.mxu0 %v576
  %729 = vmatprep.subr.bf16.mxu0 0
  %730 = vmatpush1.bf16.msra.mxu0 %v577
  %731 = vmatprep.subr.bf16.mxu0 0
  %732 = vmatpush1.bf16.msra.mxu0 %v578
  %733 = vmatprep.subr.bf16.mxu0 0
  %734 = vmatpush1.bf16.msra.mxu0 %v579
  %735 = vmatprep.subr.bf16.mxu0 0
  %736 = vmatpush1.bf16.msra.mxu0 %v580
  %737 = vmatprep.subr.bf16.mxu0 0
  %738 = vmatpush1.bf16.msra.mxu0 %v581
  %739 = vmatprep.subr.bf16.mxu0 0
  %740 = vmatpush1.bf16.msra.mxu0 %v582
  %741 = vmatprep.subr.bf16.mxu0 0
  %742 = vmatpush1.bf16.msra.mxu0 %v583
  %743 = vmatprep.subr.bf16.mxu0 0
  %744 = vmatpush1.bf16.msra.mxu0 %v584
  %745 = vmatprep.mubr.bf16.mxu0 %v246
  %746 = vmatmul.mubr.bf16.gmra.mrb[0].mxu0 %v245
  %v747 = vpop.f32.mrb[0].mxu0
  %v748 = vadd.f32 %v187, %v747
  %v749 = vpop.f32.mrb[0].mxu0
  %v750 = vpop.f32.mrb[0].mxu0
  %v751 = vadd.f32 %v187, %v750
  %v752 = vpop.f32.mrb[0].mxu0
  %753 = vmatprep.mubr.bf16.mxu0 %v255
  %754 = vmatmul.mubr.bf16.gmra.mrb[0].mxu0 %v254
  %v755 = vpop.f32.mrb[0].mxu0
  %v756 = vadd.f32 %v187, %v755
  %v757 = vpop.f32.mrb[0].mxu0
  %v758 = vpop.f32.mrb[0].mxu0
  %v759 = vadd.f32 %v187, %v758
  %v760 = vpop.f32.mrb[0].mxu0
  %761 = vdwg.mxu0
  %762 = vmatprep.subr.bf16.mxu0 0
  %763 = vmatpush1.bf16.msra.mxu0 %v585
  %764 = vmatprep.subr.bf16.mxu0 0
  %765 = vmatpush1.bf16.msra.mxu0 %v586
  %766 = vmatprep.subr.bf16.mxu0 0
  %767 = vmatpush1.bf16.msra.mxu0 %v587
  %768 = vmatprep.subr.bf16.mxu0 0
  %769 = vmatpush1.bf16.msra.mxu0 %v588
  %770 = vmatprep.subr.bf16.mxu0 0
  %771 = vmatpush1.bf16.msra.mxu0 %v589
  %772 = vmatprep.subr.bf16.mxu0 0
  %773 = vmatpush1.bf16.msra.mxu0 %v590
  %774 = vmatprep.subr.bf16.mxu0 0
  %775 = vmatpush1.bf16.msra.mxu0 %v591
  %776 = vmatprep.subr.bf16.mxu0 0
  %777 = vmatpush1.bf16.msra.mxu0 %v592
  %778 = vmatprep.subr.bf16.mxu0 0
  %779 = vmatpush1.bf16.msra.mxu0 %v593
  %780 = vmatprep.subr.bf16.mxu0 0
  %781 = vmatpush1.bf16.msra.mxu0 %v594
  %782 = vmatprep.subr.bf16.mxu0 0
  %783 = vmatpush1.bf16.msra.mxu0 %v595
  %784 = vmatprep.subr.bf16.mxu0 0
  %785 = vmatpush1.bf16.msra.mxu0 %v596
  %786 = vmatprep.subr.bf16.mxu0 0
  %787 = vmatpush1.bf16.msra.mxu0 %v597
  %788 = vmatprep.subr.bf16.mxu0 0
  %789 = vmatpush1.bf16.msra.mxu0 %v598
  %790 = vmatprep.subr.bf16.mxu0 0
  %791 = vmatpush1.bf16.msra.mxu0 %v599
  %792 = vmatprep.subr.bf16.mxu0 0
  %793 = vmatpush1.bf16.msra.mxu0 %v600
  %794 = vmatprep.mubr.bf16.mxu0 %v248
  %795 = vmatmul.mubr.bf16.gmra.mrb[0].mxu0 %v247
  %v796 = vpop.f32.mrb[0].mxu0
  %v797 = vadd.f32 %v748, %v796
  %v798 = vpop.f32.mrb[0].mxu0
  %v799 = vpop.f32.mrb[0].mxu0
  %v800 = vadd.f32 %v751, %v799
  %v801 = vpop.f32.mrb[0].mxu0
  %802 = vmatprep.mubr.bf16.mxu0 %v257
  %803 = vmatmul.mubr.bf16.gmra.mrb[0].mxu0 %v256
  %v804 = vpop.f32.mrb[0].mxu0
  %v805 = vadd.f32 %v756, %v804
  %v806 = vpop.f32.mrb[0].mxu0
  %v807 = vpop.f32.mrb[0].mxu0
  %v808 = vadd.f32 %v759, %v807
  %v809 = vpop.f32.mrb[0].mxu0
  %810 = vdwg.mxu0
  %811 = vmatprep.subr.bf16.mxu0 0
  %812 = vmatpush1.bf16.msra.mxu0 %v601
  %813 = vmatprep.subr.bf16.mxu0 0
  %814 = vmatpush1.bf16.msra.mxu0 %v602
  %815 = vmatprep.subr.bf16.mxu0 0
  %816 = vmatpush1.bf16.msra.mxu0 %v603
  %817 = vmatprep.subr.bf16.mxu0 0
  %818 = vmatpush1.bf16.msra.mxu0 %v604
  %819 = vmatprep.subr.bf16.mxu0 0
  %820 = vmatpush1.bf16.msra.mxu0 %v605
  %821 = vmatprep.subr.bf16.mxu0 0
  %822 = vmatpush1.bf16.msra.mxu0 %v606
  %823 = vmatprep.subr.bf16.mxu0 0
  %824 = vmatpush1.bf16.msra.mxu0 %v607
  %825 = vmatprep.subr.bf16.mxu0 0
  %826 = vmatpush1.bf16.msra.mxu0 %v608
  %827 = vmatprep.subr.bf16.mxu0 0
  %828 = vmatpush1.bf16.msra.mxu0 %v609
  %829 = vmatprep.subr.bf16.mxu0 0
  %830 = vmatpush1.bf16.msra.mxu0 %v610
  %831 = vmatprep.subr.bf16.mxu0 0
  %832 = vmatpush1.bf16.msra.mxu0 %v611
  %833 = vmatprep.subr.bf16.mxu0 0
  %834 = vmatpush1.bf16.msra.mxu0 %v612
  %835 = vmatprep.subr.bf16.mxu0 0
  %836 = vmatpush1.bf16.msra.mxu0 %v613
  %837 = vmatprep.subr.bf16.mxu0 0
  %838 = vmatpush1.bf16.msra.mxu0 %v614
  %839 = vmatprep.subr.bf16.mxu0 0
  %840 = vmatpush1.bf16.msra.mxu0 %v615
  %841 = vmatprep.subr.bf16.mxu0 0
  %842 = vmatpush1.bf16.msra.mxu0 %v616
  %843 = vmatprep.mubr.bf16.mxu0 %v250
  %844 = vmatmul.mubr.bf16.gmra.mrb[0].mxu0 %v249
  %v845 = vpop.f32.mrb[0].mxu0
  %v846 = vadd.f32 %v797, %v845
  %v847 = vpop.f32.mrb[0].mxu0
  %v848 = vpop.f32.mrb[0].mxu0
  %v849 = vadd.f32 %v800, %v848
  %v850 = vpop.f32.mrb[0].mxu0
  %851 = vmatprep.mubr.bf16.mxu0 %v259
  %852 = vmatmul.mubr.bf16.gmra.mrb[0].mxu0 %v258
  %v853 = vpop.f32.mrb[0].mxu0
  %v854 = vadd.f32 %v805, %v853
  %v855 = vpop.f32.mrb[0].mxu0
  %v856 = vpop.f32.mrb[0].mxu0
  %v857 = vadd.f32 %v808, %v856
  %v858 = vpop.f32.mrb[0].mxu0
  %859 = vdwg.mxu0
  %860 = vmatprep.subr.bf16.mxu0 0
  %861 = vmatpush1.bf16.msra.mxu0 %v617
  %862 = vmatprep.subr.bf16.mxu0 0
  %863 = vmatpush1.bf16.msra.mxu0 %v618
  %864 = vmatprep.subr.bf16.mxu0 0
  %865 = vmatpush1.bf16.msra.mxu0 %v619
  %866 = vmatprep.subr.bf16.mxu0 0
  %867 = vmatpush1.bf16.msra.mxu0 %v620
  %868 = vmatprep.subr.bf16.mxu0 0
  %869 = vmatpush1.bf16.msra.mxu0 %v621
  %870 = vmatprep.subr.bf16.mxu0 0
  %871 = vmatpush1.bf16.msra.mxu0 %v622
  %872 = vmatprep.subr.bf16.mxu0 0
  %873 = vmatpush1.bf16.msra.mxu0 %v623
  %874 = vmatprep.subr.bf16.mxu0 0
  %875 = vmatpush1.bf16.msra.mxu0 %v624
  %876 = vmatprep.subr.bf16.mxu0 0
  %877 = vmatpush1.bf16.msra.mxu0 %v625
  %878 = vmatprep.subr.bf16.mxu0 0
  %879 = vmatpush1.bf16.msra.mxu0 %v626
  %880 = vmatprep.subr.bf16.mxu0 0
  %881 = vmatpush1.bf16.msra.mxu0 %v627
  %882 = vmatprep.subr.bf16.mxu0 0
  %883 = vmatpush1.bf16.msra.mxu0 %v628
  %884 = vmatprep.subr.bf16.mxu0 0
  %885 = vmatpush1.bf16.msra.mxu0 %v629
  %886 = vmatprep.subr.bf16.mxu0 0
  %887 = vmatpush1.bf16.msra.mxu0 %v630
  %888 = vmatprep.subr.bf16.mxu0 0
  %889 = vmatpush1.bf16.msra.mxu0 %v631
  %890 = vmatprep.subr.bf16.mxu0 0
  %891 = vmatpush1.bf16.msra.mxu0 %v632
  %892 = vmatprep.mubr.bf16.mxu0 %v252
  %893 = vmatmul.mubr.bf16.gmra.mrb[0].mxu0 %v251
  %v894 = vpop.f32.mrb[0].mxu0
  %v895 = vadd.f32 %v846, %v894
  %v896 = vpop.f32.mrb[0].mxu0
  %v897 = vpop.f32.mrb[0].mxu0
  %v898 = vadd.f32 %v849, %v897
  %v899 = vpop.f32.mrb[0].mxu0
  %900 = vmatprep.mubr.bf16.mxu0 %v261
  %901 = vmatmul.mubr.bf16.gmra.mrb[0].mxu0 %v260
  %v902 = vpop.f32.mrb[0].mxu0
  %v903 = vadd.f32 %v854, %v902
  %v904 = vpop.f32.mrb[0].mxu0
  %v905 = vpop.f32.mrb[0].mxu0
  %v906 = vadd.f32 %v857, %v905
  %v907 = vpop.f32.mrb[0].mxu0
  %908 = vdwg.mxu0
  %909 = vmatprep.subr.bf16.mxu0 0
  %910 = vmatpush1.bf16.msra.mxu0 %v633
  %911 = vmatprep.subr.bf16.mxu0 0
  %912 = vmatpush1.bf16.msra.mxu0 %v634
  %913 = vmatprep.subr.bf16.mxu0 0
  %914 = vmatpush1.bf16.msra.mxu0 %v635
  %915 = vmatprep.subr.bf16.mxu0 0
  %916 = vmatpush1.bf16.msra.mxu0 %v636
  %917 = vmatprep.subr.bf16.mxu0 0
  %918 = vmatpush1.bf16.msra.mxu0 %v637
  %919 = vmatprep.subr.bf16.mxu0 0
  %920 = vmatpush1.bf16.msra.mxu0 %v638
  %921 = vmatprep.subr.bf16.mxu0 0
  %922 = vmatpush1.bf16.msra.mxu0 %v639
  %923 = vmatprep.subr.bf16.mxu0 0
  %924 = vmatpush1.bf16.msra.mxu0 %v640
  %925 = vmatprep.subr.bf16.mxu0 0
  %926 = vmatpush1.bf16.msra.mxu0 0
  %927 = vmatprep.subr.bf16.mxu0 0
  %928 = vmatpush1.bf16.msra.mxu0 0
  %929 = vmatprep.subr.bf16.mxu0 0
  %930 = vmatpush1.bf16.msra.mxu0 0
  %931 = vmatprep.subr.bf16.mxu0 0
  %932 = vmatpush1.bf16.msra.mxu0 0
  %933 = vmatprep.subr.bf16.mxu0 0
  %934 = vmatpush1.bf16.msra.mxu0 0
  %935 = vmatprep.subr.bf16.mxu0 0
  %936 = vmatpush1.bf16.msra.mxu0 0
  %937 = vmatprep.subr.bf16.mxu0 0
  %938 = vmatpush1.bf16.msra.mxu0 0
  %939 = vmatprep.subr.bf16.mxu0 0
  %940 = vmatpush1.bf16.msra.mxu0 0
  %941 = vmatprep.mubr.bf16.mxu0 0
  %942 = vmatmul.mubr.bf16.gmra.mrb[0].mxu0 %v253
  %v943 = vpop.f32.mrb[0].mxu0
  %v944 = vadd.f32 %v895, %v943
  %v945 = vpop.f32.mrb[0].mxu0
  %v946 = vpop.f32.mrb[0].mxu0
  %v947 = vadd.f32 %v898, %v946
  %v948 = vpop.f32.mrb[0].mxu0
  %949 = vmatprep.mubr.bf16.mxu0 0
  %950 = vmatmul.mubr.bf16.gmra.mrb[0].mxu0 %v262
  %v951 = vpop.f32.mrb[0].mxu0
  %v952 = vadd.f32 %v903, %v951
  %v953 = vpop.f32.mrb[0].mxu0
  %v954 = vpop.f32.mrb[0].mxu0
  %v955 = vadd.f32 %v906, %v954
  %v956 = vpop.f32.mrb[0].mxu0
  %957 = vdwg.mxu0
  %v958 = vld [vmem:[%s3] sm:$0xff]
  %v959 = vld [vmem:[%s3 + $0x8] sm:$0xff]
  %v960 = vld [vmem:[%s3 + $0x10] sm:$0xff]
  %v961 = vld [vmem:[%s3 + $0x18] sm:$0xff]
  %v962 = vadd.f32 %v944, %v958
  %v963 = vadd.f32 %v947, %v959
  %v964 = vadd.f32 %v952, %v960
  %v965 = vadd.f32 %v955, %v961
  %v966 = vmax.f32 %v962, 0.0
  %v967 = vmax.f32 %v963, 0.0
  %v968 = vmax.f32 %v964, 0.0
  %v969 = vmax.f32 %v965, 0.0
  %970 = vst [vmem:[%s4] sm:$0xff] %v966
  %971 = vst [vmem:[%s4 + $0x8] sm:$0xff] %v967
  %972 = vst [vmem:[%s4 + $0x10] sm:$0xff] %v968
  %973 = vst [vmem:[%s4 + $0x18] sm:$0xff] %v969
  // Predicated region
  $region18: #{model_forward.13} parent=0 // pred_check
    _
  $region19: #{model_forward.13} parent=0 // pred_check_branch
    %975 = sbr.rel (0) target = $region21
  $region20: #{model_forward.13} parent=0 // pred_region
    _
  $region21: #{model_forward.13} parent=0 // pred_fallthru
    _
  // Predicated region
  $region22: #{model_forward.13} parent=0 // pred_check
    _
  $region23: #{model_forward.13} parent=0 // pred_check_branch
    %977 = sbr.rel (0) target = $region25
  $region24: #{model_forward.13} parent=0 // pred_region
    _
  $region25: #{model_forward.13} parent=0 // pred_fallthru
    _

// kernel: model_forward.14
$region0: #{model_forward.14}
  #allocation0 [shape = 'u32[]', space=smem, size = 0x4, offset = 0x4, fixed_abs, tag = 'smem constant byte address 0x4 - core index']
  #allocation1 [shape = 'u32[144,128]{1,0:T(1,128)}', space=vmem, size = 0x12000, scoped, tag = 'internal scratch']
  %s0 = inlined_call_operand.vmem [shape: bf16[32,128], index: 0, kind: input, shape index: {}]
  %s1 = inlined_call_operand.vmem [shape: bf16[128,512], index: 1, kind: input, shape index: {}]
  %s2 = inlined_call_operand.vmem [shape: f32[1,512], index: 2, kind: input, shape index: {}]
  %s3 = inlined_call_operand.vmem [shape: f32[32,512], index: 3, kind: output, shape index: {}]
  %s4 = sld [smem:[#allocation0]]
  $region22: #{model_forward.14} parent=0
    _
  %s6 = ssub.s32 1, %s4
  %s7 = scalar_select 0, %s6, %s4
  // Predicated region
  $region2: #{model_forward.14} parent=0 // pred_check
    _
  $region3: #{model_forward.14} parent=0 // pred_check_branch
    %9 = sbr.rel (0) target = $region5
  $region4: #{model_forward.14} parent=0 // pred_region
    _
  $region5: #{model_forward.14} parent=0 // pred_fallthru
    _
  // Predicated region
  $region6: #{model_forward.14} parent=0 // pred_check
    _
  $region7: #{model_forward.14} parent=0 // pred_check_branch
    %11 = sbr.rel (0) target = $region9
  $region8: #{model_forward.14} parent=0 // pred_region
    _
  $region9: #{model_forward.14} parent=0 // pred_fallthru
    _
  // Predicated region
  $region10: #{model_forward.14} parent=0 // pred_check
    _
  $region11: #{model_forward.14} parent=0 // pred_check_branch
    %13 = sbr.rel (0) target = $region13
  $region12: #{model_forward.14} parent=0 // pred_region
    _
  $region13: #{model_forward.14} parent=0 // pred_fallthru
    _
  %v15 = vld [vmem:[%s0] sm:$0xf]
  %v16 = vld [vmem:[%s0 + $0x4] sm:$0xf]
  %v17 = vld [vmem:[%s0 + $0x8] sm:$0xf]
  %v18 = vld [vmem:[%s0 + $0xc] sm:$0xf]
  %v19 = vld [vmem:[%s1] sm:$0xff]
  %v20 = vld [vmem:[%s1 + $0x8] sm:$0xff]
  %v21 = vld [vmem:[%s1 + $0x10] sm:$0xff]
  %v22 = vld [vmem:[%s1 + $0x18] sm:$0xff]
  %v23 = vld [vmem:[%s1 + $0x20] sm:$0xff]
  %v24 = vld [vmem:[%s1 + $0x28] sm:$0xff]
  %v25 = vld [vmem:[%s1 + $0x30] sm:$0xff]
  %v26 = vld [vmem:[%s1 + $0x38] sm:$0xff]
  %v27 = vld [vmem:[%s1 + $0x40] sm:$0xff]
  %v28 = vld [vmem:[%s1 + $0x48] sm:$0xff]
  %v29 = vld [vmem:[%s1 + $0x50] sm:$0xff]
  %v30 = vld [vmem:[%s1 + $0x58] sm:$0xff]
  %v31 = vld [vmem:[%s1 + $0x60] sm:$0xff]
  %v32 = vld [vmem:[%s1 + $0x68] sm:$0xff]
  %v33 = vld [vmem:[%s1 + $0x70] sm:$0xff]
  %v34 = vld [vmem:[%s1 + $0x78] sm:$0xff]
  %v35 = vld [vmem:[%s1 + $0x80] sm:$0xff]
  %v36 = vld [vmem:[%s1 + $0x88] sm:$0xff]
  %v37 = vld [vmem:[%s1 + $0x90] sm:$0xff]
  %v38 = vld [vmem:[%s1 + $0x98] sm:$0xff]
  %v39 = vld [vmem:[%s1 + $0xa0] sm:$0xff]
  %v40 = vld [vmem:[%s1 + $0xa8] sm:$0xff]
  %v41 = vld [vmem:[%s1 + $0xb0] sm:$0xff]
  %v42 = vld [vmem:[%s1 + $0xb8] sm:$0xff]
  %v43 = vld [vmem:[%s1 + $0xc0] sm:$0xff]
  %v44 = vld [vmem:[%s1 + $0xc8] sm:$0xff]
  %v45 = vld [vmem:[%s1 + $0xd0] sm:$0xff]
  %v46 = vld [vmem:[%s1 + $0xd8] sm:$0xff]
  %v47 = vld [vmem:[%s1 + $0xe0] sm:$0xff]
  %v48 = vld [vmem:[%s1 + $0xe8] sm:$0xff]
  %v49 = vld [vmem:[%s1 + $0xf0] sm:$0xff]
  %v50 = vld [vmem:[%s1 + $0xf8] sm:$0xff]
  %v51 = vld [vmem:[%s2] sm:$0xf]
  %v53 = vlaneseq
  %v54 = vshrl.u32 %v53, 7
  %v55 = vsub.s32 0, %v54
  %v56 = vrot.slane %v51, %v55
  %v57 = vlaneseq
  %v58 = vshrl.u32 %v57, 7
  %v59 = vsub.s32 1, %v58
  %v60 = vrot.slane %v51, %v59
  %v61 = vlaneseq
  %v62 = vshrl.u32 %v61, 7
  %v63 = vsub.s32 2, %v62
  %v64 = vrot.slane %v51, %v63
  %v65 = vlaneseq
  %v66 = vshrl.u32 %v65, 7
  %v67 = vsub.s32 3, %v66
  %v68 = vrot.slane %v51, %v67
  %v77 = vunpack.c.l.b16 %v15
  %v78 = vunpack.c.l.b16 %v16
  %v79 = vunpack.c.l.b16 %v17
  %v80 = vunpack.c.l.b16 %v18
  %v81 = vpack.c.b16 %v78, %v77
  %v82 = vpack.c.b16 %v80, %v79
  %v117 = vunpack.c.l.b16 %v19
  %v118 = vunpack.c.h.b16 %v19
  %v119 = vunpack.c.l.b16 %v20
  %v120 = vunpack.c.h.b16 %v20
  %v121 = vunpack.c.l.b16 %v21
  %v122 = vunpack.c.h.b16 %v21
  %v123 = vunpack.c.l.b16 %v22
  %v124 = vunpack.c.h.b16 %v22
  %v125 = vunpack.c.l.b16 %v23
  %v126 = vunpack.c.h.b16 %v23
  %v127 = vunpack.c.l.b16 %v24
  %v128 = vunpack.c.h.b16 %v24
  %v129 = vunpack.c.l.b16 %v25
  %v130 = vunpack.c.h.b16 %v25
  %v131 = vunpack.c.l.b16 %v26
  %v132 = vunpack.c.h.b16 %v26
  %v133 = vunpack.c.l.b16 %v27
  %v134 = vunpack.c.h.b16 %v27
  %v135 = vunpack.c.l.b16 %v28
  %v136 = vunpack.c.h.b16 %v28
  %v137 = vunpack.c.l.b16 %v29
  %v138 = vunpack.c.h.b16 %v29
  %v139 = vunpack.c.l.b16 %v30
  %v140 = vunpack.c.h.b16 %v30
  %v141 = vunpack.c.l.b16 %v31
  %v142 = vunpack.c.h.b16 %v31
  %v143 = vunpack.c.l.b16 %v32
  %v144 = vunpack.c.h.b16 %v32
  %v145 = vunpack.c.l.b16 %v33
  %v146 = vunpack.c.h.b16 %v33
  %v147 = vunpack.c.l.b16 %v34
  %v148 = vunpack.c.h.b16 %v34
  %v149 = vunpack.c.l.b16 %v35
  %v150 = vunpack.c.h.b16 %v35
  %v151 = vunpack.c.l.b16 %v36
  %v152 = vunpack.c.h.b16 %v36
  %v153 = vunpack.c.l.b16 %v37
  %v154 = vunpack.c.h.b16 %v37
  %v155 = vunpack.c.l.b16 %v38
  %v156 = vunpack.c.h.b16 %v38
  %v157 = vunpack.c.l.b16 %v39
  %v158 = vunpack.c.h.b16 %v39
  %v159 = vunpack.c.l.b16 %v40
  %v160 = vunpack.c.h.b16 %v40
  %v161 = vunpack.c.l.b16 %v41
  %v162 = vunpack.c.h.b16 %v41
  %v163 = vunpack.c.l.b16 %v42
  %v164 = vunpack.c.h.b16 %v42
  %v165 = vunpack.c.l.b16 %v43
  %v166 = vunpack.c.h.b16 %v43
  %v167 = vunpack.c.l.b16 %v44
  %v168 = vunpack.c.h.b16 %v44
  %v169 = vunpack.c.l.b16 %v45
  %v170 = vunpack.c.h.b16 %v45
  %v171 = vunpack.c.l.b16 %v46
  %v172 = vunpack.c.h.b16 %v46
  %v173 = vunpack.c.l.b16 %v47
  %v174 = vunpack.c.h.b16 %v47
  %v175 = vunpack.c.l.b16 %v48
  %v176 = vunpack.c.h.b16 %v48
  %v177 = vunpack.c.l.b16 %v49
  %v178 = vunpack.c.h.b16 %v49
  %v179 = vunpack.c.l.b16 %v50
  %v180 = vunpack.c.h.b16 %v50
  %v181 = vpack.c.b16 %v121, %v117
  %v182 = vpack.c.b16 %v122, %v118
  %v183 = vpack.c.b16 %v123, %v119
  %v184 = vpack.c.b16 %v124, %v120
  %v185 = vpack.c.b16 %v129, %v125
  %v186 = vpack.c.b16 %v130, %v126
  %v187 = vpack.c.b16 %v131, %v127
  %v188 = vpack.c.b16 %v132, %v128
  %v189 = vpack.c.b16 %v137, %v133
  %v190 = vpack.c.b16 %v138, %v134
  %v191 = vpack.c.b16 %v139, %v135
  %v192 = vpack.c.b16 %v140, %v136
  %v193 = vpack.c.b16 %v145, %v141
  %v194 = vpack.c.b16 %v146, %v142
  %v195 = vpack.c.b16 %v147, %v143
  %v196 = vpack.c.b16 %v148, %v144
  %v197 = vpack.c.b16 %v153, %v149
  %v198 = vpack.c.b16 %v154, %v150
  %v199 = vpack.c.b16 %v155, %v151
  %v200 = vpack.c.b16 %v156, %v152
  %v201 = vpack.c.b16 %v161, %v157
  %v202 = vpack.c.b16 %v162, %v158
  %v203 = vpack.c.b16 %v163, %v159
  %v204 = vpack.c.b16 %v164, %v160
  %v205 = vpack.c.b16 %v169, %v165
  %v206 = vpack.c.b16 %v170, %v166
  %v207 = vpack.c.b16 %v171, %v167
  %v208 = vpack.c.b16 %v172, %v168
  %v209 = vpack.c.b16 %v177, %v173
  %v210 = vpack.c.b16 %v178, %v174
  %v211 = vpack.c.b16 %v179, %v175
  %v212 = vpack.c.b16 %v180, %v176
  %245 = vmatprep.subr.bf16.mxu0 %v182
  %246 = vmatpush1.bf16.msra.mxu0 %v181
  %247 = vmatprep.subr.bf16.mxu0 %v186
  %248 = vmatpush1.bf16.msra.mxu0 %v185
  %249 = vmatprep.subr.bf16.mxu0 %v190
  %250 = vmatpush1.bf16.msra.mxu0 %v189
  %251 = vmatprep.subr.bf16.mxu0 %v194
  %252 = vmatpush1.bf16.msra.mxu0 %v193
  %253 = vmatprep.subr.bf16.mxu0 %v198
  %254 = vmatpush1.bf16.msra.mxu0 %v197
  %255 = vmatprep.subr.bf16.mxu0 %v202
  %256 = vmatpush1.bf16.msra.mxu0 %v201
  %257 = vmatprep.subr.bf16.mxu0 %v206
  %258 = vmatpush1.bf16.msra.mxu0 %v205
  %259 = vmatprep.subr.bf16.mxu0 %v210
  %260 = vmatpush1.bf16.msra.mxu0 %v209
  %261 = vmatprep.subr.bf16.mxu0 0
  %262 = vmatpush1.bf16.msra.mxu0 0
  %263 = vmatprep.subr.bf16.mxu0 0
  %264 = vmatpush1.bf16.msra.mxu0 0
  %265 = vmatprep.subr.bf16.mxu0 0
  %266 = vmatpush1.bf16.msra.mxu0 0
  %267 = vmatprep.subr.bf16.mxu0 0
  %268 = vmatpush1.bf16.msra.mxu0 0
  %269 = vmatprep.subr.bf16.mxu0 0
  %270 = vmatpush1.bf16.msra.mxu0 0
  %271 = vmatprep.subr.bf16.mxu0 0
  %272 = vmatpush1.bf16.msra.mxu0 0
  %273 = vmatprep.subr.bf16.mxu0 0
  %274 = vmatpush1.bf16.msra.mxu0 0
  %275 = vmatprep.subr.bf16.mxu0 0
  %276 = vmatpush1.bf16.msra.mxu0 0
  %277 = vmatprep.mubr.bf16.mxu0 0
  %278 = vmatmul.mubr.bf16.gmra.mrb[0].mxu0 %v81
  %v279 = vpop.f32.mrb[0].mxu0
  %v280 = vadd.f32 %v56, %v279
  %v281 = vpop.f32.mrb[0].mxu0
  %v282 = vadd.f32 %v60, %v281
  %v283 = vpop.f32.mrb[0].mxu0
  %v284 = vadd.f32 %v56, %v283
  %v285 = vpop.f32.mrb[0].mxu0
  %v286 = vadd.f32 %v60, %v285
  %287 = vmatprep.mubr.bf16.mxu0 0
  %288 = vmatmul.mubr.bf16.gmra.mrb[0].mxu0 %v82
  %v289 = vpop.f32.mrb[0].mxu0
  %v290 = vadd.f32 %v56, %v289
  %v291 = vpop.f32.mrb[0].mxu0
  %v292 = vadd.f32 %v60, %v291
  %v293 = vpop.f32.mrb[0].mxu0
  %v294 = vadd.f32 %v56, %v293
  %v295 = vpop.f32.mrb[0].mxu0
  %v296 = vadd.f32 %v60, %v295
  %297 = vdwg.mxu0
  %298 = vmatprep.subr.bf16.mxu0 %v184
  %299 = vmatpush1.bf16.msra.mxu0 %v183
  %300 = vmatprep.subr.bf16.mxu0 %v188
  %301 = vmatpush1.bf16.msra.mxu0 %v187
  %302 = vmatprep.subr.bf16.mxu0 %v192
  %303 = vmatpush1.bf16.msra.mxu0 %v191
  %304 = vmatprep.subr.bf16.mxu0 %v196
  %305 = vmatpush1.bf16.msra.mxu0 %v195
  %306 = vmatprep.subr.bf16.mxu0 %v200
  %307 = vmatpush1.bf16.msra.mxu0 %v199
  %308 = vmatprep.subr.bf16.mxu0 %v204
  %309 = vmatpush1.bf16.msra.mxu0 %v203
  %310 = vmatprep.subr.bf16.mxu0 %v208
  %311 = vmatpush1.bf16.msra.mxu0 %v207
  %312 = vmatprep.subr.bf16.mxu0 %v212
  %313 = vmatpush1.bf16.msra.mxu0 %v211
  %314 = vmatprep.subr.bf16.mxu0 0
  %315 = vmatpush1.bf16.msra.mxu0 0
  %316 = vmatprep.subr.bf16.mxu0 0
  %317 = vmatpush1.bf16.msra.mxu0 0
  %318 = vmatprep.subr.bf16.mxu0 0
  %319 = vmatpush1.bf16.msra.mxu0 0
  %320 = vmatprep.subr.bf16.mxu0 0
  %321 = vmatpush1.bf16.msra.mxu0 0
  %322 = vmatprep.subr.bf16.mxu0 0
  %323 = vmatpush1.bf16.msra.mxu0 0
  %324 = vmatprep.subr.bf16.mxu0 0
  %325 = vmatpush1.bf16.msra.mxu0 0
  %326 = vmatprep.subr.bf16.mxu0 0
  %327 = vmatpush1.bf16.msra.mxu0 0
  %328 = vmatprep.subr.bf16.mxu0 0
  %329 = vmatpush1.bf16.msra.mxu0 0
  %330 = vmatprep.mubr.bf16.mxu0 0
  %331 = vmatmul.mubr.bf16.gmra.mrb[0].mxu0 %v81
  %v332 = vpop.f32.mrb[0].mxu0
  %v333 = vadd.f32 %v64, %v332
  %v334 = vpop.f32.mrb[0].mxu0
  %v335 = vadd.f32 %v68, %v334
  %v336 = vpop.f32.mrb[0].mxu0
  %v337 = vadd.f32 %v64, %v336
  %v338 = vpop.f32.mrb[0].mxu0
  %v339 = vadd.f32 %v68, %v338
  %340 = vmatprep.mubr.bf16.mxu0 0
  %341 = vmatmul.mubr.bf16.gmra.mrb[0].mxu0 %v82
  %v342 = vpop.f32.mrb[0].mxu0
  %v343 = vadd.f32 %v64, %v342
  %v344 = vpop.f32.mrb[0].mxu0
  %v345 = vadd.f32 %v68, %v344
  %v346 = vpop.f32.mrb[0].mxu0
  %v347 = vadd.f32 %v64, %v346
  %v348 = vpop.f32.mrb[0].mxu0
  %v349 = vadd.f32 %v68, %v348
  %350 = vdwg.mxu0
  %351 = vst [vmem:[%s3] sm:$0xff] %v280
  %352 = vst [vmem:[%s3 + $0x8] sm:$0xff] %v282
  %353 = vst [vmem:[%s3 + $0x10] sm:$0xff] %v333
  %354 = vst [vmem:[%s3 + $0x18] sm:$0xff] %v335
  %355 = vst [vmem:[%s3 + $0x20] sm:$0xff] %v284
  %356 = vst [vmem:[%s3 + $0x28] sm:$0xff] %v286
  %357 = vst [vmem:[%s3 + $0x30] sm:$0xff] %v337
  %358 = vst [vmem:[%s3 + $0x38] sm:$0xff] %v339
  %359 = vst [vmem:[%s3 + $0x40] sm:$0xff] %v290
  %360 = vst [vmem:[%s3 + $0x48] sm:$0xff] %v292
  %361 = vst [vmem:[%s3 + $0x50] sm:$0xff] %v343
  %362 = vst [vmem:[%s3 + $0x58] sm:$0xff] %v345
  %363 = vst [vmem:[%s3 + $0x60] sm:$0xff] %v294
  %364 = vst [vmem:[%s3 + $0x68] sm:$0xff] %v296
  %365 = vst [vmem:[%s3 + $0x70] sm:$0xff] %v347
  %366 = vst [vmem:[%s3 + $0x78] sm:$0xff] %v349
  // Predicated region
  $region14: #{model_forward.14} parent=0 // pred_check
    _
  $region15: #{model_forward.14} parent=0 // pred_check_branch
    %368 = sbr.rel (0) target = $region17
  $region16: #{model_forward.14} parent=0 // pred_region
    _
  $region17: #{model_forward.14} parent=0 // pred_fallthru
    _
  // Predicated region
  $region18: #{model_forward.14} parent=0 // pred_check
    _
  $region19: #{model_forward.14} parent=0 // pred_check_branch
    %370 = sbr.rel (0) target = $region21
  $region20: #{model_forward.14} parent=0 // pred_region
    _
  $region21: #{model_forward.14} parent=0 // pred_fallthru
    _

</llo_original>
